<compile_context>
chip_gen: v7x
topology: tpu7x:2x2x1
jax: 0.10.0
libtpu: 0.0.40
codegen_flags: <defaults>
</compile_context>

<pallas_src>
import functools

import jax
import jax.numpy as jnp
from jax.experimental import pallas as pl
from jax.experimental.pallas import tpu as pltpu


def _round_up(x, m):
    return ((x + m - 1) // m) * m


# ------------------------------------------------------------------------------
# Tiled bf16 matmul + bias (MXU).  Weights arrive pre-padded/pre-cast (prepack).
# ------------------------------------------------------------------------------

def _matmul_bias_1k_kernel(x_ref, w_ref, b_ref, o_ref):
    # Single K step: dot + bias written straight to the output block.
    o_ref[...] = (jnp.dot(x_ref[...], w_ref[...],
                          preferred_element_type=jnp.float32)
                  + b_ref[...]).astype(o_ref.dtype)


def _matmul_bias_k_kernel(x_ref, w_ref, b_ref, o_ref, acc_ref):
    @pl.when(pl.program_id(2) == 0)
    def _():
        # Initialize the accumulator with the broadcast bias (saves a VPU pass).
        acc_ref[...] = jnp.broadcast_to(b_ref[...], acc_ref.shape)

    acc_ref[...] += jnp.dot(x_ref[...], w_ref[...],
                            preferred_element_type=jnp.float32)

    @pl.when(pl.program_id(2) == pl.num_programs(2) - 1)
    def _():
        o_ref[...] = acc_ref[...].astype(o_ref.dtype)


def prepack_linear(w_t, b, *, tn=512, tk=512):
    """One-time prep of a Linear: w_t:(K,N), b:(N,) -> padded bf16 weight,
    f32 bias row and the tile sizes used by matmul_bias."""
    K, N = w_t.shape
    Np = _round_up(N, 128)                       # lane-dense output
    tn_eff = Np if Np <= tn else tn
    Np = _round_up(Np, tn_eff)
    if K <= tk:
        Kp, tk_eff = K, K                        # single K step, no K padding
    else:
        Kp = _round_up(_round_up(K, 128), tk)
        tk_eff = tk
    wp = jnp.pad(w_t, ((0, Kp - K), (0, Np - N))).astype(jnp.bfloat16)
    bp = jnp.pad(b.astype(jnp.float32).reshape(1, N), ((0, 0), (0, Np - N)))
    return dict(w=wp, b=bp, n=N, tn=tn_eff, tk=tk_eff)


def matmul_bias(x, lin, *, tm=512, out_dtype=jnp.float32):
    """(M,K) @ prepacked (K,N) + bias -> (M,N) in out_dtype (f32 accumulation)."""
    M, K = x.shape
    Kp, Np = lin["w"].shape
    N, tn, tk = lin["n"], lin["tn"], lin["tk"]
    tm_eff = M if M <= tm else tm
    Mp = _round_up(M, tm_eff)

    xq = x.astype(jnp.bfloat16)                  # no-op when x is already bf16
    if (Mp, Kp) != (M, K):
        xq = jnp.pad(xq, ((0, Mp - M), (0, Kp - K)))

    if Kp == tk:
        out = pl.pallas_call(
            _matmul_bias_1k_kernel,
            grid=(Mp // tm_eff, Np // tn),
            in_specs=[pl.BlockSpec((tm_eff, Kp), lambda i, j: (i, 0)),
                      pl.BlockSpec((Kp, tn), lambda i, j: (0, j)),
                      pl.BlockSpec((1, tn), lambda i, j: (0, j))],
            out_specs=pl.BlockSpec((tm_eff, tn), lambda i, j: (i, j)),
            out_shape=jax.ShapeDtypeStruct((Mp, Np), out_dtype),
            compiler_params=pltpu.CompilerParams(
                dimension_semantics=("parallel", "parallel")),
        )(xq, lin["w"], lin["b"])
    else:
        out = pl.pallas_call(
            _matmul_bias_k_kernel,
            grid=(Mp // tm_eff, Np // tn, Kp // tk),
            in_specs=[pl.BlockSpec((tm_eff, tk), lambda i, j, k: (i, k)),
                      pl.BlockSpec((tk, tn), lambda i, j, k: (k, j)),
                      pl.BlockSpec((1, tn), lambda i, j, k: (0, j))],
            out_specs=pl.BlockSpec((tm_eff, tn), lambda i, j, k: (i, j)),
            out_shape=jax.ShapeDtypeStruct((Mp, Np), out_dtype),
            scratch_shapes=[pltpu.VMEM((tm_eff, tn), jnp.float32)],
            compiler_params=pltpu.CompilerParams(
                dimension_semantics=("parallel", "parallel", "arbitrary")),
        )(xq, lin["w"], lin["b"])

    if (Mp, Np) != (M, N):
        out = out[:M, :N]
    return out


# ------------------------------------------------------------------------------
# LSTM layer: recurrence over time, VMEM-resident h/c, bf16 recurrent matmul.
# ------------------------------------------------------------------------------

def _lstm_layer_kernel(xproj_ref, whh_ref, hseq_ref, h_ref, c_ref):
    # xproj:(T,bB,4H) bf16 (= x@Wih^T + b_ih + b_hh), whh:(H,4H) bf16 (= Whh^T),
    # hseq:(T,bB,H) bf16 out, h/c:(bB,H) f32 VMEM scratch.  Gate order i,f,g,o.
    T = xproj_ref.shape[0]
    H = h_ref.shape[1]
    h_ref[...] = jnp.zeros_like(h_ref)
    c_ref[...] = jnp.zeros_like(c_ref)

    @pl.loop(0, T)
    def _(t):
        gates = xproj_ref[t].astype(jnp.float32) + jnp.dot(
            h_ref[...].astype(jnp.bfloat16), whh_ref[...],
            preferred_element_type=jnp.float32)
        i = jax.nn.sigmoid(gates[:, 0 * H:1 * H])
        f = jax.nn.sigmoid(gates[:, 1 * H:2 * H])
        g = jnp.tanh(gates[:, 2 * H:3 * H])
        o = jax.nn.sigmoid(gates[:, 3 * H:4 * H])
        c_new = f * c_ref[...] + i * g
        h_new = o * jnp.tanh(c_new)
        c_ref[...] = c_new
        h_ref[...] = h_new
        hseq_ref[t] = h_new.astype(jnp.bfloat16)


def _lstm_layer(xproj, whh_t, *, num_blocks=1):
    # num_blocks=1: the whole batch is one grid step (best on single-TC v5e/v6e).
    # TODO(synk): set num_blocks=2 on v7x so the "parallel" axis shards over 2 TCs.
    T, B, H4 = xproj.shape
    H = H4 // 4
    nb = num_blocks if (num_blocks > 1 and B % num_blocks == 0) else 1
    bB = B // nb
    return pl.pallas_call(
        _lstm_layer_kernel,
        grid=(nb,),
        in_specs=[pl.BlockSpec((T, bB, H4), lambda b: (0, b, 0)),
                  pl.BlockSpec((H, H4), lambda b: (0, 0))],
        out_specs=pl.BlockSpec((T, bB, H), lambda b: (0, b, 0)),
        out_shape=jax.ShapeDtypeStruct((T, B, H), jnp.bfloat16),
        scratch_shapes=[pltpu.VMEM((bB, H), jnp.float32),
                        pltpu.VMEM((bB, H), jnp.float32)],
        compiler_params=pltpu.CompilerParams(dimension_semantics=("parallel",)),
    )(xproj, whh_t)


def lstm_forward(x, layers_pp, *, num_blocks=1):
    """Multi-layer unidirectional LSTM, batch_first, zero init state.
    x:(B,T,D); returns (B,T,H) bf16."""
    B, T, _ = x.shape
    inp_tb = x.transpose(1, 0, 2)                 # (T,B,D): transpose the narrow input
    for lp in layers_pp:
        xproj = matmul_bias(inp_tb.reshape(T * B, -1), lp["lin"],
                            out_dtype=jnp.bfloat16)            # (T*B, 4H) bf16
        H4 = xproj.shape[1]
        inp_tb = _lstm_layer(xproj.reshape(T, B, H4), lp["whh_t"],
                             num_blocks=num_blocks)             # (T,B,H) bf16
        # TODO(synk): inter-layer LSTM dropout (train-mode, stochastic) skipped.
    return inp_tb.transpose(1, 0, 2)              # (B,T,H)


# ------------------------------------------------------------------------------
# conv3x3 (padding=1): 9 contiguous shifted row windows over the flattened padded
# NHWC feature, accumulated directly into the (bias-initialized) output block.
# ------------------------------------------------------------------------------

def _conv3x3_kernel(featp_ref, wk_ref, b_ref, out_ref, *, Wp):
    # featp:(1, (H+3)*Wp, C) bf16 flat padded rows, wk:(9, C, dkp) bf16 (tap-major),
    # b:(1, dkp) f32, out:(1, H*Wp, dkp) f32 (interior columns extracted by wrapper).
    Nwin, dkp = out_ref.shape[1], out_ref.shape[2]
    out_ref[0] = jnp.broadcast_to(b_ref[...], (Nwin, dkp))
    for kh in range(3):
        for kw in range(3):
            win = featp_ref[0, pl.ds(kh * Wp + kw, Nwin), :]    # contiguous window
            out_ref[0] += jnp.dot(win, wk_ref[kh * 3 + kw],
                                  preferred_element_type=jnp.float32)


def conv3x3(featp_flat, wk, b2d, *, H, Wp):
    B, Nrows, C = featp_flat.shape
    dkp = wk.shape[2]
    Nwin = H * Wp
    out = pl.pallas_call(
        functools.partial(_conv3x3_kernel, Wp=Wp),
        grid=(B,),
        in_specs=[pl.BlockSpec((1, Nrows, C), lambda b: (b, 0, 0)),
                  pl.BlockSpec((9, C, dkp), lambda b: (0, 0, 0)),
                  pl.BlockSpec((1, dkp), lambda b: (0, 0))],
        out_specs=pl.BlockSpec((1, Nwin, dkp), lambda b: (b, 0, 0)),
        out_shape=jax.ShapeDtypeStruct((B, Nwin, dkp), jnp.float32),
        compiler_params=pltpu.CompilerParams(dimension_semantics=("parallel",)),
    )(featp_flat, wk, b2d)
    W = Wp - 2
    # Drop the (garbage) pad columns, keep lane-dense dkp.
    return out.reshape(B, H, Wp, dkp)[:, :, :W, :].reshape(B, H * W, dkp)


# ------------------------------------------------------------------------------
# Fused 2D attention: tanh(key+query) -> score -> softmax(HW) -> weighted sum.
# Chunked over T; key/feat blocks stay resident across the T axis.
# ------------------------------------------------------------------------------

def _attention_kernel(q_ref, key_ref, w2_ref, featc_ref, out_ref, *, tanh_dtype):
    q = q_ref[0].astype(tanh_dtype)                      # (TT, dkp)
    key = key_ref[0].astype(tanh_dtype)                  # (HW, dkp)
    e = jnp.tanh(q[:, None, :] + key[None, :, :])        # (TT, HW, dkp)
    # conv1x1_2 bias dropped: softmax is shift-invariant.
    score = jnp.sum(e * w2_ref[...], axis=-1)            # (TT, HW) f32
    m = jnp.max(score, axis=-1, keepdims=True)
    p = jnp.exp(score - m)
    attn = p * pl.reciprocal(jnp.sum(p, axis=-1, keepdims=True), approx=True)
    # weighted spatial sum: (TT,HW) · (C,HW)^T -> (TT,C), MXU, bf16 operands.
    out_ref[0] = jax.lax.dot_general(
        attn.astype(jnp.bfloat16), featc_ref[0],
        dimension_numbers=(((1,), (1,)), ((), ())),
        preferred_element_type=jnp.float32).astype(out_ref.dtype)


def attention_2d(attn_query_p, attn_key, w2, featc, *, tt,
                 tanh_dtype=jnp.bfloat16):
    # tanh_dtype=jnp.float32 recommended on v5e (no bf16 VPU/EUP).
    B, Tp, dkp = attn_query_p.shape
    HW = attn_key.shape[1]
    C = featc.shape[1]
    assert Tp % tt == 0
    return pl.pallas_call(
        functools.partial(_attention_kernel, tanh_dtype=tanh_dtype),
        grid=(B, Tp // tt),
        in_specs=[
            pl.BlockSpec((1, tt, dkp), lambda b, t: (b, t, 0)),
            pl.BlockSpec((1, HW, dkp), lambda b, t: (b, 0, 0)),
            pl.BlockSpec((1, dkp), lambda b, t: (0, 0)),
            pl.BlockSpec((1, C, HW), lambda b, t: (b, 0, 0)),
        ],
        out_specs=pl.BlockSpec((1, tt, C), lambda b, t: (b, t, 0)),
        out_shape=jax.ShapeDtypeStruct((B, Tp, C), jnp.bfloat16),
        compiler_params=pltpu.CompilerParams(
            dimension_semantics=("parallel", "parallel")),
    )(attn_query_p, attn_key, w2, featc)


# ------------------------------------------------------------------------------
# Fused prediction head: y@Wy + attn_feat@Wa + (holistic@Wh + b), no concat buffer.
# ------------------------------------------------------------------------------

def _pred_kernel(y_ref, a_ref, h_ref, wy_ref, wa_ref, wh_ref, b_ref, o_ref):
    base = jnp.dot(h_ref[0], wh_ref[...],
                   preferred_element_type=jnp.float32) + b_ref[...]      # (1, Ncp)
    o_ref[0] = (jnp.dot(y_ref[0], wy_ref[...], preferred_element_type=jnp.float32)
                + jnp.dot(a_ref[0], wa_ref[...], preferred_element_type=jnp.float32)
                + base)


def pred_head(y, attn_feat, holistic, pred_pp):
    B, T, d_enc = y.shape
    C = attn_feat.shape[2]
    Ncp = pred_pp["wy"].shape[1]
    hol3 = holistic.reshape(B, 1, d_enc)
    return pl.pallas_call(
        _pred_kernel,
        grid=(B,),
        in_specs=[pl.BlockSpec((1, T, d_enc), lambda b: (b, 0, 0)),
                  pl.BlockSpec((1, T, C), lambda b: (b, 0, 0)),
                  pl.BlockSpec((1, 1, d_enc), lambda b: (b, 0, 0)),
                  pl.BlockSpec((d_enc, Ncp), lambda b: (0, 0)),
                  pl.BlockSpec((C, Ncp), lambda b: (0, 0)),
                  pl.BlockSpec((d_enc, Ncp), lambda b: (0, 0)),
                  pl.BlockSpec((1, Ncp), lambda b: (0, 0))],
        out_specs=pl.BlockSpec((1, T, Ncp), lambda b: (b, 0, 0)),
        out_shape=jax.ShapeDtypeStruct((B, T, Ncp), jnp.float32),
        compiler_params=pltpu.CompilerParams(dimension_semantics=("parallel",)),
    )(y, attn_feat, hol3, pred_pp["wy"], pred_pp["wa"], pred_pp["wh"],
      pred_pp["b"])


# ------------------------------------------------------------------------------
# Forward (SAREncoder + ParallelSARDecoder.forward_train), dropouts = identity.
# ------------------------------------------------------------------------------

def sar_head_forward(feat, label, pp):
    B, C, H, W = feat.shape
    feat_bf = feat.astype(jnp.bfloat16)        # single cast reused by pool/conv/attn

    # ---- SAREncoder ----
    feat_v = jnp.max(feat_bf, axis=2).transpose(0, 2, 1)            # (B, W, C) bf16
    holistic_seq = lstm_forward(feat_v, pp["enc_lstm"])             # (B, W, d_enc)
    valid_hf = holistic_seq[:, -1, :]
    # TODO(synk): valid_ratios handling (last-valid-step select + attention width
    # mask) not implemented; matches the PyTorch path with valid_ratios=None.
    holistic = matmul_bias(valid_hf, pp["enc_lin"],
                           out_dtype=jnp.bfloat16)                  # (B, d_enc) bf16

    # ---- ParallelSARDecoder.forward_train ----
    lab_emb = pp["embedding"][label]                                # (B, L, d_enc) bf16
    in_dec = jnp.concatenate([holistic[:, None, :], lab_emb], axis=1)   # (B, T, d_enc)
    y = lstm_forward(in_dec, pp["dec_lstm"])                        # (B, T, d_enc) bf16
    T = y.shape[1]
    dkp = pp["w1"]["w"].shape[1]                                    # lane-padded d_k

    # conv1x1_1 (Linear d_enc -> d_k, zero-padded to dkp lanes)
    attn_query = matmul_bias(y.reshape(B * T, -1), pp["w1"],
                             out_dtype=jnp.bfloat16).reshape(B, T, dkp)

    # conv3x3_1: pad NHWC once (top 1, bottom 2, left/right 1) and flatten the rows
    # so every tap is a contiguous row window inside the kernel.
    Wp = W + 2
    featp = jnp.pad(feat_bf.transpose(0, 2, 3, 1),
                    ((0, 0), (1, 2), (1, 1), (0, 0)))
    featp_flat = featp.reshape(B, (H + 3) * Wp, C)
    attn_key = conv3x3(featp_flat, pp["w3_k"], pp["b3"], H=H, Wp=Wp)  # (B, HW, dkp)

    # feat fed as (B, C, HW): pure reshape of the bf16 copy, no HBM transpose.
    featc = feat_bf.reshape(B, C, H * W)

    tt = 16 if T > 8 else 8
    Tp = _round_up(T, tt)
    aq_p = attn_query if Tp == T else jnp.pad(attn_query,
                                              ((0, 0), (0, Tp - T), (0, 0)))
    attn_feat = attention_2d(aq_p, attn_key, pp["w2"], featc,
                             tt=tt)[:, :T, :]                       # (B, T, C) bf16

    # prediction head (pred_concat=True), fused — no concat / broadcast in HBM.
    pred = pred_head(y, attn_feat, holistic, pp["pred"])            # (B, T, Ncp) f32
    # TODO(synk): pred_dropout (stochastic train-mode dropout) treated as identity.
    return pred[:, 1:, :pp["pred"]["n"]]                            # (B, L, num_classes-1)


# ------------------------------------------------------------------------------
# Parameters: PyTorch-shaped init + one-time prepack (pad / transpose / bf16 / fold).
# ------------------------------------------------------------------------------

def init_params(key, *, d_model, d_enc, d_k, num_classes):
    keys = iter(jax.random.split(key, 64))

    def nrm(shape, scale=0.1):
        return (scale * jax.random.normal(next(keys), shape)).astype(jnp.float32)

    def lstm_layers(in_dim, hid, n=2):
        layers, d = [], in_dim
        for _ in range(n):
            layers.append((nrm((4 * hid, d)), nrm((4 * hid, hid)),
                           nrm((4 * hid,)), nrm((4 * hid,))))
            d = hid
        return layers

    emb = nrm((num_classes, d_enc))
    emb = emb.at[num_classes - 1].set(0.0)        # padding_idx row is zero
    pred_in = d_enc + d_model + d_enc             # pred_concat=True
    return dict(
        enc_lstm=lstm_layers(d_model, d_enc),
        enc_lin_w=nrm((d_enc, d_enc)), enc_lin_b=nrm((d_enc,)),
        dec_lstm=lstm_layers(d_enc, d_enc),
        embedding=emb,
        w1=nrm((d_k, d_enc)), b1=nrm((d_k,)),                 # conv1x1_1
        w3=nrm((d_k, d_model, 3, 3)), b3=nrm((d_k,)),         # conv3x3_1
        w2=nrm((1, d_k)), b2=nrm((1,)),                       # conv1x1_2
        pred_w=nrm((num_classes - 1, pred_in)),
        pred_b=nrm((num_classes - 1,)),
    )


def prepack_params(params):
    """One-time weight prep outside the per-call path: pad to tiled/lane-dense
    shapes, transpose to matmul layout, cast MXU operands to bf16, fold LSTM
    biases, reorder conv taps, split the prediction weight by concat block."""
    def lstm_pp(layers):
        out = []
        for (Wih, Whh, bih, bhh) in layers:
            out.append(dict(
                lin=prepack_linear(Wih.T, bih + bhh),         # folded b_ih + b_hh
                whh_t=Whh.T.astype(jnp.bfloat16),             # (H, 4H)
            ))
        return out

    d_k = params["w1"].shape[0]
    d_model = params["w3"].shape[1]
    d_enc = params["enc_lin_w"].shape[0]
    dkp = _round_up(d_k, 128)                                 # lane-dense attention dim

    # conv1x1_1 zero-padded to dkp output lanes (exact: pad lanes stay 0).
    w1_t = jnp.pad(params["w1"].T, ((0, 0), (0, dkp - d_k)))
    b1 = jnp.pad(params["b1"], (0, dkp - d_k))
    # conv3x3_1 taps, tap-major (kh*3+kw, C, dkp).
    w3_k = jnp.pad(params["w3"].transpose(2, 3, 1, 0),
                   ((0, 0), (0, 0), (0, 0), (0, dkp - d_k))
                   ).reshape(9, d_model, dkp).astype(jnp.bfloat16)
    b3 = jnp.pad(params["b3"], (0, dkp - d_k)).reshape(1, dkp).astype(jnp.float32)
    w2 = jnp.pad(params["w2"].reshape(-1), (0, dkp - d_k)
                 ).reshape(1, dkp).astype(jnp.float32)
    # b2 dropped: softmax is shift-invariant, the scalar bias is mathematically dead.

    # prediction head, split by concat block (y | attn_feat | holistic).
    ncls = params["pred_w"].shape[0]
    ncp = _round_up(ncls, 128)
    pwt = params["pred_w"].T                                  # (pred_in, ncls)
    pad_n = ((0, 0), (0, ncp - ncls))
    pred = dict(
        wy=jnp.pad(pwt[:d_enc], pad_n).astype(jnp.bfloat16),
        wa=jnp.pad(pwt[d_enc:d_enc + d_model], pad_n).astype(jnp.bfloat16),
        wh=jnp.pad(pwt[d_enc + d_model:], pad_n).astype(jnp.bfloat16),
        b=jnp.pad(params["pred_b"], (0, ncp - ncls)).reshape(1, ncp).astype(jnp.float32),
        n=ncls,
    )

    return dict(
        enc_lstm=lstm_pp(params["enc_lstm"]),
        enc_lin=prepack_linear(params["enc_lin_w"].T, params["enc_lin_b"]),
        dec_lstm=lstm_pp(params["dec_lstm"]),
        embedding=params["embedding"].astype(jnp.bfloat16),
        w1=prepack_linear(w1_t, b1),
        w3_k=w3_k, b3=b3, w2=w2,
        pred=pred,
    )


if __name__ == "__main__":
    B, d_model, H, W = 2, 32, 4, 8
    d_enc, d_k = 32, 32
    num_classes = 12        # out_channels
    L = 6                   # max_text_length (small)

    key = jax.random.PRNGKey(0)
    k_feat, k_label, k_params = jax.random.split(key, 3)
    feat = jax.random.normal(k_feat, (B, d_model, H, W), dtype=jnp.float32)
    label = jax.random.randint(k_label, (B, L), 0, num_classes)
    params = init_params(k_params, d_model=d_model, d_enc=d_enc,
                         d_k=d_k, num_classes=num_classes)
    pp = prepack_params(params)

    # pp contains static tiling metadata (Python ints), so it is closed over
    # rather than passed through jit as a traced argument.
    fwd = jax.jit(functools.partial(sar_head_forward, pp=pp))
    out = jax.block_until_ready(fwd(feat, label))
    assert out.shape == (B, L, num_classes - 1), out.shape
    assert bool(jnp.all(jnp.isfinite(out)))
    print("KERNEL_OK")
</pallas_src>

<mosaic_0001>
module attributes {stable_mosaic.version = 11 : i64} {
  func.func @_matmul_bias_1k_kernel(%arg0: i32, %arg1: i32, %arg2: memref<16x32xbf16, #tpu.memory_space<vmem>>, %arg3: memref<32x128xbf16, #tpu.memory_space<vmem>>, %arg4: memref<1x128xf32, #tpu.memory_space<vmem>>, %arg5: memref<16x128xbf16, #tpu.memory_space<vmem>>) attributes {dimension_semantics = [#tpu.dimension_semantics<parallel>, #tpu.dimension_semantics<parallel>], iteration_bounds = array<i64: 1, 1>, scalar_prefetch = 0 : i64, scratch_operands = 0 : i64, tpu.core_type = #tpu.core_type<tc>, window_params = [{transform_indices = @transform_0, window_bounds = array<i64: 16, 32>}, {transform_indices = @transform_1, window_bounds = array<i64: 32, 128>}, {transform_indices = @transform_2, window_bounds = array<i64: 1, 128>}, {transform_indices = @transform_3, window_bounds = array<i64: 16, 128>}]} {
    %c0 = arith.constant 0 : index
    %c0_0 = arith.constant 0 : index
    %0 = vector.load %arg2[%c0, %c0_0] : memref<16x32xbf16, #tpu.memory_space<vmem>>, vector<16x32xbf16>
    %c0_1 = arith.constant 0 : index
    %c0_2 = arith.constant 0 : index
    %1 = vector.load %arg3[%c0_1, %c0_2] : memref<32x128xbf16, #tpu.memory_space<vmem>>, vector<32x128xbf16>
    %cst = arith.constant dense<0.000000e+00> : vector<16x128xf32>
    %2 = tpu.matmul %0, %1, %cst {dimension_numbers = #tpu.dot_dimension_numbers<[1], [0], [0], [1], [0, 0, 1, 1], [], []>} : vector<16x32xbf16>, vector<32x128xbf16>, vector<16x128xf32> -> vector<16x128xf32>
    %c0_3 = arith.constant 0 : index
    %c0_4 = arith.constant 0 : index
    %3 = vector.load %arg4[%c0_3, %c0_4] : memref<1x128xf32, #tpu.memory_space<vmem>>, vector<1x128xf32>
    %4 = vector.broadcast %3 : vector<1x128xf32> to vector<16x128xf32>
    %5 = arith.addf %2, %4 : vector<16x128xf32>
    %6 = arith.truncf %5 : vector<16x128xf32> to vector<16x128xbf16>
    %c0_5 = arith.constant 0 : index
    %c0_6 = arith.constant 0 : index
    %7 = vector.load %arg5[%c0_5, %c0_6] : memref<16x128xbf16, #tpu.memory_space<vmem>>, vector<16x128xbf16>
    tpu.vector_store %arg5[%c0_5, %c0_6], %6 {strides = array<i32>} : memref<16x128xbf16, #tpu.memory_space<vmem>>, vector<16x128xbf16>,
    return
  }
  func.func @transform_0(%arg0: i32, %arg1: i32) -> (i32, i32) {
    %c0_i32 = arith.constant 0 : i32
    %c0_i32_0 = arith.constant 0 : i32
    return %arg0, %c0_i32 : i32, i32
  }
  func.func @transform_1(%arg0: i32, %arg1: i32) -> (i32, i32) {
    %c0_i32 = arith.constant 0 : i32
    %c0_i32_0 = arith.constant 0 : i32
    return %c0_i32, %arg1 : i32, i32
  }
  func.func @transform_2(%arg0: i32, %arg1: i32) -> (i32, i32) {
    %c0_i32 = arith.constant 0 : i32
    %c0_i32_0 = arith.constant 0 : i32
    return %c0_i32, %arg1 : i32, i32
  }
  func.func @transform_3(%arg0: i32, %arg1: i32) -> (i32, i32) {
    %c0_i32 = arith.constant 0 : i32
    return %arg0, %arg1 : i32, i32
  }
}

module attributes {stable_mosaic.version = 11 : i64} {
  func.func @_matmul_bias_1k_kernel(%arg0: i32, %arg1: i32, %arg2: memref<2x32xbf16, #tpu.memory_space<vmem>>, %arg3: memref<32x128xbf16, #tpu.memory_space<vmem>>, %arg4: memref<1x128xf32, #tpu.memory_space<vmem>>, %arg5: memref<2x128xbf16, #tpu.memory_space<vmem>>) attributes {dimension_semantics = [#tpu.dimension_semantics<parallel>, #tpu.dimension_semantics<parallel>], iteration_bounds = array<i64: 1, 1>, scalar_prefetch = 0 : i64, scratch_operands = 0 : i64, tpu.core_type = #tpu.core_type<tc>, window_params = [{transform_indices = @transform_0, window_bounds = array<i64: 2, 32>}, {transform_indices = @transform_1, window_bounds = array<i64: 32, 128>}, {transform_indices = @transform_2, window_bounds = array<i64: 1, 128>}, {transform_indices = @transform_3, window_bounds = array<i64: 2, 128>}]} {
    %c0 = arith.constant 0 : index
    %c0_0 = arith.constant 0 : index
    %0 = vector.load %arg2[%c0, %c0_0] : memref<2x32xbf16, #tpu.memory_space<vmem>>, vector<2x32xbf16>
    %c0_1 = arith.constant 0 : index
    %c0_2 = arith.constant 0 : index
    %1 = vector.load %arg3[%c0_1, %c0_2] : memref<32x128xbf16, #tpu.memory_space<vmem>>, vector<32x128xbf16>
    %cst = arith.constant dense<0.000000e+00> : vector<2x128xf32>
    %2 = tpu.matmul %0, %1, %cst {dimension_numbers = #tpu.dot_dimension_numbers<[1], [0], [0], [1], [0, 0, 1, 1], [], []>} : vector<2x32xbf16>, vector<32x128xbf16>, vector<2x128xf32> -> vector<2x128xf32>
    %c0_3 = arith.constant 0 : index
    %c0_4 = arith.constant 0 : index
    %3 = vector.load %arg4[%c0_3, %c0_4] : memref<1x128xf32, #tpu.memory_space<vmem>>, vector<1x128xf32>
    %4 = vector.broadcast %3 : vector<1x128xf32> to vector<2x128xf32>
    %5 = arith.addf %2, %4 : vector<2x128xf32>
    %6 = arith.truncf %5 : vector<2x128xf32> to vector<2x128xbf16>
    %c0_5 = arith.constant 0 : index
    %c0_6 = arith.constant 0 : index
    %7 = vector.load %arg5[%c0_5, %c0_6] : memref<2x128xbf16, #tpu.memory_space<vmem>>, vector<2x128xbf16>
    tpu.vector_store %arg5[%c0_5, %c0_6], %6 {strides = array<i32>} : memref<2x128xbf16, #tpu.memory_space<vmem>>, vector<2x128xbf16>,
    return
  }
  func.func @transform_0(%arg0: i32, %arg1: i32) -> (i32, i32) {
    %c0_i32 = arith.constant 0 : i32
    %c0_i32_0 = arith.constant 0 : i32
    return %arg0, %c0_i32 : i32, i32
  }
  func.func @transform_1(%arg0: i32, %arg1: i32) -> (i32, i32) {
    %c0_i32 = arith.constant 0 : i32
    %c0_i32_0 = arith.constant 0 : i32
    return %c0_i32, %arg1 : i32, i32
  }
  func.func @transform_2(%arg0: i32, %arg1: i32) -> (i32, i32) {
    %c0_i32 = arith.constant 0 : i32
    %c0_i32_0 = arith.constant 0 : i32
    return %c0_i32, %arg1 : i32, i32
  }
  func.func @transform_3(%arg0: i32, %arg1: i32) -> (i32, i32) {
    %c0_i32 = arith.constant 0 : i32
    return %arg0, %arg1 : i32, i32
  }
}

module attributes {stable_mosaic.version = 11 : i64} {
  func.func @_lstm_layer_kernel(%arg0: i32, %arg1: memref<8x2x128xbf16, #tpu.memory_space<vmem>>, %arg2: memref<32x128xbf16, #tpu.memory_space<vmem>>, %arg3: memref<8x2x32xbf16, #tpu.memory_space<vmem>>, %arg4: memref<2x32xf32, #tpu.memory_space<vmem>>, %arg5: memref<2x32xf32, #tpu.memory_space<vmem>>) attributes {dimension_semantics = [#tpu.dimension_semantics<parallel>], iteration_bounds = array<i64: 1>, scalar_prefetch = 0 : i64, scratch_operands = 2 : i64, tpu.core_type = #tpu.core_type<tc>, window_params = [{transform_indices = @transform_0, window_bounds = array<i64: 8, 2, 128>}, {pipeline_mode = #tpu.pipeline_mode<synchronous>, transform_indices = @transform_1, window_bounds = array<i64: 32, 128>}, {transform_indices = @transform_2, window_bounds = array<i64: 8, 2, 32>}]} {
    %cst = arith.constant 0.000000e+00 : f32
    %0 = vector.broadcast %cst : f32 to vector<2x32xf32>
    %c0 = arith.constant 0 : index
    %c0_0 = arith.constant 0 : index
    %1 = vector.load %arg4[%c0, %c0_0] : memref<2x32xf32, #tpu.memory_space<vmem>>, vector<2x32xf32>
    tpu.vector_store %arg4[%c0, %c0_0], %0 {strides = array<i32>} : memref<2x32xf32, #tpu.memory_space<vmem>>, vector<2x32xf32>,
    %cst_1 = arith.constant 0.000000e+00 : f32
    %2 = vector.broadcast %cst_1 : f32 to vector<2x32xf32>
    %c0_2 = arith.constant 0 : index
    %c0_3 = arith.constant 0 : index
    %3 = vector.load %arg5[%c0_2, %c0_3] : memref<2x32xf32, #tpu.memory_space<vmem>>, vector<2x32xf32>
    tpu.vector_store %arg5[%c0_2, %c0_3], %2 {strides = array<i32>} : memref<2x32xf32, #tpu.memory_space<vmem>>, vector<2x32xf32>,
    %c0_i32 = arith.constant 0 : i32
    %c8_i32 = arith.constant 8 : i32
    %4 = arith.addi %c0_i32, %c8_i32 : i32
    %c1_i32 = arith.constant 1 : i32
    scf.for %arg6 = %c0_i32 to %4 step %c1_i32  : i32 {
      %c1_i32_5 = arith.constant 1 : i32
      %5 = arith.muli %arg6, %c1_i32_5 : i32
      %c0_i32_6 = arith.constant 0 : i32
      %6 = arith.addi %c0_i32_6, %5 : i32
      %7 = arith.index_cast %6 : i32 to index
      %c0_7 = arith.constant 0 : index
      %c0_8 = arith.constant 0 : index
      %8 = vector.load %arg1[%7, %c0_7, %c0_8] : memref<8x2x128xbf16, #tpu.memory_space<vmem>>, vector<1x2x128xbf16>
      %9 = vector.shape_cast %8 : vector<1x2x128xbf16> to vector<2x128xbf16>
      %10 = arith.extf %9 : vector<2x128xbf16> to vector<2x128xf32>
      %c0_9 = arith.constant 0 : index
      %c0_10 = arith.constant 0 : index
      %11 = vector.load %arg4[%c0_9, %c0_10] : memref<2x32xf32, #tpu.memory_space<vmem>>, vector<2x32xf32>
      %12 = arith.truncf %11 : vector<2x32xf32> to vector<2x32xbf16>
      %c0_11 = arith.constant 0 : index
      %c0_12 = arith.constant 0 : index
      %13 = vector.load %arg2[%c0_11, %c0_12] : memref<32x128xbf16, #tpu.memory_space<vmem>>, vector<32x128xbf16>
      %cst_13 = arith.constant dense<0.000000e+00> : vector<2x128xf32>
      %14 = tpu.matmul %12, %13, %cst_13 {dimension_numbers = #tpu.dot_dimension_numbers<[1], [0], [0], [1], [0, 0, 1, 1], [], []>} : vector<2x32xbf16>, vector<32x128xbf16>, vector<2x128xf32> -> vector<2x128xf32>
      %15 = arith.addf %10, %14 : vector<2x128xf32>
      %16 = vector.extract_strided_slice %15 {offsets = [0, 0], sizes = [2, 32], strides = [1, 1]} : vector<2x128xf32> to vector<2x32xf32>
      %17 = arith.negf %16 : vector<2x32xf32>
      %18 = math.exp %17 : vector<2x32xf32>
      %cst_14 = arith.constant 1.000000e+00 : f32
      %19 = vector.broadcast %cst_14 : f32 to vector<2x32xf32>
      %20 = arith.addf %19, %18 : vector<2x32xf32>
      %21 = arith.divf %19, %20 : vector<2x32xf32>
      %22 = vector.extract_strided_slice %15 {offsets = [0, 32], sizes = [2, 32], strides = [1, 1]} : vector<2x128xf32> to vector<2x32xf32>
      %23 = arith.negf %22 : vector<2x32xf32>
      %24 = math.exp %23 : vector<2x32xf32>
      %cst_15 = arith.constant 1.000000e+00 : f32
      %25 = vector.broadcast %cst_15 : f32 to vector<2x32xf32>
      %26 = arith.addf %25, %24 : vector<2x32xf32>
      %27 = arith.divf %25, %26 : vector<2x32xf32>
      %28 = vector.extract_strided_slice %15 {offsets = [0, 64], sizes = [2, 32], strides = [1, 1]} : vector<2x128xf32> to vector<2x32xf32>
      %29 = math.tanh %28 : vector<2x32xf32>
      %30 = vector.extract_strided_slice %15 {offsets = [0, 96], sizes = [2, 32], strides = [1, 1]} : vector<2x128xf32> to vector<2x32xf32>
      %31 = arith.negf %30 : vector<2x32xf32>
      %32 = math.exp %31 : vector<2x32xf32>
      %cst_16 = arith.constant 1.000000e+00 : f32
      %33 = vector.broadcast %cst_16 : f32 to vector<2x32xf32>
      %34 = arith.addf %33, %32 : vector<2x32xf32>
      %35 = arith.divf %33, %34 : vector<2x32xf32>
      %c0_17 = arith.constant 0 : index
      %c0_18 = arith.constant 0 : index
      %36 = vector.load %arg5[%c0_17, %c0_18] : memref<2x32xf32, #tpu.memory_space<vmem>>, vector<2x32xf32>
      %37 = arith.mulf %27, %36 : vector<2x32xf32>
      %38 = arith.mulf %21, %29 : vector<2x32xf32>
      %39 = arith.addf %37, %38 : vector<2x32xf32>
      %40 = math.tanh %39 : vector<2x32xf32>
      %41 = arith.mulf %35, %40 : vector<2x32xf32>
      %c0_19 = arith.constant 0 : index
      %c0_20 = arith.constant 0 : index
      %42 = vector.load %arg5[%c0_19, %c0_20] : memref<2x32xf32, #tpu.memory_space<vmem>>, vector<2x32xf32>
      tpu.vector_store %arg5[%c0_19, %c0_20], %39 {strides = array<i32>} : memref<2x32xf32, #tpu.memory_space<vmem>>, vector<2x32xf32>,
      %c0_21 = arith.constant 0 : index
      %c0_22 = arith.constant 0 : index
      %43 = vector.load %arg4[%c0_21, %c0_22] : memref<2x32xf32, #tpu.memory_space<vmem>>, vector<2x32xf32>
      tpu.vector_store %arg4[%c0_21, %c0_22], %41 {strides = array<i32>} : memref<2x32xf32, #tpu.memory_space<vmem>>, vector<2x32xf32>,
      %44 = arith.truncf %41 : vector<2x32xf32> to vector<2x32xbf16>
      %45 = arith.index_cast %6 : i32 to index
      %c0_23 = arith.constant 0 : index
      %c0_24 = arith.constant 0 : index
      %46 = vector.load %arg3[%45, %c0_23, %c0_24] : memref<8x2x32xbf16, #tpu.memory_space<vmem>>, vector<1x2x32xbf16>
      %47 = vector.shape_cast %46 : vector<1x2x32xbf16> to vector<2x32xbf16>
      %48 = vector.shape_cast %44 : vector<2x32xbf16> to vector<1x2x32xbf16>
      tpu.vector_store %arg3[%45, %c0_23, %c0_24], %48 {strides = array<i32>} : memref<8x2x32xbf16, #tpu.memory_space<vmem>>, vector<1x2x32xbf16>,
    }
    %c8_i32_4 = arith.constant 8 : i32
    return
  }
  func.func @transform_0(%arg0: i32) -> (i32, i32, i32) {
    %c0_i32 = arith.constant 0 : i32
    %c0_i32_0 = arith.constant 0 : i32
    %c0_i32_1 = arith.constant 0 : i32
    return %c0_i32, %arg0, %c0_i32_0 : i32, i32, i32
  }
  func.func @transform_1(%arg0: i32) -> (i32, i32) {
    %c0_i32 = arith.constant 0 : i32
    %c0_i32_0 = arith.constant 0 : i32
    %c0_i32_1 = arith.constant 0 : i32
    return %c0_i32, %c0_i32_0 : i32, i32
  }
  func.func @transform_2(%arg0: i32) -> (i32, i32, i32) {
    %c0_i32 = arith.constant 0 : i32
    %c0_i32_0 = arith.constant 0 : i32
    %c0_i32_1 = arith.constant 0 : i32
    return %c0_i32, %arg0, %c0_i32_0 : i32, i32, i32
  }
}

module attributes {stable_mosaic.version = 11 : i64} {
  func.func @_matmul_bias_1k_kernel(%arg0: i32, %arg1: i32, %arg2: memref<14x32xbf16, #tpu.memory_space<vmem>>, %arg3: memref<32x128xbf16, #tpu.memory_space<vmem>>, %arg4: memref<1x128xf32, #tpu.memory_space<vmem>>, %arg5: memref<14x128xbf16, #tpu.memory_space<vmem>>) attributes {dimension_semantics = [#tpu.dimension_semantics<parallel>, #tpu.dimension_semantics<parallel>], iteration_bounds = array<i64: 1, 1>, scalar_prefetch = 0 : i64, scratch_operands = 0 : i64, tpu.core_type = #tpu.core_type<tc>, window_params = [{transform_indices = @transform_0, window_bounds = array<i64: 14, 32>}, {transform_indices = @transform_1, window_bounds = array<i64: 32, 128>}, {transform_indices = @transform_2, window_bounds = array<i64: 1, 128>}, {transform_indices = @transform_3, window_bounds = array<i64: 14, 128>}]} {
    %c0 = arith.constant 0 : index
    %c0_0 = arith.constant 0 : index
    %0 = vector.load %arg2[%c0, %c0_0] : memref<14x32xbf16, #tpu.memory_space<vmem>>, vector<14x32xbf16>
    %c0_1 = arith.constant 0 : index
    %c0_2 = arith.constant 0 : index
    %1 = vector.load %arg3[%c0_1, %c0_2] : memref<32x128xbf16, #tpu.memory_space<vmem>>, vector<32x128xbf16>
    %cst = arith.constant dense<0.000000e+00> : vector<14x128xf32>
    %2 = tpu.matmul %0, %1, %cst {dimension_numbers = #tpu.dot_dimension_numbers<[1], [0], [0], [1], [0, 0, 1, 1], [], []>} : vector<14x32xbf16>, vector<32x128xbf16>, vector<14x128xf32> -> vector<14x128xf32>
    %c0_3 = arith.constant 0 : index
    %c0_4 = arith.constant 0 : index
    %3 = vector.load %arg4[%c0_3, %c0_4] : memref<1x128xf32, #tpu.memory_space<vmem>>, vector<1x128xf32>
    %4 = vector.broadcast %3 : vector<1x128xf32> to vector<14x128xf32>
    %5 = arith.addf %2, %4 : vector<14x128xf32>
    %6 = arith.truncf %5 : vector<14x128xf32> to vector<14x128xbf16>
    %c0_5 = arith.constant 0 : index
    %c0_6 = arith.constant 0 : index
    %7 = vector.load %arg5[%c0_5, %c0_6] : memref<14x128xbf16, #tpu.memory_space<vmem>>, vector<14x128xbf16>
    tpu.vector_store %arg5[%c0_5, %c0_6], %6 {strides = array<i32>} : memref<14x128xbf16, #tpu.memory_space<vmem>>, vector<14x128xbf16>,
    return
  }
  func.func @transform_0(%arg0: i32, %arg1: i32) -> (i32, i32) {
    %c0_i32 = arith.constant 0 : i32
    %c0_i32_0 = arith.constant 0 : i32
    return %arg0, %c0_i32 : i32, i32
  }
  func.func @transform_1(%arg0: i32, %arg1: i32) -> (i32, i32) {
    %c0_i32 = arith.constant 0 : i32
    %c0_i32_0 = arith.constant 0 : i32
    return %c0_i32, %arg1 : i32, i32
  }
  func.func @transform_2(%arg0: i32, %arg1: i32) -> (i32, i32) {
    %c0_i32 = arith.constant 0 : i32
    %c0_i32_0 = arith.constant 0 : i32
    return %c0_i32, %arg1 : i32, i32
  }
  func.func @transform_3(%arg0: i32, %arg1: i32) -> (i32, i32) {
    %c0_i32 = arith.constant 0 : i32
    return %arg0, %arg1 : i32, i32
  }
}

module attributes {stable_mosaic.version = 11 : i64} {
  func.func @_lstm_layer_kernel(%arg0: i32, %arg1: memref<7x2x128xbf16, #tpu.memory_space<vmem>>, %arg2: memref<32x128xbf16, #tpu.memory_space<vmem>>, %arg3: memref<7x2x32xbf16, #tpu.memory_space<vmem>>, %arg4: memref<2x32xf32, #tpu.memory_space<vmem>>, %arg5: memref<2x32xf32, #tpu.memory_space<vmem>>) attributes {dimension_semantics = [#tpu.dimension_semantics<parallel>], iteration_bounds = array<i64: 1>, scalar_prefetch = 0 : i64, scratch_operands = 2 : i64, tpu.core_type = #tpu.core_type<tc>, window_params = [{transform_indices = @transform_0, window_bounds = array<i64: 7, 2, 128>}, {pipeline_mode = #tpu.pipeline_mode<synchronous>, transform_indices = @transform_1, window_bounds = array<i64: 32, 128>}, {transform_indices = @transform_2, window_bounds = array<i64: 7, 2, 32>}]} {
    %cst = arith.constant 0.000000e+00 : f32
    %0 = vector.broadcast %cst : f32 to vector<2x32xf32>
    %c0 = arith.constant 0 : index
    %c0_0 = arith.constant 0 : index
    %1 = vector.load %arg4[%c0, %c0_0] : memref<2x32xf32, #tpu.memory_space<vmem>>, vector<2x32xf32>
    tpu.vector_store %arg4[%c0, %c0_0], %0 {strides = array<i32>} : memref<2x32xf32, #tpu.memory_space<vmem>>, vector<2x32xf32>,
    %cst_1 = arith.constant 0.000000e+00 : f32
    %2 = vector.broadcast %cst_1 : f32 to vector<2x32xf32>
    %c0_2 = arith.constant 0 : index
    %c0_3 = arith.constant 0 : index
    %3 = vector.load %arg5[%c0_2, %c0_3] : memref<2x32xf32, #tpu.memory_space<vmem>>, vector<2x32xf32>
    tpu.vector_store %arg5[%c0_2, %c0_3], %2 {strides = array<i32>} : memref<2x32xf32, #tpu.memory_space<vmem>>, vector<2x32xf32>,
    %c0_i32 = arith.constant 0 : i32
    %c7_i32 = arith.constant 7 : i32
    %4 = arith.addi %c0_i32, %c7_i32 : i32
    %c1_i32 = arith.constant 1 : i32
    scf.for %arg6 = %c0_i32 to %4 step %c1_i32  : i32 {
      %c1_i32_5 = arith.constant 1 : i32
      %5 = arith.muli %arg6, %c1_i32_5 : i32
      %c0_i32_6 = arith.constant 0 : i32
      %6 = arith.addi %c0_i32_6, %5 : i32
      %7 = arith.index_cast %6 : i32 to index
      %c0_7 = arith.constant 0 : index
      %c0_8 = arith.constant 0 : index
      %8 = vector.load %arg1[%7, %c0_7, %c0_8] : memref<7x2x128xbf16, #tpu.memory_space<vmem>>, vector<1x2x128xbf16>
      %9 = vector.shape_cast %8 : vector<1x2x128xbf16> to vector<2x128xbf16>
      %10 = arith.extf %9 : vector<2x128xbf16> to vector<2x128xf32>
      %c0_9 = arith.constant 0 : index
      %c0_10 = arith.constant 0 : index
      %11 = vector.load %arg4[%c0_9, %c0_10] : memref<2x32xf32, #tpu.memory_space<vmem>>, vector<2x32xf32>
      %12 = arith.truncf %11 : vector<2x32xf32> to vector<2x32xbf16>
      %c0_11 = arith.constant 0 : index
      %c0_12 = arith.constant 0 : index
      %13 = vector.load %arg2[%c0_11, %c0_12] : memref<32x128xbf16, #tpu.memory_space<vmem>>, vector<32x128xbf16>
      %cst_13 = arith.constant dense<0.000000e+00> : vector<2x128xf32>
      %14 = tpu.matmul %12, %13, %cst_13 {dimension_numbers = #tpu.dot_dimension_numbers<[1], [0], [0], [1], [0, 0, 1, 1], [], []>} : vector<2x32xbf16>, vector<32x128xbf16>, vector<2x128xf32> -> vector<2x128xf32>
      %15 = arith.addf %10, %14 : vector<2x128xf32>
      %16 = vector.extract_strided_slice %15 {offsets = [0, 0], sizes = [2, 32], strides = [1, 1]} : vector<2x128xf32> to vector<2x32xf32>
      %17 = arith.negf %16 : vector<2x32xf32>
      %18 = math.exp %17 : vector<2x32xf32>
      %cst_14 = arith.constant 1.000000e+00 : f32
      %19 = vector.broadcast %cst_14 : f32 to vector<2x32xf32>
      %20 = arith.addf %19, %18 : vector<2x32xf32>
      %21 = arith.divf %19, %20 : vector<2x32xf32>
      %22 = vector.extract_strided_slice %15 {offsets = [0, 32], sizes = [2, 32], strides = [1, 1]} : vector<2x128xf32> to vector<2x32xf32>
      %23 = arith.negf %22 : vector<2x32xf32>
      %24 = math.exp %23 : vector<2x32xf32>
      %cst_15 = arith.constant 1.000000e+00 : f32
      %25 = vector.broadcast %cst_15 : f32 to vector<2x32xf32>
      %26 = arith.addf %25, %24 : vector<2x32xf32>
      %27 = arith.divf %25, %26 : vector<2x32xf32>
      %28 = vector.extract_strided_slice %15 {offsets = [0, 64], sizes = [2, 32], strides = [1, 1]} : vector<2x128xf32> to vector<2x32xf32>
      %29 = math.tanh %28 : vector<2x32xf32>
      %30 = vector.extract_strided_slice %15 {offsets = [0, 96], sizes = [2, 32], strides = [1, 1]} : vector<2x128xf32> to vector<2x32xf32>
      %31 = arith.negf %30 : vector<2x32xf32>
      %32 = math.exp %31 : vector<2x32xf32>
      %cst_16 = arith.constant 1.000000e+00 : f32
      %33 = vector.broadcast %cst_16 : f32 to vector<2x32xf32>
      %34 = arith.addf %33, %32 : vector<2x32xf32>
      %35 = arith.divf %33, %34 : vector<2x32xf32>
      %c0_17 = arith.constant 0 : index
      %c0_18 = arith.constant 0 : index
      %36 = vector.load %arg5[%c0_17, %c0_18] : memref<2x32xf32, #tpu.memory_space<vmem>>, vector<2x32xf32>
      %37 = arith.mulf %27, %36 : vector<2x32xf32>
      %38 = arith.mulf %21, %29 : vector<2x32xf32>
      %39 = arith.addf %37, %38 : vector<2x32xf32>
      %40 = math.tanh %39 : vector<2x32xf32>
      %41 = arith.mulf %35, %40 : vector<2x32xf32>
      %c0_19 = arith.constant 0 : index
      %c0_20 = arith.constant 0 : index
      %42 = vector.load %arg5[%c0_19, %c0_20] : memref<2x32xf32, #tpu.memory_space<vmem>>, vector<2x32xf32>
      tpu.vector_store %arg5[%c0_19, %c0_20], %39 {strides = array<i32>} : memref<2x32xf32, #tpu.memory_space<vmem>>, vector<2x32xf32>,
      %c0_21 = arith.constant 0 : index
      %c0_22 = arith.constant 0 : index
      %43 = vector.load %arg4[%c0_21, %c0_22] : memref<2x32xf32, #tpu.memory_space<vmem>>, vector<2x32xf32>
      tpu.vector_store %arg4[%c0_21, %c0_22], %41 {strides = array<i32>} : memref<2x32xf32, #tpu.memory_space<vmem>>, vector<2x32xf32>,
      %44 = arith.truncf %41 : vector<2x32xf32> to vector<2x32xbf16>
      %45 = arith.index_cast %6 : i32 to index
      %c0_23 = arith.constant 0 : index
      %c0_24 = arith.constant 0 : index
      %46 = vector.load %arg3[%45, %c0_23, %c0_24] : memref<7x2x32xbf16, #tpu.memory_space<vmem>>, vector<1x2x32xbf16>
      %47 = vector.shape_cast %46 : vector<1x2x32xbf16> to vector<2x32xbf16>
      %48 = vector.shape_cast %44 : vector<2x32xbf16> to vector<1x2x32xbf16>
      tpu.vector_store %arg3[%45, %c0_23, %c0_24], %48 {strides = array<i32>} : memref<7x2x32xbf16, #tpu.memory_space<vmem>>, vector<1x2x32xbf16>,
    }
    %c7_i32_4 = arith.constant 7 : i32
    return
  }
  func.func @transform_0(%arg0: i32) -> (i32, i32, i32) {
    %c0_i32 = arith.constant 0 : i32
    %c0_i32_0 = arith.constant 0 : i32
    %c0_i32_1 = arith.constant 0 : i32
    return %c0_i32, %arg0, %c0_i32_0 : i32, i32, i32
  }
  func.func @transform_1(%arg0: i32) -> (i32, i32) {
    %c0_i32 = arith.constant 0 : i32
    %c0_i32_0 = arith.constant 0 : i32
    %c0_i32_1 = arith.constant 0 : i32
    return %c0_i32, %c0_i32_0 : i32, i32
  }
  func.func @transform_2(%arg0: i32) -> (i32, i32, i32) {
    %c0_i32 = arith.constant 0 : i32
    %c0_i32_0 = arith.constant 0 : i32
    %c0_i32_1 = arith.constant 0 : i32
    return %c0_i32, %arg0, %c0_i32_0 : i32, i32, i32
  }
}

module attributes {stable_mosaic.version = 11 : i64} {
  func.func @_conv3x3_kernel(%arg0: i32, %arg1: memref<1x70x32xbf16, #tpu.memory_space<vmem>>, %arg2: memref<9x32x128xbf16, #tpu.memory_space<vmem>>, %arg3: memref<1x128xf32, #tpu.memory_space<vmem>>, %arg4: memref<1x40x128xf32, #tpu.memory_space<vmem>>) attributes {dimension_semantics = [#tpu.dimension_semantics<parallel>], iteration_bounds = array<i64: 2>, scalar_prefetch = 0 : i64, scratch_operands = 0 : i64, tpu.core_type = #tpu.core_type<tc>, window_params = [{transform_indices = @transform_0, window_bounds = array<i64: 1, 70, 32>}, {pipeline_mode = #tpu.pipeline_mode<synchronous>, transform_indices = @transform_1, window_bounds = array<i64: 9, 32, 128>}, {pipeline_mode = #tpu.pipeline_mode<synchronous>, transform_indices = @transform_2, window_bounds = array<i64: 1, 128>}, {transform_indices = @transform_3, window_bounds = array<i64: 1, 40, 128>}]} {
    %c0 = arith.constant 0 : index
    %c0_0 = arith.constant 0 : index
    %0 = vector.load %arg3[%c0, %c0_0] : memref<1x128xf32, #tpu.memory_space<vmem>>, vector<1x128xf32>
    %1 = vector.shape_cast %0 : vector<1x128xf32> to vector<1x128xf32>
    %2 = vector.broadcast %1 : vector<1x128xf32> to vector<40x128xf32>
    %c0_1 = arith.constant 0 : index
    %c0_2 = arith.constant 0 : index
    %c0_3 = arith.constant 0 : index
    %3 = vector.load %arg4[%c0_1, %c0_2, %c0_3] : memref<1x40x128xf32, #tpu.memory_space<vmem>>, vector<1x40x128xf32>
    %4 = vector.shape_cast %3 : vector<1x40x128xf32> to vector<40x128xf32>
    %5 = vector.shape_cast %2 : vector<40x128xf32> to vector<1x40x128xf32>
    tpu.vector_store %arg4[%c0_1, %c0_2, %c0_3], %5 {strides = array<i32>} : memref<1x40x128xf32, #tpu.memory_space<vmem>>, vector<1x40x128xf32>,
    %c0_4 = arith.constant 0 : index
    %c0_5 = arith.constant 0 : index
    %c0_6 = arith.constant 0 : index
    %6 = vector.load %arg1[%c0_4, %c0_5, %c0_6] : memref<1x70x32xbf16, #tpu.memory_space<vmem>>, vector<1x40x32xbf16>
    %7 = vector.shape_cast %6 : vector<1x40x32xbf16> to vector<40x32xbf16>
    %c0_7 = arith.constant 0 : index
    %c0_8 = arith.constant 0 : index
    %c0_9 = arith.constant 0 : index
    %8 = vector.load %arg4[%c0_7, %c0_8, %c0_9] : memref<1x40x128xf32, #tpu.memory_space<vmem>>, vector<1x40x128xf32>
    %9 = vector.shape_cast %8 : vector<1x40x128xf32> to vector<40x128xf32>
    %c0_10 = arith.constant 0 : index
    %c0_11 = arith.constant 0 : index
    %c0_12 = arith.constant 0 : index
    %10 = vector.load %arg2[%c0_10, %c0_11, %c0_12] : memref<9x32x128xbf16, #tpu.memory_space<vmem>>, vector<1x32x128xbf16>
    %11 = vector.shape_cast %10 : vector<1x32x128xbf16> to vector<32x128xbf16>
    %cst = arith.constant dense<0.000000e+00> : vector<40x128xf32>
    %12 = tpu.matmul %7, %11, %cst {dimension_numbers = #tpu.dot_dimension_numbers<[1], [0], [0], [1], [0, 0, 1, 1], [], []>} : vector<40x32xbf16>, vector<32x128xbf16>, vector<40x128xf32> -> vector<40x128xf32>
    %13 = arith.addf %9, %12 : vector<40x128xf32>
    %c0_13 = arith.constant 0 : index
    %c0_14 = arith.constant 0 : index
    %c0_15 = arith.constant 0 : index
    %14 = vector.load %arg4[%c0_13, %c0_14, %c0_15] : memref<1x40x128xf32, #tpu.memory_space<vmem>>, vector<1x40x128xf32>
    %15 = vector.shape_cast %14 : vector<1x40x128xf32> to vector<40x128xf32>
    %16 = vector.shape_cast %13 : vector<40x128xf32> to vector<1x40x128xf32>
    tpu.vector_store %arg4[%c0_13, %c0_14, %c0_15], %16 {strides = array<i32>} : memref<1x40x128xf32, #tpu.memory_space<vmem>>, vector<1x40x128xf32>,
    %c0_16 = arith.constant 0 : index
    %c1 = arith.constant 1 : index
    %c0_17 = arith.constant 0 : index
    %17 = vector.load %arg1[%c0_16, %c1, %c0_17] : memref<1x70x32xbf16, #tpu.memory_space<vmem>>, vector<1x40x32xbf16>
    %18 = vector.shape_cast %17 : vector<1x40x32xbf16> to vector<40x32xbf16>
    %c0_18 = arith.constant 0 : index
    %c0_19 = arith.constant 0 : index
    %c0_20 = arith.constant 0 : index
    %19 = vector.load %arg4[%c0_18, %c0_19, %c0_20] : memref<1x40x128xf32, #tpu.memory_space<vmem>>, vector<1x40x128xf32>
    %20 = vector.shape_cast %19 : vector<1x40x128xf32> to vector<40x128xf32>
    %c1_21 = arith.constant 1 : index
    %c0_22 = arith.constant 0 : index
    %c0_23 = arith.constant 0 : index
    %21 = vector.load %arg2[%c1_21, %c0_22, %c0_23] : memref<9x32x128xbf16, #tpu.memory_space<vmem>>, vector<1x32x128xbf16>
    %22 = vector.shape_cast %21 : vector<1x32x128xbf16> to vector<32x128xbf16>
    %cst_24 = arith.constant dense<0.000000e+00> : vector<40x128xf32>
    %23 = tpu.matmul %18, %22, %cst_24 {dimension_numbers = #tpu.dot_dimension_numbers<[1], [0], [0], [1], [0, 0, 1, 1], [], []>} : vector<40x32xbf16>, vector<32x128xbf16>, vector<40x128xf32> -> vector<40x128xf32>
    %24 = arith.addf %20, %23 : vector<40x128xf32>
    %c0_25 = arith.constant 0 : index
    %c0_26 = arith.constant 0 : index
    %c0_27 = arith.constant 0 : index
    %25 = vector.load %arg4[%c0_25, %c0_26, %c0_27] : memref<1x40x128xf32, #tpu.memory_space<vmem>>, vector<1x40x128xf32>
    %26 = vector.shape_cast %25 : vector<1x40x128xf32> to vector<40x128xf32>
    %27 = vector.shape_cast %24 : vector<40x128xf32> to vector<1x40x128xf32>
    tpu.vector_store %arg4[%c0_25, %c0_26, %c0_27], %27 {strides = array<i32>} : memref<1x40x128xf32, #tpu.memory_space<vmem>>, vector<1x40x128xf32>,
    %c0_28 = arith.constant 0 : index
    %c2 = arith.constant 2 : index
    %c0_29 = arith.constant 0 : index
    %28 = vector.load %arg1[%c0_28, %c2, %c0_29] : memref<1x70x32xbf16, #tpu.memory_space<vmem>>, vector<1x40x32xbf16>
    %29 = vector.shape_cast %28 : vector<1x40x32xbf16> to vector<40x32xbf16>
    %c0_30 = arith.constant 0 : index
    %c0_31 = arith.constant 0 : index
    %c0_32 = arith.constant 0 : index
    %30 = vector.load %arg4[%c0_30, %c0_31, %c0_32] : memref<1x40x128xf32, #tpu.memory_space<vmem>>, vector<1x40x128xf32>
    %31 = vector.shape_cast %30 : vector<1x40x128xf32> to vector<40x128xf32>
    %c2_33 = arith.constant 2 : index
    %c0_34 = arith.constant 0 : index
    %c0_35 = arith.constant 0 : index
    %32 = vector.load %arg2[%c2_33, %c0_34, %c0_35] : memref<9x32x128xbf16, #tpu.memory_space<vmem>>, vector<1x32x128xbf16>
    %33 = vector.shape_cast %32 : vector<1x32x128xbf16> to vector<32x128xbf16>
    %cst_36 = arith.constant dense<0.000000e+00> : vector<40x128xf32>
    %34 = tpu.matmul %29, %33, %cst_36 {dimension_numbers = #tpu.dot_dimension_numbers<[1], [0], [0], [1], [0, 0, 1, 1], [], []>} : vector<40x32xbf16>, vector<32x128xbf16>, vector<40x128xf32> -> vector<40x128xf32>
    %35 = arith.addf %31, %34 : vector<40x128xf32>
    %c0_37 = arith.constant 0 : index
    %c0_38 = arith.constant 0 : index
    %c0_39 = arith.constant 0 : index
    %36 = vector.load %arg4[%c0_37, %c0_38, %c0_39] : memref<1x40x128xf32, #tpu.memory_space<vmem>>, vector<1x40x128xf32>
    %37 = vector.shape_cast %36 : vector<1x40x128xf32> to vector<40x128xf32>
    %38 = vector.shape_cast %35 : vector<40x128xf32> to vector<1x40x128xf32>
    tpu.vector_store %arg4[%c0_37, %c0_38, %c0_39], %38 {strides = array<i32>} : memref<1x40x128xf32, #tpu.memory_space<vmem>>, vector<1x40x128xf32>,
    %c0_40 = arith.constant 0 : index
    %c10 = arith.constant 10 : index
    %c0_41 = arith.constant 0 : index
    %39 = vector.load %arg1[%c0_40, %c10, %c0_41] : memref<1x70x32xbf16, #tpu.memory_space<vmem>>, vector<1x40x32xbf16>
    %40 = vector.shape_cast %39 : vector<1x40x32xbf16> to vector<40x32xbf16>
    %c0_42 = arith.constant 0 : index
    %c0_43 = arith.constant 0 : index
    %c0_44 = arith.constant 0 : index
    %41 = vector.load %arg4[%c0_42, %c0_43, %c0_44] : memref<1x40x128xf32, #tpu.memory_space<vmem>>, vector<1x40x128xf32>
    %42 = vector.shape_cast %41 : vector<1x40x128xf32> to vector<40x128xf32>
    %c3 = arith.constant 3 : index
    %c0_45 = arith.constant 0 : index
    %c0_46 = arith.constant 0 : index
    %43 = vector.load %arg2[%c3, %c0_45, %c0_46] : memref<9x32x128xbf16, #tpu.memory_space<vmem>>, vector<1x32x128xbf16>
    %44 = vector.shape_cast %43 : vector<1x32x128xbf16> to vector<32x128xbf16>
    %cst_47 = arith.constant dense<0.000000e+00> : vector<40x128xf32>
    %45 = tpu.matmul %40, %44, %cst_47 {dimension_numbers = #tpu.dot_dimension_numbers<[1], [0], [0], [1], [0, 0, 1, 1], [], []>} : vector<40x32xbf16>, vector<32x128xbf16>, vector<40x128xf32> -> vector<40x128xf32>
    %46 = arith.addf %42, %45 : vector<40x128xf32>
    %c0_48 = arith.constant 0 : index
    %c0_49 = arith.constant 0 : index
    %c0_50 = arith.constant 0 : index
    %47 = vector.load %arg4[%c0_48, %c0_49, %c0_50] : memref<1x40x128xf32, #tpu.memory_space<vmem>>, vector<1x40x128xf32>
    %48 = vector.shape_cast %47 : vector<1x40x128xf32> to vector<40x128xf32>
    %49 = vector.shape_cast %46 : vector<40x128xf32> to vector<1x40x128xf32>
    tpu.vector_store %arg4[%c0_48, %c0_49, %c0_50], %49 {strides = array<i32>} : memref<1x40x128xf32, #tpu.memory_space<vmem>>, vector<1x40x128xf32>,
    %c0_51 = arith.constant 0 : index
    %c11 = arith.constant 11 : index
    %c0_52 = arith.constant 0 : index
    %50 = vector.load %arg1[%c0_51, %c11, %c0_52] : memref<1x70x32xbf16, #tpu.memory_space<vmem>>, vector<1x40x32xbf16>
    %51 = vector.shape_cast %50 : vector<1x40x32xbf16> to vector<40x32xbf16>
    %c0_53 = arith.constant 0 : index
    %c0_54 = arith.constant 0 : index
    %c0_55 = arith.constant 0 : index
    %52 = vector.load %arg4[%c0_53, %c0_54, %c0_55] : memref<1x40x128xf32, #tpu.memory_space<vmem>>, vector<1x40x128xf32>
    %53 = vector.shape_cast %52 : vector<1x40x128xf32> to vector<40x128xf32>
    %c4 = arith.constant 4 : index
    %c0_56 = arith.constant 0 : index
    %c0_57 = arith.constant 0 : index
    %54 = vector.load %arg2[%c4, %c0_56, %c0_57] : memref<9x32x128xbf16, #tpu.memory_space<vmem>>, vector<1x32x128xbf16>
    %55 = vector.shape_cast %54 : vector<1x32x128xbf16> to vector<32x128xbf16>
    %cst_58 = arith.constant dense<0.000000e+00> : vector<40x128xf32>
    %56 = tpu.matmul %51, %55, %cst_58 {dimension_numbers = #tpu.dot_dimension_numbers<[1], [0], [0], [1], [0, 0, 1, 1], [], []>} : vector<40x32xbf16>, vector<32x128xbf16>, vector<40x128xf32> -> vector<40x128xf32>
    %57 = arith.addf %53, %56 : vector<40x128xf32>
    %c0_59 = arith.constant 0 : index
    %c0_60 = arith.constant 0 : index
    %c0_61 = arith.constant 0 : index
    %58 = vector.load %arg4[%c0_59, %c0_60, %c0_61] : memref<1x40x128xf32, #tpu.memory_space<vmem>>, vector<1x40x128xf32>
    %59 = vector.shape_cast %58 : vector<1x40x128xf32> to vector<40x128xf32>
    %60 = vector.shape_cast %57 : vector<40x128xf32> to vector<1x40x128xf32>
    tpu.vector_store %arg4[%c0_59, %c0_60, %c0_61], %60 {strides = array<i32>} : memref<1x40x128xf32, #tpu.memory_space<vmem>>, vector<1x40x128xf32>,
    %c0_62 = arith.constant 0 : index
    %c12 = arith.constant 12 : index
    %c0_63 = arith.constant 0 : index
    %61 = vector.load %arg1[%c0_62, %c12, %c0_63] : memref<1x70x32xbf16, #tpu.memory_space<vmem>>, vector<1x40x32xbf16>
    %62 = vector.shape_cast %61 : vector<1x40x32xbf16> to vector<40x32xbf16>
    %c0_64 = arith.constant 0 : index
    %c0_65 = arith.constant 0 : index
    %c0_66 = arith.constant 0 : index
    %63 = vector.load %arg4[%c0_64, %c0_65, %c0_66] : memref<1x40x128xf32, #tpu.memory_space<vmem>>, vector<1x40x128xf32>
    %64 = vector.shape_cast %63 : vector<1x40x128xf32> to vector<40x128xf32>
    %c5 = arith.constant 5 : index
    %c0_67 = arith.constant 0 : index
    %c0_68 = arith.constant 0 : index
    %65 = vector.load %arg2[%c5, %c0_67, %c0_68] : memref<9x32x128xbf16, #tpu.memory_space<vmem>>, vector<1x32x128xbf16>
    %66 = vector.shape_cast %65 : vector<1x32x128xbf16> to vector<32x128xbf16>
    %cst_69 = arith.constant dense<0.000000e+00> : vector<40x128xf32>
    %67 = tpu.matmul %62, %66, %cst_69 {dimension_numbers = #tpu.dot_dimension_numbers<[1], [0], [0], [1], [0, 0, 1, 1], [], []>} : vector<40x32xbf16>, vector<32x128xbf16>, vector<40x128xf32> -> vector<40x128xf32>
    %68 = arith.addf %64, %67 : vector<40x128xf32>
    %c0_70 = arith.constant 0 : index
    %c0_71 = arith.constant 0 : index
    %c0_72 = arith.constant 0 : index
    %69 = vector.load %arg4[%c0_70, %c0_71, %c0_72] : memref<1x40x128xf32, #tpu.memory_space<vmem>>, vector<1x40x128xf32>
    %70 = vector.shape_cast %69 : vector<1x40x128xf32> to vector<40x128xf32>
    %71 = vector.shape_cast %68 : vector<40x128xf32> to vector<1x40x128xf32>
    tpu.vector_store %arg4[%c0_70, %c0_71, %c0_72], %71 {strides = array<i32>} : memref<1x40x128xf32, #tpu.memory_space<vmem>>, vector<1x40x128xf32>,
    %c0_73 = arith.constant 0 : index
    %c20 = arith.constant 20 : index
    %c0_74 = arith.constant 0 : index
    %72 = vector.load %arg1[%c0_73, %c20, %c0_74] : memref<1x70x32xbf16, #tpu.memory_space<vmem>>, vector<1x40x32xbf16>
    %73 = vector.shape_cast %72 : vector<1x40x32xbf16> to vector<40x32xbf16>
    %c0_75 = arith.constant 0 : index
    %c0_76 = arith.constant 0 : index
    %c0_77 = arith.constant 0 : index
    %74 = vector.load %arg4[%c0_75, %c0_76, %c0_77] : memref<1x40x128xf32, #tpu.memory_space<vmem>>, vector<1x40x128xf32>
    %75 = vector.shape_cast %74 : vector<1x40x128xf32> to vector<40x128xf32>
    %c6 = arith.constant 6 : index
    %c0_78 = arith.constant 0 : index
    %c0_79 = arith.constant 0 : index
    %76 = vector.load %arg2[%c6, %c0_78, %c0_79] : memref<9x32x128xbf16, #tpu.memory_space<vmem>>, vector<1x32x128xbf16>
    %77 = vector.shape_cast %76 : vector<1x32x128xbf16> to vector<32x128xbf16>
    %cst_80 = arith.constant dense<0.000000e+00> : vector<40x128xf32>
    %78 = tpu.matmul %73, %77, %cst_80 {dimension_numbers = #tpu.dot_dimension_numbers<[1], [0], [0], [1], [0, 0, 1, 1], [], []>} : vector<40x32xbf16>, vector<32x128xbf16>, vector<40x128xf32> -> vector<40x128xf32>
    %79 = arith.addf %75, %78 : vector<40x128xf32>
    %c0_81 = arith.constant 0 : index
    %c0_82 = arith.constant 0 : index
    %c0_83 = arith.constant 0 : index
    %80 = vector.load %arg4[%c0_81, %c0_82, %c0_83] : memref<1x40x128xf32, #tpu.memory_space<vmem>>, vector<1x40x128xf32>
    %81 = vector.shape_cast %80 : vector<1x40x128xf32> to vector<40x128xf32>
    %82 = vector.shape_cast %79 : vector<40x128xf32> to vector<1x40x128xf32>
    tpu.vector_store %arg4[%c0_81, %c0_82, %c0_83], %82 {strides = array<i32>} : memref<1x40x128xf32, #tpu.memory_space<vmem>>, vector<1x40x128xf32>,
    %c0_84 = arith.constant 0 : index
    %c21 = arith.constant 21 : index
    %c0_85 = arith.constant 0 : index
    %83 = vector.load %arg1[%c0_84, %c21, %c0_85] : memref<1x70x32xbf16, #tpu.memory_space<vmem>>, vector<1x40x32xbf16>
    %84 = vector.shape_cast %83 : vector<1x40x32xbf16> to vector<40x32xbf16>
    %c0_86 = arith.constant 0 : index
    %c0_87 = arith.constant 0 : index
    %c0_88 = arith.constant 0 : index
    %85 = vector.load %arg4[%c0_86, %c0_87, %c0_88] : memref<1x40x128xf32, #tpu.memory_space<vmem>>, vector<1x40x128xf32>
    %86 = vector.shape_cast %85 : vector<1x40x128xf32> to vector<40x128xf32>
    %c7 = arith.constant 7 : index
    %c0_89 = arith.constant 0 : index
    %c0_90 = arith.constant 0 : index
    %87 = vector.load %arg2[%c7, %c0_89, %c0_90] : memref<9x32x128xbf16, #tpu.memory_space<vmem>>, vector<1x32x128xbf16>
    %88 = vector.shape_cast %87 : vector<1x32x128xbf16> to vector<32x128xbf16>
    %cst_91 = arith.constant dense<0.000000e+00> : vector<40x128xf32>
    %89 = tpu.matmul %84, %88, %cst_91 {dimension_numbers = #tpu.dot_dimension_numbers<[1], [0], [0], [1], [0, 0, 1, 1], [], []>} : vector<40x32xbf16>, vector<32x128xbf16>, vector<40x128xf32> -> vector<40x128xf32>
    %90 = arith.addf %86, %89 : vector<40x128xf32>
    %c0_92 = arith.constant 0 : index
    %c0_93 = arith.constant 0 : index
    %c0_94 = arith.constant 0 : index
    %91 = vector.load %arg4[%c0_92, %c0_93, %c0_94] : memref<1x40x128xf32, #tpu.memory_space<vmem>>, vector<1x40x128xf32>
    %92 = vector.shape_cast %91 : vector<1x40x128xf32> to vector<40x128xf32>
    %93 = vector.shape_cast %90 : vector<40x128xf32> to vector<1x40x128xf32>
    tpu.vector_store %arg4[%c0_92, %c0_93, %c0_94], %93 {strides = array<i32>} : memref<1x40x128xf32, #tpu.memory_space<vmem>>, vector<1x40x128xf32>,
    %c0_95 = arith.constant 0 : index
    %c22 = arith.constant 22 : index
    %c0_96 = arith.constant 0 : index
    %94 = vector.load %arg1[%c0_95, %c22, %c0_96] : memref<1x70x32xbf16, #tpu.memory_space<vmem>>, vector<1x40x32xbf16>
    %95 = vector.shape_cast %94 : vector<1x40x32xbf16> to vector<40x32xbf16>
    %c0_97 = arith.constant 0 : index
    %c0_98 = arith.constant 0 : index
    %c0_99 = arith.constant 0 : index
    %96 = vector.load %arg4[%c0_97, %c0_98, %c0_99] : memref<1x40x128xf32, #tpu.memory_space<vmem>>, vector<1x40x128xf32>
    %97 = vector.shape_cast %96 : vector<1x40x128xf32> to vector<40x128xf32>
    %c8 = arith.constant 8 : index
    %c0_100 = arith.constant 0 : index
    %c0_101 = arith.constant 0 : index
    %98 = vector.load %arg2[%c8, %c0_100, %c0_101] : memref<9x32x128xbf16, #tpu.memory_space<vmem>>, vector<1x32x128xbf16>
    %99 = vector.shape_cast %98 : vector<1x32x128xbf16> to vector<32x128xbf16>
    %cst_102 = arith.constant dense<0.000000e+00> : vector<40x128xf32>
    %100 = tpu.matmul %95, %99, %cst_102 {dimension_numbers = #tpu.dot_dimension_numbers<[1], [0], [0], [1], [0, 0, 1, 1], [], []>} : vector<40x32xbf16>, vector<32x128xbf16>, vector<40x128xf32> -> vector<40x128xf32>
    %101 = arith.addf %97, %100 : vector<40x128xf32>
    %c0_103 = arith.constant 0 : index
    %c0_104 = arith.constant 0 : index
    %c0_105 = arith.constant 0 : index
    %102 = vector.load %arg4[%c0_103, %c0_104, %c0_105] : memref<1x40x128xf32, #tpu.memory_space<vmem>>, vector<1x40x128xf32>
    %103 = vector.shape_cast %102 : vector<1x40x128xf32> to vector<40x128xf32>
    %104 = vector.shape_cast %101 : vector<40x128xf32> to vector<1x40x128xf32>
    tpu.vector_store %arg4[%c0_103, %c0_104, %c0_105], %104 {strides = array<i32>} : memref<1x40x128xf32, #tpu.memory_space<vmem>>, vector<1x40x128xf32>,
    return
  }
  func.func @transform_0(%arg0: i32) -> (i32, i32, i32) {
    %c0_i32 = arith.constant 0 : i32
    %c0_i32_0 = arith.constant 0 : i32
    %c0_i32_1 = arith.constant 0 : i32
    return %arg0, %c0_i32, %c0_i32_0 : i32, i32, i32
  }
  func.func @transform_1(%arg0: i32) -> (i32, i32, i32) {
    %c0_i32 = arith.constant 0 : i32
    %c0_i32_0 = arith.constant 0 : i32
    %c0_i32_1 = arith.constant 0 : i32
    %c0_i32_2 = arith.constant 0 : i32
    return %c0_i32, %c0_i32_0, %c0_i32_1 : i32, i32, i32
  }
  func.func @transform_2(%arg0: i32) -> (i32, i32) {
    %c0_i32 = arith.constant 0 : i32
    %c0_i32_0 = arith.constant 0 : i32
    %c0_i32_1 = arith.constant 0 : i32
    return %c0_i32, %c0_i32_0 : i32, i32
  }
  func.func @transform_3(%arg0: i32) -> (i32, i32, i32) {
    %c0_i32 = arith.constant 0 : i32
    %c0_i32_0 = arith.constant 0 : i32
    %c0_i32_1 = arith.constant 0 : i32
    return %arg0, %c0_i32, %c0_i32_0 : i32, i32, i32
  }
}

module attributes {stable_mosaic.version = 11 : i64} {
  func.func @_attention_kernel(%arg0: i32, %arg1: i32, %arg2: memref<1x8x128xbf16, #tpu.memory_space<vmem>>, %arg3: memref<1x32x128xf32, #tpu.memory_space<vmem>>, %arg4: memref<1x128xf32, #tpu.memory_space<vmem>>, %arg5: memref<1x32x32xbf16, #tpu.memory_space<vmem>>, %arg6: memref<1x8x32xbf16, #tpu.memory_space<vmem>>) attributes {dimension_semantics = [#tpu.dimension_semantics<parallel>, #tpu.dimension_semantics<parallel>], iteration_bounds = array<i64: 2, 1>, scalar_prefetch = 0 : i64, scratch_operands = 0 : i64, tpu.core_type = #tpu.core_type<tc>, window_params = [{transform_indices = @transform_0, window_bounds = array<i64: 1, 8, 128>}, {transform_indices = @transform_1, window_bounds = array<i64: 1, 32, 128>}, {pipeline_mode = #tpu.pipeline_mode<synchronous>, transform_indices = @transform_2, window_bounds = array<i64: 1, 128>}, {transform_indices = @transform_3, window_bounds = array<i64: 1, 32, 32>}, {transform_indices = @transform_4, window_bounds = array<i64: 1, 8, 32>}]} {
    %c0 = arith.constant 0 : index
    %c0_0 = arith.constant 0 : index
    %c0_1 = arith.constant 0 : index
    %0 = vector.load %arg2[%c0, %c0_0, %c0_1] : memref<1x8x128xbf16, #tpu.memory_space<vmem>>, vector<1x8x128xbf16>
    %1 = vector.shape_cast %0 : vector<1x8x128xbf16> to vector<8x128xbf16>
    %c0_2 = arith.constant 0 : index
    %c0_3 = arith.constant 0 : index
    %c0_4 = arith.constant 0 : index
    %2 = vector.load %arg3[%c0_2, %c0_3, %c0_4] : memref<1x32x128xf32, #tpu.memory_space<vmem>>, vector<1x32x128xf32>
    %3 = vector.shape_cast %2 : vector<1x32x128xf32> to vector<32x128xf32>
    %4 = arith.truncf %3 : vector<32x128xf32> to vector<32x128xbf16>
    %5 = vector.shape_cast %1 : vector<8x128xbf16> to vector<8x1x128xbf16>
    %6 = vector.shape_cast %4 : vector<32x128xbf16> to vector<1x32x128xbf16>
    %7 = vector.broadcast %5 : vector<8x1x128xbf16> to vector<8x32x128xbf16>
    %8 = vector.broadcast %6 : vector<1x32x128xbf16> to vector<8x32x128xbf16>
    %9 = arith.addf %7, %8 : vector<8x32x128xbf16>
    %10 = math.tanh %9 : vector<8x32x128xbf16>
    %c0_5 = arith.constant 0 : index
    %c0_6 = arith.constant 0 : index
    %11 = vector.load %arg4[%c0_5, %c0_6] : memref<1x128xf32, #tpu.memory_space<vmem>>, vector<1x128xf32>
    %12 = arith.extf %10 : vector<8x32x128xbf16> to vector<8x32x128xf32>
    %13 = vector.shape_cast %11 : vector<1x128xf32> to vector<1x1x128xf32>
    %14 = vector.broadcast %13 : vector<1x1x128xf32> to vector<8x32x128xf32>
    %15 = arith.mulf %12, %14 : vector<8x32x128xf32>
    %cst = arith.constant dense<0.000000e+00> : vector<8x32xf32>
    %16 = vector.multi_reduction <add>, %15, %cst [2] : vector<8x32x128xf32> to vector<8x32xf32>
    %cst_7 = arith.constant dense<0xFF800000> : vector<8xf32>
    %17 = vector.multi_reduction <maximumf>, %16, %cst_7 [1] : vector<8x32xf32> to vector<8xf32>
    %18 = vector.shape_cast %17 : vector<8xf32> to vector<8x1xf32>
    %19 = vector.broadcast %18 : vector<8x1xf32> to vector<8x32xf32>
    %20 = arith.subf %16, %19 : vector<8x32xf32>
    %21 = math.exp %20 : vector<8x32xf32>
    %cst_8 = arith.constant dense<0.000000e+00> : vector<8xf32>
    %22 = vector.multi_reduction <add>, %21, %cst_8 [1] : vector<8x32xf32> to vector<8xf32>
    %23 = vector.shape_cast %22 : vector<8xf32> to vector<8x1xf32>
    %24 = tpu.reciprocal %23 {approx = true} : vector<8x1xf32> -> vector<8x1xf32>
    %25 = vector.broadcast %24 : vector<8x1xf32> to vector<8x32xf32>
    %26 = arith.mulf %21, %25 : vector<8x32xf32>
    %27 = arith.truncf %26 : vector<8x32xf32> to vector<8x32xbf16>
    %c0_9 = arith.constant 0 : index
    %c0_10 = arith.constant 0 : index
    %c0_11 = arith.constant 0 : index
    %28 = vector.load %arg5[%c0_9, %c0_10, %c0_11] : memref<1x32x32xbf16, #tpu.memory_space<vmem>>, vector<1x32x32xbf16>
    %29 = vector.shape_cast %28 : vector<1x32x32xbf16> to vector<32x32xbf16>
    %cst_12 = arith.constant dense<0.000000e+00> : vector<8x32xf32>
    %30 = tpu.matmul %27, %29, %cst_12 {dimension_numbers = #tpu.dot_dimension_numbers<[1], [1], [0], [0], [0, 0, 1, 0], [], []>} : vector<8x32xbf16>, vector<32x32xbf16>, vector<8x32xf32> -> vector<8x32xf32>
    %31 = arith.truncf %30 : vector<8x32xf32> to vector<8x32xbf16>
    %c0_13 = arith.constant 0 : index
    %c0_14 = arith.constant 0 : index
    %c0_15 = arith.constant 0 : index
    %32 = vector.load %arg6[%c0_13, %c0_14, %c0_15] : memref<1x8x32xbf16, #tpu.memory_space<vmem>>, vector<1x8x32xbf16>
    %33 = vector.shape_cast %32 : vector<1x8x32xbf16> to vector<8x32xbf16>
    %34 = vector.shape_cast %31 : vector<8x32xbf16> to vector<1x8x32xbf16>
    tpu.vector_store %arg6[%c0_13, %c0_14, %c0_15], %34 {strides = array<i32>} : memref<1x8x32xbf16, #tpu.memory_space<vmem>>, vector<1x8x32xbf16>,
    return
  }
  func.func @transform_0(%arg0: i32, %arg1: i32) -> (i32, i32, i32) {
    %c0_i32 = arith.constant 0 : i32
    %c0_i32_0 = arith.constant 0 : i32
    return %arg0, %arg1, %c0_i32 : i32, i32, i32
  }
  func.func @transform_1(%arg0: i32, %arg1: i32) -> (i32, i32, i32) {
    %c0_i32 = arith.constant 0 : i32
    %c0_i32_0 = arith.constant 0 : i32
    %c0_i32_1 = arith.constant 0 : i32
    return %arg0, %c0_i32, %c0_i32_0 : i32, i32, i32
  }
  func.func @transform_2(%arg0: i32, %arg1: i32) -> (i32, i32) {
    %c0_i32 = arith.constant 0 : i32
    %c0_i32_0 = arith.constant 0 : i32
    %c0_i32_1 = arith.constant 0 : i32
    return %c0_i32, %c0_i32_0 : i32, i32
  }
  func.func @transform_3(%arg0: i32, %arg1: i32) -> (i32, i32, i32) {
    %c0_i32 = arith.constant 0 : i32
    %c0_i32_0 = arith.constant 0 : i32
    %c0_i32_1 = arith.constant 0 : i32
    return %arg0, %c0_i32, %c0_i32_0 : i32, i32, i32
  }
  func.func @transform_4(%arg0: i32, %arg1: i32) -> (i32, i32, i32) {
    %c0_i32 = arith.constant 0 : i32
    %c0_i32_0 = arith.constant 0 : i32
    return %arg0, %arg1, %c0_i32 : i32, i32, i32
  }
}

module attributes {stable_mosaic.version = 11 : i64} {
  func.func @_pred_kernel(%arg0: i32, %arg1: memref<1x7x32xbf16, #tpu.memory_space<vmem>>, %arg2: memref<1x7x32xbf16, #tpu.memory_space<vmem>>, %arg3: memref<1x1x32xbf16, #tpu.memory_space<vmem>>, %arg4: memref<32x128xbf16, #tpu.memory_space<vmem>>, %arg5: memref<32x128xbf16, #tpu.memory_space<vmem>>, %arg6: memref<32x128xbf16, #tpu.memory_space<vmem>>, %arg7: memref<1x128xf32, #tpu.memory_space<vmem>>, %arg8: memref<1x7x128xf32, #tpu.memory_space<vmem>>) attributes {dimension_semantics = [#tpu.dimension_semantics<parallel>], iteration_bounds = array<i64: 2>, scalar_prefetch = 0 : i64, scratch_operands = 0 : i64, tpu.core_type = #tpu.core_type<tc>, window_params = [{transform_indices = @transform_0, window_bounds = array<i64: 1, 7, 32>}, {transform_indices = @transform_1, window_bounds = array<i64: 1, 7, 32>}, {transform_indices = @transform_2, window_bounds = array<i64: 1, 1, 32>}, {pipeline_mode = #tpu.pipeline_mode<synchronous>, transform_indices = @transform_3, window_bounds = array<i64: 32, 128>}, {pipeline_mode = #tpu.pipeline_mode<synchronous>, transform_indices = @transform_4, window_bounds = array<i64: 32, 128>}, {pipeline_mode = #tpu.pipeline_mode<synchronous>, transform_indices = @transform_5, window_bounds = array<i64: 32, 128>}, {pipeline_mode = #tpu.pipeline_mode<synchronous>, transform_indices = @transform_6, window_bounds = array<i64: 1, 128>}, {transform_indices = @transform_7, window_bounds = array<i64: 1, 7, 128>}]} {
    %c0 = arith.constant 0 : index
    %c0_0 = arith.constant 0 : index
    %c0_1 = arith.constant 0 : index
    %0 = vector.load %arg3[%c0, %c0_0, %c0_1] : memref<1x1x32xbf16, #tpu.memory_space<vmem>>, vector<1x1x32xbf16>
    %1 = vector.shape_cast %0 : vector<1x1x32xbf16> to vector<1x32xbf16>
    %c0_2 = arith.constant 0 : index
    %c0_3 = arith.constant 0 : index
    %2 = vector.load %arg6[%c0_2, %c0_3] : memref<32x128xbf16, #tpu.memory_space<vmem>>, vector<32x128xbf16>
    %cst = arith.constant dense<0.000000e+00> : vector<1x128xf32>
    %3 = tpu.matmul %1, %2, %cst {dimension_numbers = #tpu.dot_dimension_numbers<[1], [0], [0], [1], [0, 0, 1, 1], [], []>} : vector<1x32xbf16>, vector<32x128xbf16>, vector<1x128xf32> -> vector<1x128xf32>
    %c0_4 = arith.constant 0 : index
    %c0_5 = arith.constant 0 : index
    %4 = vector.load %arg7[%c0_4, %c0_5] : memref<1x128xf32, #tpu.memory_space<vmem>>, vector<1x128xf32>
    %5 = arith.addf %3, %4 : vector<1x128xf32>
    %c0_6 = arith.constant 0 : index
    %c0_7 = arith.constant 0 : index
    %c0_8 = arith.constant 0 : index
    %6 = vector.load %arg1[%c0_6, %c0_7, %c0_8] : memref<1x7x32xbf16, #tpu.memory_space<vmem>>, vector<1x7x32xbf16>
    %7 = vector.shape_cast %6 : vector<1x7x32xbf16> to vector<7x32xbf16>
    %c0_9 = arith.constant 0 : index
    %c0_10 = arith.constant 0 : index
    %8 = vector.load %arg4[%c0_9, %c0_10] : memref<32x128xbf16, #tpu.memory_space<vmem>>, vector<32x128xbf16>
    %cst_11 = arith.constant dense<0.000000e+00> : vector<7x128xf32>
    %9 = tpu.matmul %7, %8, %cst_11 {dimension_numbers = #tpu.dot_dimension_numbers<[1], [0], [0], [1], [0, 0, 1, 1], [], []>} : vector<7x32xbf16>, vector<32x128xbf16>, vector<7x128xf32> -> vector<7x128xf32>
    %c0_12 = arith.constant 0 : index
    %c0_13 = arith.constant 0 : index
    %c0_14 = arith.constant 0 : index
    %10 = vector.load %arg2[%c0_12, %c0_13, %c0_14] : memref<1x7x32xbf16, #tpu.memory_space<vmem>>, vector<1x7x32xbf16>
    %11 = vector.shape_cast %10 : vector<1x7x32xbf16> to vector<7x32xbf16>
    %c0_15 = arith.constant 0 : index
    %c0_16 = arith.constant 0 : index
    %12 = vector.load %arg5[%c0_15, %c0_16] : memref<32x128xbf16, #tpu.memory_space<vmem>>, vector<32x128xbf16>
    %cst_17 = arith.constant dense<0.000000e+00> : vector<7x128xf32>
    %13 = tpu.matmul %11, %12, %cst_17 {dimension_numbers = #tpu.dot_dimension_numbers<[1], [0], [0], [1], [0, 0, 1, 1], [], []>} : vector<7x32xbf16>, vector<32x128xbf16>, vector<7x128xf32> -> vector<7x128xf32>
    %14 = arith.addf %9, %13 : vector<7x128xf32>
    %15 = vector.broadcast %5 : vector<1x128xf32> to vector<7x128xf32>
    %16 = arith.addf %14, %15 : vector<7x128xf32>
    %c0_18 = arith.constant 0 : index
    %c0_19 = arith.constant 0 : index
    %c0_20 = arith.constant 0 : index
    %17 = vector.load %arg8[%c0_18, %c0_19, %c0_20] : memref<1x7x128xf32, #tpu.memory_space<vmem>>, vector<1x7x128xf32>
    %18 = vector.shape_cast %17 : vector<1x7x128xf32> to vector<7x128xf32>
    %19 = vector.shape_cast %16 : vector<7x128xf32> to vector<1x7x128xf32>
    tpu.vector_store %arg8[%c0_18, %c0_19, %c0_20], %19 {strides = array<i32>} : memref<1x7x128xf32, #tpu.memory_space<vmem>>, vector<1x7x128xf32>,
    return
  }
  func.func @transform_0(%arg0: i32) -> (i32, i32, i32) {
    %c0_i32 = arith.constant 0 : i32
    %c0_i32_0 = arith.constant 0 : i32
    %c0_i32_1 = arith.constant 0 : i32
    return %arg0, %c0_i32, %c0_i32_0 : i32, i32, i32
  }
  func.func @transform_1(%arg0: i32) -> (i32, i32, i32) {
    %c0_i32 = arith.constant 0 : i32
    %c0_i32_0 = arith.constant 0 : i32
    %c0_i32_1 = arith.constant 0 : i32
    return %arg0, %c0_i32, %c0_i32_0 : i32, i32, i32
  }
  func.func @transform_2(%arg0: i32) -> (i32, i32, i32) {
    %c0_i32 = arith.constant 0 : i32
    %c0_i32_0 = arith.constant 0 : i32
    %c0_i32_1 = arith.constant 0 : i32
    return %arg0, %c0_i32, %c0_i32_0 : i32, i32, i32
  }
  func.func @transform_3(%arg0: i32) -> (i32, i32) {
    %c0_i32 = arith.constant 0 : i32
    %c0_i32_0 = arith.constant 0 : i32
    %c0_i32_1 = arith.constant 0 : i32
    return %c0_i32, %c0_i32_0 : i32, i32
  }
  func.func @transform_4(%arg0: i32) -> (i32, i32) {
    %c0_i32 = arith.constant 0 : i32
    %c0_i32_0 = arith.constant 0 : i32
    %c0_i32_1 = arith.constant 0 : i32
    return %c0_i32, %c0_i32_0 : i32, i32
  }
  func.func @transform_5(%arg0: i32) -> (i32, i32) {
    %c0_i32 = arith.constant 0 : i32
    %c0_i32_0 = arith.constant 0 : i32
    %c0_i32_1 = arith.constant 0 : i32
    return %c0_i32, %c0_i32_0 : i32, i32
  }
  func.func @transform_6(%arg0: i32) -> (i32, i32) {
    %c0_i32 = arith.constant 0 : i32
    %c0_i32_0 = arith.constant 0 : i32
    %c0_i32_1 = arith.constant 0 : i32
    return %c0_i32, %c0_i32_0 : i32, i32
  }
  func.func @transform_7(%arg0: i32) -> (i32, i32, i32) {
    %c0_i32 = arith.constant 0 : i32
    %c0_i32_0 = arith.constant 0 : i32
    %c0_i32_1 = arith.constant 0 : i32
    return %arg0, %c0_i32, %c0_i32_0 : i32, i32, i32
  }
}

</mosaic_0001>

<llo_original>
// kernel: sar_head_forward.17
$region0: #{sar_head_forward.17}
  #allocation0 [shape = 'u32[]', space=smem, size = 0x4, offset = 0x4, fixed_abs, tag = 'smem constant byte address 0x4 - core index']
  #allocation1 [shape = 'u32[144,128]{1,0:T(1,128)}', space=vmem, size = 0x12000, scoped, tag = 'internal scratch']
  %s0 = inlined_call_operand.vmem [shape: bf16[2,32], index: 0, kind: input, shape index: {}]
  %s1 = inlined_call_operand.vmem [shape: bf16[32,128], index: 1, kind: input, shape index: {}]
  %s2 = inlined_call_operand.vmem [shape: f32[1,128], index: 2, kind: input, shape index: {}]
  %s3 = inlined_call_operand.vmem [shape: bf16[2,128], index: 3, kind: output, shape index: {}]
  %s4 = sld [smem:[#allocation0]]
  $region22: #{sar_head_forward.17} parent=0
    _
  %s6 = ssub.s32 1, %s4
  %s7 = scalar_select 0, %s6, %s4
  // Predicated region
  $region2: #{sar_head_forward.17} parent=0 // pred_check
    _
  $region3: #{sar_head_forward.17} parent=0 // pred_check_branch
    %9 = sbr.rel (0) target = $region5
  $region4: #{sar_head_forward.17} parent=0 // pred_region
    _
  $region5: #{sar_head_forward.17} parent=0 // pred_fallthru
    _
  // Predicated region
  $region6: #{sar_head_forward.17} parent=0 // pred_check
    _
  $region7: #{sar_head_forward.17} parent=0 // pred_check_branch
    %11 = sbr.rel (0) target = $region9
  $region8: #{sar_head_forward.17} parent=0 // pred_region
    _
  $region9: #{sar_head_forward.17} parent=0 // pred_fallthru
    _
  // Predicated region
  $region10: #{sar_head_forward.17} parent=0 // pred_check
    _
  $region11: #{sar_head_forward.17} parent=0 // pred_check_branch
    %13 = sbr.rel (0) target = $region13
  $region12: #{sar_head_forward.17} parent=0 // pred_region
    _
  $region13: #{sar_head_forward.17} parent=0 // pred_fallthru
    _
  %v15 = vld [vmem:[%s0] sm:$0x1]
  %v16 = vld [vmem:[%s1] sm:$0xf]
  %v17 = vld [vmem:[%s1 + $0x4] sm:$0xf]
  %v18 = vld [vmem:[%s1 + $0x8] sm:$0xf]
  %v19 = vld [vmem:[%s1 + $0xc] sm:$0xf]
  %v20 = vld [vmem:[%s2] sm:$0x1]
  %v22 = vlaneseq
  %v23 = vshrl.u32 %v22, 7
  %v24 = vsub.s32 0, %v23
  %v25 = vrot.slane %v20, %v24
  %v31 = vunpack.c.l.b16 %v16
  %v32 = vunpack.c.l.b16 %v17
  %v33 = vunpack.c.l.b16 %v18
  %v34 = vunpack.c.l.b16 %v19
  %v35 = vpack.c.b16 %v32, %v31
  %v36 = vpack.c.b16 %v34, %v33
  %vm39 = vcmask 261120
  %v41 = vsel %vm39, %v15, 0
  %43 = vmatprep.subr.bf16.mxu0 0
  %44 = vmatpush1.bf16.msra.mxu0 %v35
  %45 = vmatprep.subr.bf16.mxu0 0
  %46 = vmatpush1.bf16.msra.mxu0 %v36
  %47 = vmatprep.subr.bf16.mxu0 0
  %48 = vmatpush1.bf16.msra.mxu0 0
  %49 = vmatprep.subr.bf16.mxu0 0
  %50 = vmatpush1.bf16.msra.mxu0 0
  %51 = vmatprep.subr.bf16.mxu0 0
  %52 = vmatpush1.bf16.msra.mxu0 0
  %53 = vmatprep.subr.bf16.mxu0 0
  %54 = vmatpush1.bf16.msra.mxu0 0
  %55 = vmatprep.subr.bf16.mxu0 0
  %56 = vmatpush1.bf16.msra.mxu0 0
  %57 = vmatprep.subr.bf16.mxu0 0
  %58 = vmatpush1.bf16.msra.mxu0 0
  %59 = vmatprep.subr.bf16.mxu0 0
  %60 = vmatpush1.bf16.msra.mxu0 0
  %61 = vmatprep.subr.bf16.mxu0 0
  %62 = vmatpush1.bf16.msra.mxu0 0
  %63 = vmatprep.subr.bf16.mxu0 0
  %64 = vmatpush1.bf16.msra.mxu0 0
  %65 = vmatprep.subr.bf16.mxu0 0
  %66 = vmatpush1.bf16.msra.mxu0 0
  %67 = vmatprep.subr.bf16.mxu0 0
  %68 = vmatpush1.bf16.msra.mxu0 0
  %69 = vmatprep.subr.bf16.mxu0 0
  %70 = vmatpush1.bf16.msra.mxu0 0
  %71 = vmatprep.subr.bf16.mxu0 0
  %72 = vmatpush1.bf16.msra.mxu0 0
  %73 = vmatprep.subr.bf16.mxu0 0
  %74 = vmatpush1.bf16.msra.mxu0 0
  %75 = vmatprep.mubr.bf16.mxu0 0
  %76 = vmatmul.mubr.bf16.gmra.mrb[0].mxu0 %v41
  %v77 = vpop.f32.mrb[0].mxu0
  %v78 = vadd.f32 %v25, %v77
  %v79 = vpop.f32.mrb[0].mxu0
  %v80 = vpop.f32.mrb[0].mxu0
  %v81 = vpop.f32.mrb[0].mxu0
  %82 = vdwg.mxu0
  %v83 = vpack.c.bf16 %v78, %v78
  %84 = vst [vmem:[%s3] sm:$0x1] %v83
  // Predicated region
  $region14: #{sar_head_forward.17} parent=0 // pred_check
    _
  $region15: #{sar_head_forward.17} parent=0 // pred_check_branch
    %86 = sbr.rel (0) target = $region17
  $region16: #{sar_head_forward.17} parent=0 // pred_region
    _
  $region17: #{sar_head_forward.17} parent=0 // pred_fallthru
    _
  // Predicated region
  $region18: #{sar_head_forward.17} parent=0 // pred_check
    _
  $region19: #{sar_head_forward.17} parent=0 // pred_check_branch
    %88 = sbr.rel (0) target = $region21
  $region20: #{sar_head_forward.17} parent=0 // pred_region
    _
  $region21: #{sar_head_forward.17} parent=0 // pred_fallthru
    _

// kernel: sar_head_forward.13
$region0: #{sar_head_forward.13}
  #allocation0 [shape = 'u32[]', space=smem, size = 0x4, offset = 0x4, fixed_abs, tag = 'smem constant byte address 0x4 - core index']
  #allocation1 [shape = 'u32[144,128]{1,0:T(1,128)}', space=vmem, size = 0x12000, scoped, tag = 'internal scratch']
  %s0 = inlined_call_operand.vmem [shape: bf16[16,32], index: 0, kind: input, shape index: {}]
  %s1 = inlined_call_operand.vmem [shape: bf16[32,128], index: 1, kind: input, shape index: {}]
  %s2 = inlined_call_operand.vmem [shape: f32[1,128], index: 2, kind: input, shape index: {}]
  %s3 = inlined_call_operand.vmem [shape: bf16[16,128], index: 3, kind: output, shape index: {}]
  %s4 = sld [smem:[#allocation0]]
  $region22: #{sar_head_forward.13} parent=0
    _
  %s6 = ssub.s32 1, %s4
  %s7 = scalar_select 0, %s6, %s4
  // Predicated region
  $region2: #{sar_head_forward.13} parent=0 // pred_check
    _
  $region3: #{sar_head_forward.13} parent=0 // pred_check_branch
    %9 = sbr.rel (0) target = $region5
  $region4: #{sar_head_forward.13} parent=0 // pred_region
    _
  $region5: #{sar_head_forward.13} parent=0 // pred_fallthru
    _
  // Predicated region
  $region6: #{sar_head_forward.13} parent=0 // pred_check
    _
  $region7: #{sar_head_forward.13} parent=0 // pred_check_branch
    %11 = sbr.rel (0) target = $region9
  $region8: #{sar_head_forward.13} parent=0 // pred_region
    _
  $region9: #{sar_head_forward.13} parent=0 // pred_fallthru
    _
  // Predicated region
  $region10: #{sar_head_forward.13} parent=0 // pred_check
    _
  $region11: #{sar_head_forward.13} parent=0 // pred_check_branch
    %13 = sbr.rel (0) target = $region13
  $region12: #{sar_head_forward.13} parent=0 // pred_region
    _
  $region13: #{sar_head_forward.13} parent=0 // pred_fallthru
    _
  %v15 = vld [vmem:[%s0] sm:$0xf]
  %v16 = vld [vmem:[%s0 + $0x4] sm:$0xf]
  %v17 = vld [vmem:[%s1] sm:$0xf]
  %v18 = vld [vmem:[%s1 + $0x4] sm:$0xf]
  %v19 = vld [vmem:[%s1 + $0x8] sm:$0xf]
  %v20 = vld [vmem:[%s1 + $0xc] sm:$0xf]
  %v21 = vld [vmem:[%s2] sm:$0x1]
  %v23 = vlaneseq
  %v24 = vshrl.u32 %v23, 7
  %v25 = vsub.s32 0, %v24
  %v26 = vrot.slane %v21, %v25
  %v30 = vunpack.c.l.b16 %v15
  %v31 = vunpack.c.l.b16 %v16
  %v32 = vpack.c.b16 %v31, %v30
  %v37 = vunpack.c.l.b16 %v17
  %v38 = vunpack.c.l.b16 %v18
  %v39 = vunpack.c.l.b16 %v19
  %v40 = vunpack.c.l.b16 %v20
  %v41 = vpack.c.b16 %v38, %v37
  %v42 = vpack.c.b16 %v40, %v39
  %vm45 = vcmask 261120
  %v47 = vsel %vm45, %v32, 0
  %49 = vmatprep.subr.bf16.mxu0 0
  %50 = vmatpush1.bf16.msra.mxu0 %v41
  %51 = vmatprep.subr.bf16.mxu0 0
  %52 = vmatpush1.bf16.msra.mxu0 %v42
  %53 = vmatprep.subr.bf16.mxu0 0
  %54 = vmatpush1.bf16.msra.mxu0 0
  %55 = vmatprep.subr.bf16.mxu0 0
  %56 = vmatpush1.bf16.msra.mxu0 0
  %57 = vmatprep.subr.bf16.mxu0 0
  %58 = vmatpush1.bf16.msra.mxu0 0
  %59 = vmatprep.subr.bf16.mxu0 0
  %60 = vmatpush1.bf16.msra.mxu0 0
  %61 = vmatprep.subr.bf16.mxu0 0
  %62 = vmatpush1.bf16.msra.mxu0 0
  %63 = vmatprep.subr.bf16.mxu0 0
  %64 = vmatpush1.bf16.msra.mxu0 0
  %65 = vmatprep.subr.bf16.mxu0 0
  %66 = vmatpush1.bf16.msra.mxu0 0
  %67 = vmatprep.subr.bf16.mxu0 0
  %68 = vmatpush1.bf16.msra.mxu0 0
  %69 = vmatprep.subr.bf16.mxu0 0
  %70 = vmatpush1.bf16.msra.mxu0 0
  %71 = vmatprep.subr.bf16.mxu0 0
  %72 = vmatpush1.bf16.msra.mxu0 0
  %73 = vmatprep.subr.bf16.mxu0 0
  %74 = vmatpush1.bf16.msra.mxu0 0
  %75 = vmatprep.subr.bf16.mxu0 0
  %76 = vmatpush1.bf16.msra.mxu0 0
  %77 = vmatprep.subr.bf16.mxu0 0
  %78 = vmatpush1.bf16.msra.mxu0 0
  %79 = vmatprep.subr.bf16.mxu0 0
  %80 = vmatpush1.bf16.msra.mxu0 0
  %81 = vmatprep.mubr.bf16.mxu0 0
  %82 = vmatmul.mubr.bf16.gmra.mrb[0].mxu0 %v47
  %v83 = vpop.f32.mrb[0].mxu0
  %v84 = vadd.f32 %v26, %v83
  %v85 = vpop.f32.mrb[0].mxu0
  %v86 = vpop.f32.mrb[0].mxu0
  %v87 = vadd.f32 %v26, %v86
  %v88 = vpop.f32.mrb[0].mxu0
  %89 = vdwg.mxu0
  %v90 = vpack.c.bf16 %v87, %v84
  %v92 = vunpack.c.l.b16 %v90
  %v93 = vunpack.c.h.b16 %v90
  %v94 = vpack.c.b16 %v92, %v92
  %v95 = vpack.c.b16 %v93, %v93
  %98 = vst [vmem:[%s3] sm:$0xf] %v94
  %99 = vst [vmem:[%s3 + $0x4] sm:$0xf] %v95
  // Predicated region
  $region14: #{sar_head_forward.13} parent=0 // pred_check
    _
  $region15: #{sar_head_forward.13} parent=0 // pred_check_branch
    %101 = sbr.rel (0) target = $region17
  $region16: #{sar_head_forward.13} parent=0 // pred_region
    _
  $region17: #{sar_head_forward.13} parent=0 // pred_fallthru
    _
  // Predicated region
  $region18: #{sar_head_forward.13} parent=0 // pred_check
    _
  $region19: #{sar_head_forward.13} parent=0 // pred_check_branch
    %103 = sbr.rel (0) target = $region21
  $region20: #{sar_head_forward.13} parent=0 // pred_region
    _
  $region21: #{sar_head_forward.13} parent=0 // pred_fallthru
    _

// kernel: sar_head_forward.14
$region0: #{sar_head_forward.14}
  #allocation0 [shape = 'u32[]', space=smem, size = 0x4, offset = 0x4, fixed_abs, tag = 'smem constant byte address 0x4 - core index']
  #allocation1 [shape = 'u32[144,128]{1,0:T(1,128)}', space=vmem, size = 0x12000, scoped, tag = 'internal scratch']
  #allocation2 [shape = 'f32[2,32]{1,0:T(2,128)}', space=vmem, size = 0x400, scoped, tag = 'scratch operand']
  #allocation3 [shape = 'f32[2,32]{1,0:T(2,128)}', space=vmem, size = 0x400, scoped, tag = 'scratch operand']
  %s0 = inlined_call_operand.vmem [shape: bf16[8,2,128], index: 0, kind: input, shape index: {}]
  %s1 = inlined_call_operand.vmem [shape: bf16[32,128], index: 1, kind: input, shape index: {}]
  %s2 = inlined_call_operand.vmem [shape: bf16[8,2,32], index: 2, kind: output, shape index: {}]
  %s3 = sld [smem:[#allocation0]]
  $region25: #{sar_head_forward.14} parent=0
    _
  %s5 = ssub.s32 1, %s3
  %s6 = scalar_select 0, %s5, %s3
  // Predicated region
  $region2: #{sar_head_forward.14} parent=0 // pred_check
    _
  $region3: #{sar_head_forward.14} parent=0 // pred_check_branch
    %8 = sbr.rel (0) target = $region5
  $region4: #{sar_head_forward.14} parent=0 // pred_region
    _
  $region5: #{sar_head_forward.14} parent=0 // pred_fallthru
    _
  // Predicated region
  $region6: #{sar_head_forward.14} parent=0 // pred_check
    _
  $region7: #{sar_head_forward.14} parent=0 // pred_check_branch
    %10 = sbr.rel (0) target = $region9
  $region8: #{sar_head_forward.14} parent=0 // pred_region
    _
  $region9: #{sar_head_forward.14} parent=0 // pred_fallthru
    _
  %vm12 = vcmask 254976
  %13 = vst.msk [vmem:[#allocation2] sm:$0x3] %vm12, 0.0
  %14 = vst.msk [vmem:[#allocation3] sm:$0x3] %vm12, 0.0
  loop: start=0, step=1, limit=8
  $region10: #{sar_head_forward.14} parent=0 // loop_pre_header
    _
  $region11: #{sar_head_forward.14} parent=0 // loop_header
    %s16 = sphi 0, %s20
    %p17 = scmp.ge.s32.totalorder %s16, 8
  $region12: #{sar_head_forward.14} parent=0 // loop_header_branch
    %19 = sbr.rel (%p17) target = $region16
  $region13: #{sar_head_forward.14} parent=0 // loop_body
    %s21 = scalar_lea.vmem %s0, %s16
    %v22 = vld [vmem:[%s21] sm:$0x1]
    %v23 = vunpack.c.l.bf16 %v22
    %v24 = vld [vmem:[#allocation2] sm:$0x3]
    %v25 = vpack.c.bf16 %v24, %v24
    %v26 = vld [vmem:[%s1] sm:$0xf]
    %v27 = vld [vmem:[%s1 + $0x4] sm:$0xf]
    %v28 = vld [vmem:[%s1 + $0x8] sm:$0xf]
    %v29 = vld [vmem:[%s1 + $0xc] sm:$0xf]
    %v34 = vunpack.c.l.b16 %v26
    %v35 = vunpack.c.l.b16 %v27
    %v36 = vunpack.c.l.b16 %v28
    %v37 = vunpack.c.l.b16 %v29
    %v38 = vpack.c.b16 %v35, %v34
    %v39 = vpack.c.b16 %v37, %v36
    %vm42 = vcmask 261120
    %v44 = vsel %vm42, %v25, 0
    %46 = vmatprep.subr.bf16.mxu0 0
    %47 = vmatpush1.bf16.msra.mxu0 %v38
    %48 = vmatprep.subr.bf16.mxu0 0
    %49 = vmatpush1.bf16.msra.mxu0 %v39
    %50 = vmatprep.subr.bf16.mxu0 0
    %51 = vmatpush1.bf16.msra.mxu0 0
    %52 = vmatprep.subr.bf16.mxu0 0
    %53 = vmatpush1.bf16.msra.mxu0 0
    %54 = vmatprep.subr.bf16.mxu0 0
    %55 = vmatpush1.bf16.msra.mxu0 0
    %56 = vmatprep.subr.bf16.mxu0 0
    %57 = vmatpush1.bf16.msra.mxu0 0
    %58 = vmatprep.subr.bf16.mxu0 0
    %59 = vmatpush1.bf16.msra.mxu0 0
    %60 = vmatprep.subr.bf16.mxu0 0
    %61 = vmatpush1.bf16.msra.mxu0 0
    %62 = vmatprep.subr.bf16.mxu0 0
    %63 = vmatpush1.bf16.msra.mxu0 0
    %64 = vmatprep.subr.bf16.mxu0 0
    %65 = vmatpush1.bf16.msra.mxu0 0
    %66 = vmatprep.subr.bf16.mxu0 0
    %67 = vmatpush1.bf16.msra.mxu0 0
    %68 = vmatprep.subr.bf16.mxu0 0
    %69 = vmatpush1.bf16.msra.mxu0 0
    %70 = vmatprep.subr.bf16.mxu0 0
    %71 = vmatpush1.bf16.msra.mxu0 0
    %72 = vmatprep.subr.bf16.mxu0 0
    %73 = vmatpush1.bf16.msra.mxu0 0
    %74 = vmatprep.subr.bf16.mxu0 0
    %75 = vmatpush1.bf16.msra.mxu0 0
    %76 = vmatprep.subr.bf16.mxu0 0
    %77 = vmatpush1.bf16.msra.mxu0 0
    %78 = vmatprep.mubr.bf16.mxu0 0
    %79 = vmatmul.mubr.bf16.gmra.mrb[0].mxu0 %v44
    %v80 = vpop.f32.mrb[0].mxu0
    %v81 = vadd.f32 0.0, %v80
    %v82 = vpop.f32.mrb[0].mxu0
    %v83 = vpop.f32.mrb[0].mxu0
    %v84 = vpop.f32.mrb[0].mxu0
    %85 = vdwg.mxu0
    %v86 = vadd.f32 %v23, %v81
    %v87 = vxor.u32 %v86, 2147483648
    %v88 = vmul.f32 %v87, 1.442695
    %v89 = vpow.pop %v88
    %v90 = vadd.f32 %v89, 1.0
    %v91 = vrcp.pop %v90
    %v92 = vmul.f32 1.0, %v91
    %v93 = vtanh.pop %v86
    %v94 = vld [vmem:[#allocation3] sm:$0x3]
    %v97 = vunpack.c.l.s4 1983009808
    %v98 = vunpack.c.0.s8 %v97
    %v99 = vlaneseq
    %v100 = vshrl.u32 %v99, 7
    %v101 = vsub.s32 %v98, %v100
    %v102 = vrot.slane %v94, %v101
    %103 = vrot.lane.b32.xlu0 %v102, 32
    %v104 = vpop.permute.xlu0 %103
    %v106 = vmul.f32 %v92, %v104
    %108 = vrot.lane.b32.xlu0 %v93, 64
    %v109 = vpop.permute.xlu0 %108
    %v111 = vmul.f32 %v92, %v109
    %113 = vrot.lane.b32.xlu0 %v111, 32
    %v114 = vpop.permute.xlu0 %113
    %v116 = vadd.f32 %v106, %v114
    %v117 = vtanh.pop %v116
    %119 = vrot.lane.b32.xlu0 %v117, 64
    %v120 = vpop.permute.xlu0 %119
    %v122 = vmul.f32 %v92, %v120
    %v125 = vunpack.c.l.s4 1983009808
    %v126 = vunpack.c.0.s8 %v125
    %v127 = vlaneseq
    %v128 = vshrl.u32 %v127, 7
    %v129 = vsub.s32 %v126, %v128
    %v130 = vrot.slane %v116, %v129
    %131 = vrot.lane.b32.xlu0 %v130, 96
    %v132 = vpop.permute.xlu0 %131
    %134 = vst.msk [vmem:[#allocation3] sm:$0x3] %vm12, %v132
    %v137 = vunpack.c.l.s4 1983009808
    %v138 = vunpack.c.0.s8 %v137
    %v139 = vlaneseq
    %v140 = vshrl.u32 %v139, 7
    %v141 = vsub.s32 %v138, %v140
    %v142 = vrot.slane %v122, %v141
    %143 = vrot.lane.b32.xlu0 %v142, 32
    %v144 = vpop.permute.xlu0 %143
    %146 = vst.msk [vmem:[#allocation2] sm:$0x3] %vm12, %v144
    %v147 = vpack.c.bf16 %v122, %v122
    %v150 = vunpack.c.l.s4 1966171168
    %v151 = vunpack.c.0.s8 %v150
    %v152 = vlaneseq
    %v153 = vshrl.u32 %v152, 7
    %v154 = vsub.s32 %v151, %v153
    %v155 = vrot.slane %v147, %v154
    %v157 = vunpack.c.l.s4 1966171168
    %v158 = vunpack.c.0.s8 %v157
    %v159 = vlaneseq
    %v160 = vshrl.u32 %v159, 7
    %v161 = vsub.s32 %v158, %v160
    %v162 = vrot.slane %v155, %v161
    %163 = vrot.lane.b32.xlu0 %v162, 32
    %v164 = vpop.permute.xlu0 %163
    %s166 = scalar_lea.vmem %s2, %s16
    %vm167 = vcmask 253952
    %168 = vst.msk [vmem:[%s166] sm:$0x1] %vm167, %v164
  $region14: #{sar_head_forward.14} parent=0 // loop_footer
    %s20 = sadd.s32 1, %s16
  $region15: #{sar_head_forward.14} parent=0 // loop_footer_branch
    %15 = sbr.rel target = $region11
  $region16: #{sar_head_forward.14} parent=0 // loop_exit
    _
  // Predicated region
  $region17: #{sar_head_forward.14} parent=0 // pred_check
    _
  $region18: #{sar_head_forward.14} parent=0 // pred_check_branch
    %170 = sbr.rel (0) target = $region20
  $region19: #{sar_head_forward.14} parent=0 // pred_region
    _
  $region20: #{sar_head_forward.14} parent=0 // pred_fallthru
    _
  // Predicated region
  $region21: #{sar_head_forward.14} parent=0 // pred_check
    _
  $region22: #{sar_head_forward.14} parent=0 // pred_check_branch
    %172 = sbr.rel (0) target = $region24
  $region23: #{sar_head_forward.14} parent=0 // pred_region
    _
  $region24: #{sar_head_forward.14} parent=0 // pred_fallthru
    _

// kernel: sar_head_forward.18
$region0: #{sar_head_forward.18}
  #allocation0 [shape = 'u32[]', space=smem, size = 0x4, offset = 0x4, fixed_abs, tag = 'smem constant byte address 0x4 - core index']
  #allocation1 [shape = 'u32[144,128]{1,0:T(1,128)}', space=vmem, size = 0x12000, scoped, tag = 'internal scratch']
  %s0 = inlined_call_operand.vmem [shape: bf16[14,32], index: 0, kind: input, shape index: {}]
  %s1 = inlined_call_operand.vmem [shape: bf16[32,128], index: 1, kind: input, shape index: {}]
  %s2 = inlined_call_operand.vmem [shape: f32[1,128], index: 2, kind: input, shape index: {}]
  %s3 = inlined_call_operand.vmem [shape: bf16[14,128], index: 3, kind: output, shape index: {}]
  %s4 = sld [smem:[#allocation0]]
  $region22: #{sar_head_forward.18} parent=0
    _
  %s6 = ssub.s32 1, %s4
  %s7 = scalar_select 0, %s6, %s4
  // Predicated region
  $region2: #{sar_head_forward.18} parent=0 // pred_check
    _
  $region3: #{sar_head_forward.18} parent=0 // pred_check_branch
    %9 = sbr.rel (0) target = $region5
  $region4: #{sar_head_forward.18} parent=0 // pred_region
    _
  $region5: #{sar_head_forward.18} parent=0 // pred_fallthru
    _
  // Predicated region
  $region6: #{sar_head_forward.18} parent=0 // pred_check
    _
  $region7: #{sar_head_forward.18} parent=0 // pred_check_branch
    %11 = sbr.rel (0) target = $region9
  $region8: #{sar_head_forward.18} parent=0 // pred_region
    _
  $region9: #{sar_head_forward.18} parent=0 // pred_fallthru
    _
  // Predicated region
  $region10: #{sar_head_forward.18} parent=0 // pred_check
    _
  $region11: #{sar_head_forward.18} parent=0 // pred_check_branch
    %13 = sbr.rel (0) target = $region13
  $region12: #{sar_head_forward.18} parent=0 // pred_region
    _
  $region13: #{sar_head_forward.18} parent=0 // pred_fallthru
    _
  %v15 = vld [vmem:[%s0] sm:$0xf]
  %v16 = vld [vmem:[%s0 + $0x4] sm:$0x7]
  %v17 = vld [vmem:[%s1] sm:$0xf]
  %v18 = vld [vmem:[%s1 + $0x4] sm:$0xf]
  %v19 = vld [vmem:[%s1 + $0x8] sm:$0xf]
  %v20 = vld [vmem:[%s1 + $0xc] sm:$0xf]
  %v21 = vld [vmem:[%s2] sm:$0x1]
  %v23 = vlaneseq
  %v24 = vshrl.u32 %v23, 7
  %v25 = vsub.s32 0, %v24
  %v26 = vrot.slane %v21, %v25
  %v30 = vunpack.c.l.b16 %v15
  %v31 = vunpack.c.l.b16 %v16
  %v32 = vpack.c.b16 %v31, %v30
  %v37 = vunpack.c.l.b16 %v17
  %v38 = vunpack.c.l.b16 %v18
  %v39 = vunpack.c.l.b16 %v19
  %v40 = vunpack.c.l.b16 %v20
  %v41 = vpack.c.b16 %v38, %v37
  %v42 = vpack.c.b16 %v40, %v39
  %vm45 = vcmask 261120
  %v47 = vsel %vm45, %v32, 0
  %49 = vmatprep.subr.bf16.mxu0 0
  %50 = vmatpush1.bf16.msra.mxu0 %v41
  %51 = vmatprep.subr.bf16.mxu0 0
  %52 = vmatpush1.bf16.msra.mxu0 %v42
  %53 = vmatprep.subr.bf16.mxu0 0
  %54 = vmatpush1.bf16.msra.mxu0 0
  %55 = vmatprep.subr.bf16.mxu0 0
  %56 = vmatpush1.bf16.msra.mxu0 0
  %57 = vmatprep.subr.bf16.mxu0 0
  %58 = vmatpush1.bf16.msra.mxu0 0
  %59 = vmatprep.subr.bf16.mxu0 0
  %60 = vmatpush1.bf16.msra.mxu0 0
  %61 = vmatprep.subr.bf16.mxu0 0
  %62 = vmatpush1.bf16.msra.mxu0 0
  %63 = vmatprep.subr.bf16.mxu0 0
  %64 = vmatpush1.bf16.msra.mxu0 0
  %65 = vmatprep.subr.bf16.mxu0 0
  %66 = vmatpush1.bf16.msra.mxu0 0
  %67 = vmatprep.subr.bf16.mxu0 0
  %68 = vmatpush1.bf16.msra.mxu0 0
  %69 = vmatprep.subr.bf16.mxu0 0
  %70 = vmatpush1.bf16.msra.mxu0 0
  %71 = vmatprep.subr.bf16.mxu0 0
  %72 = vmatpush1.bf16.msra.mxu0 0
  %73 = vmatprep.subr.bf16.mxu0 0
  %74 = vmatpush1.bf16.msra.mxu0 0
  %75 = vmatprep.subr.bf16.mxu0 0
  %76 = vmatpush1.bf16.msra.mxu0 0
  %77 = vmatprep.subr.bf16.mxu0 0
  %78 = vmatpush1.bf16.msra.mxu0 0
  %79 = vmatprep.subr.bf16.mxu0 0
  %80 = vmatpush1.bf16.msra.mxu0 0
  %81 = vmatprep.mubr.bf16.mxu0 0
  %82 = vmatmul.mubr.bf16.gmra.mrb[0].mxu0 %v47
  %v83 = vpop.f32.mrb[0].mxu0
  %v84 = vadd.f32 %v26, %v83
  %v85 = vpop.f32.mrb[0].mxu0
  %v86 = vpop.f32.mrb[0].mxu0
  %v87 = vadd.f32 %v26, %v86
  %v88 = vpop.f32.mrb[0].mxu0
  %89 = vdwg.mxu0
  %v90 = vpack.c.bf16 %v87, %v84
  %v92 = vunpack.c.l.b16 %v90
  %v93 = vunpack.c.h.b16 %v90
  %v94 = vpack.c.b16 %v92, %v92
  %v95 = vpack.c.b16 %v93, %v93
  %98 = vst [vmem:[%s3] sm:$0xf] %v94
  %99 = vst [vmem:[%s3 + $0x4] sm:$0x7] %v95
  // Predicated region
  $region14: #{sar_head_forward.18} parent=0 // pred_check
    _
  $region15: #{sar_head_forward.18} parent=0 // pred_check_branch
    %101 = sbr.rel (0) target = $region17
  $region16: #{sar_head_forward.18} parent=0 // pred_region
    _
  $region17: #{sar_head_forward.18} parent=0 // pred_fallthru
    _
  // Predicated region
  $region18: #{sar_head_forward.18} parent=0 // pred_check
    _
  $region19: #{sar_head_forward.18} parent=0 // pred_check_branch
    %103 = sbr.rel (0) target = $region21
  $region20: #{sar_head_forward.18} parent=0 // pred_region
    _
  $region21: #{sar_head_forward.18} parent=0 // pred_fallthru
    _

// kernel: sar_head_forward.19
$region0: #{sar_head_forward.19}
  #allocation0 [shape = 'u32[]', space=smem, size = 0x4, offset = 0x4, fixed_abs, tag = 'smem constant byte address 0x4 - core index']
  #allocation1 [shape = 'u32[144,128]{1,0:T(1,128)}', space=vmem, size = 0x12000, scoped, tag = 'internal scratch']
  #allocation2 [shape = 'f32[2,32]{1,0:T(2,128)}', space=vmem, size = 0x400, scoped, tag = 'scratch operand']
  #allocation3 [shape = 'f32[2,32]{1,0:T(2,128)}', space=vmem, size = 0x400, scoped, tag = 'scratch operand']
  %s0 = inlined_call_operand.vmem [shape: bf16[7,2,128], index: 0, kind: input, shape index: {}]
  %s1 = inlined_call_operand.vmem [shape: bf16[32,128], index: 1, kind: input, shape index: {}]
  %s2 = inlined_call_operand.vmem [shape: bf16[7,2,32], index: 2, kind: output, shape index: {}]
  %s3 = sld [smem:[#allocation0]]
  $region25: #{sar_head_forward.19} parent=0
    _
  %s5 = ssub.s32 1, %s3
  %s6 = scalar_select 0, %s5, %s3
  // Predicated region
  $region2: #{sar_head_forward.19} parent=0 // pred_check
    _
  $region3: #{sar_head_forward.19} parent=0 // pred_check_branch
    %8 = sbr.rel (0) target = $region5
  $region4: #{sar_head_forward.19} parent=0 // pred_region
    _
  $region5: #{sar_head_forward.19} parent=0 // pred_fallthru
    _
  // Predicated region
  $region6: #{sar_head_forward.19} parent=0 // pred_check
    _
  $region7: #{sar_head_forward.19} parent=0 // pred_check_branch
    %10 = sbr.rel (0) target = $region9
  $region8: #{sar_head_forward.19} parent=0 // pred_region
    _
  $region9: #{sar_head_forward.19} parent=0 // pred_fallthru
    _
  %vm12 = vcmask 254976
  %13 = vst.msk [vmem:[#allocation2] sm:$0x3] %vm12, 0.0
  %14 = vst.msk [vmem:[#allocation3] sm:$0x3] %vm12, 0.0
  loop: start=0, step=1, limit=7
  $region10: #{sar_head_forward.19} parent=0 // loop_pre_header
    _
  $region11: #{sar_head_forward.19} parent=0 // loop_header
    %s16 = sphi 0, %s20
    %p17 = scmp.ge.s32.totalorder %s16, 7
  $region12: #{sar_head_forward.19} parent=0 // loop_header_branch
    %19 = sbr.rel (%p17) target = $region16
  $region13: #{sar_head_forward.19} parent=0 // loop_body
    %s21 = scalar_lea.vmem %s0, %s16
    %v22 = vld [vmem:[%s21] sm:$0x1]
    %v23 = vunpack.c.l.bf16 %v22
    %v24 = vld [vmem:[#allocation2] sm:$0x3]
    %v25 = vpack.c.bf16 %v24, %v24
    %v26 = vld [vmem:[%s1] sm:$0xf]
    %v27 = vld [vmem:[%s1 + $0x4] sm:$0xf]
    %v28 = vld [vmem:[%s1 + $0x8] sm:$0xf]
    %v29 = vld [vmem:[%s1 + $0xc] sm:$0xf]
    %v34 = vunpack.c.l.b16 %v26
    %v35 = vunpack.c.l.b16 %v27
    %v36 = vunpack.c.l.b16 %v28
    %v37 = vunpack.c.l.b16 %v29
    %v38 = vpack.c.b16 %v35, %v34
    %v39 = vpack.c.b16 %v37, %v36
    %vm42 = vcmask 261120
    %v44 = vsel %vm42, %v25, 0
    %46 = vmatprep.subr.bf16.mxu0 0
    %47 = vmatpush1.bf16.msra.mxu0 %v38
    %48 = vmatprep.subr.bf16.mxu0 0
    %49 = vmatpush1.bf16.msra.mxu0 %v39
    %50 = vmatprep.subr.bf16.mxu0 0
    %51 = vmatpush1.bf16.msra.mxu0 0
    %52 = vmatprep.subr.bf16.mxu0 0
    %53 = vmatpush1.bf16.msra.mxu0 0
    %54 = vmatprep.subr.bf16.mxu0 0
    %55 = vmatpush1.bf16.msra.mxu0 0
    %56 = vmatprep.subr.bf16.mxu0 0
    %57 = vmatpush1.bf16.msra.mxu0 0
    %58 = vmatprep.subr.bf16.mxu0 0
    %59 = vmatpush1.bf16.msra.mxu0 0
    %60 = vmatprep.subr.bf16.mxu0 0
    %61 = vmatpush1.bf16.msra.mxu0 0
    %62 = vmatprep.subr.bf16.mxu0 0
    %63 = vmatpush1.bf16.msra.mxu0 0
    %64 = vmatprep.subr.bf16.mxu0 0
    %65 = vmatpush1.bf16.msra.mxu0 0
    %66 = vmatprep.subr.bf16.mxu0 0
    %67 = vmatpush1.bf16.msra.mxu0 0
    %68 = vmatprep.subr.bf16.mxu0 0
    %69 = vmatpush1.bf16.msra.mxu0 0
    %70 = vmatprep.subr.bf16.mxu0 0
    %71 = vmatpush1.bf16.msra.mxu0 0
    %72 = vmatprep.subr.bf16.mxu0 0
    %73 = vmatpush1.bf16.msra.mxu0 0
    %74 = vmatprep.subr.bf16.mxu0 0
    %75 = vmatpush1.bf16.msra.mxu0 0
    %76 = vmatprep.subr.bf16.mxu0 0
    %77 = vmatpush1.bf16.msra.mxu0 0
    %78 = vmatprep.mubr.bf16.mxu0 0
    %79 = vmatmul.mubr.bf16.gmra.mrb[0].mxu0 %v44
    %v80 = vpop.f32.mrb[0].mxu0
    %v81 = vadd.f32 0.0, %v80
    %v82 = vpop.f32.mrb[0].mxu0
    %v83 = vpop.f32.mrb[0].mxu0
    %v84 = vpop.f32.mrb[0].mxu0
    %85 = vdwg.mxu0
    %v86 = vadd.f32 %v23, %v81
    %v87 = vxor.u32 %v86, 2147483648
    %v88 = vmul.f32 %v87, 1.442695
    %v89 = vpow.pop %v88
    %v90 = vadd.f32 %v89, 1.0
    %v91 = vrcp.pop %v90
    %v92 = vmul.f32 1.0, %v91
    %v93 = vtanh.pop %v86
    %v94 = vld [vmem:[#allocation3] sm:$0x3]
    %v97 = vunpack.c.l.s4 1983009808
    %v98 = vunpack.c.0.s8 %v97
    %v99 = vlaneseq
    %v100 = vshrl.u32 %v99, 7
    %v101 = vsub.s32 %v98, %v100
    %v102 = vrot.slane %v94, %v101
    %103 = vrot.lane.b32.xlu0 %v102, 32
    %v104 = vpop.permute.xlu0 %103
    %v106 = vmul.f32 %v92, %v104
    %108 = vrot.lane.b32.xlu0 %v93, 64
    %v109 = vpop.permute.xlu0 %108
    %v111 = vmul.f32 %v92, %v109
    %113 = vrot.lane.b32.xlu0 %v111, 32
    %v114 = vpop.permute.xlu0 %113
    %v116 = vadd.f32 %v106, %v114
    %v117 = vtanh.pop %v116
    %119 = vrot.lane.b32.xlu0 %v117, 64
    %v120 = vpop.permute.xlu0 %119
    %v122 = vmul.f32 %v92, %v120
    %v125 = vunpack.c.l.s4 1983009808
    %v126 = vunpack.c.0.s8 %v125
    %v127 = vlaneseq
    %v128 = vshrl.u32 %v127, 7
    %v129 = vsub.s32 %v126, %v128
    %v130 = vrot.slane %v116, %v129
    %131 = vrot.lane.b32.xlu0 %v130, 96
    %v132 = vpop.permute.xlu0 %131
    %134 = vst.msk [vmem:[#allocation3] sm:$0x3] %vm12, %v132
    %v137 = vunpack.c.l.s4 1983009808
    %v138 = vunpack.c.0.s8 %v137
    %v139 = vlaneseq
    %v140 = vshrl.u32 %v139, 7
    %v141 = vsub.s32 %v138, %v140
    %v142 = vrot.slane %v122, %v141
    %143 = vrot.lane.b32.xlu0 %v142, 32
    %v144 = vpop.permute.xlu0 %143
    %146 = vst.msk [vmem:[#allocation2] sm:$0x3] %vm12, %v144
    %v147 = vpack.c.bf16 %v122, %v122
    %v150 = vunpack.c.l.s4 1966171168
    %v151 = vunpack.c.0.s8 %v150
    %v152 = vlaneseq
    %v153 = vshrl.u32 %v152, 7
    %v154 = vsub.s32 %v151, %v153
    %v155 = vrot.slane %v147, %v154
    %v157 = vunpack.c.l.s4 1966171168
    %v158 = vunpack.c.0.s8 %v157
    %v159 = vlaneseq
    %v160 = vshrl.u32 %v159, 7
    %v161 = vsub.s32 %v158, %v160
    %v162 = vrot.slane %v155, %v161
    %163 = vrot.lane.b32.xlu0 %v162, 32
    %v164 = vpop.permute.xlu0 %163
    %s166 = scalar_lea.vmem %s2, %s16
    %vm167 = vcmask 253952
    %168 = vst.msk [vmem:[%s166] sm:$0x1] %vm167, %v164
  $region14: #{sar_head_forward.19} parent=0 // loop_footer
    %s20 = sadd.s32 1, %s16
  $region15: #{sar_head_forward.19} parent=0 // loop_footer_branch
    %15 = sbr.rel target = $region11
  $region16: #{sar_head_forward.19} parent=0 // loop_exit
    _
  // Predicated region
  $region17: #{sar_head_forward.19} parent=0 // pred_check
    _
  $region18: #{sar_head_forward.19} parent=0 // pred_check_branch
    %170 = sbr.rel (0) target = $region20
  $region19: #{sar_head_forward.19} parent=0 // pred_region
    _
  $region20: #{sar_head_forward.19} parent=0 // pred_fallthru
    _
  // Predicated region
  $region21: #{sar_head_forward.19} parent=0 // pred_check
    _
  $region22: #{sar_head_forward.19} parent=0 // pred_check_branch
    %172 = sbr.rel (0) target = $region24
  $region23: #{sar_head_forward.19} parent=0 // pred_region
    _
  $region24: #{sar_head_forward.19} parent=0 // pred_fallthru
    _

// kernel: sar_head_forward.25
$region0: #{sar_head_forward.25}
  #allocation0 [shape = 'u32[]', space=smem, size = 0x4, offset = 0x4, fixed_abs, tag = 'smem constant byte address 0x4 - core index']
  #allocation1 [shape = 'u32[144,128]{1,0:T(1,128)}', space=vmem, size = 0x12000, scoped, tag = 'internal scratch']
  %s0 = inlined_call_operand.vmem [shape: bf16[2,7,32], index: 0, kind: input, shape index: {}]
  %s1 = inlined_call_operand.vmem [shape: bf16[2,7,32], index: 1, kind: input, shape index: {}]
  %s2 = inlined_call_operand.vmem [shape: bf16[2,1,32], index: 2, kind: input, shape index: {}]
  %s3 = inlined_call_operand.vmem [shape: bf16[32,128], index: 3, kind: input, shape index: {}]
  %s4 = inlined_call_operand.vmem [shape: bf16[32,128], index: 4, kind: input, shape index: {}]
  %s5 = inlined_call_operand.vmem [shape: bf16[32,128], index: 5, kind: input, shape index: {}]
  %s6 = inlined_call_operand.vmem [shape: f32[1,128], index: 6, kind: input, shape index: {}]
  %s7 = inlined_call_operand.vmem [shape: f32[2,7,128], index: 7, kind: output, shape index: {}]
  %s8 = sld [smem:[#allocation0]]
  $region61: #{sar_head_forward.25} parent=0
    _
  %s10 = ssub.s32 1, %s8
  %s11 = scalar_select 0, %s10, %s8
  loop: start=0, step=1, limit=4
  $region2: #{sar_head_forward.25} parent=0 // loop_pre_header
    _
  $region3: #{sar_head_forward.25} parent=0 // loop_header
    %s13 = sphi 0, %s17
    %p14 = scmp.ge.s32.totalorder %s13, 4
    %s23 = sphi 0, %s25
    %s26 = sphi 0, %s23
    %s27 = sphi 0, %s26
    %s43 = sphi 0, %s27
    %s49 = sphi 0, %s51
    %s52 = sphi 0, %s49
    %s53 = sphi 0, %s52
    %s69 = sphi 0, %s53
    %s75 = sphi 0, %s77
    %s78 = sphi 0, %s75
    %s79 = sphi 0, %s78
    %s95 = sphi 0, %s79
    %s99 = sphi 0, %s99
    %s101 = sphi 0, %s99
    %s102 = sphi 0, %s101
    %s116 = sphi 0, %s102
    %s120 = sphi 0, %s120
    %s122 = sphi 0, %s120
    %s123 = sphi 0, %s122
    %s137 = sphi 0, %s123
    %s141 = sphi 0, %s141
    %s143 = sphi 0, %s141
    %s144 = sphi 0, %s143
    %s158 = sphi 0, %s144
    %s162 = sphi 0, %s162
    %s164 = sphi 0, %s162
    %s165 = sphi 0, %s164
    %s179 = sphi 0, %s165
    %s185 = sphi 0, %s187
    %s188 = sphi 0, %s185
    %s189 = sphi 0, %s188
    %s205 = sphi 0, %s189
  $region4: #{sar_head_forward.25} parent=0 // loop_header_branch
    %16 = sbr.rel (%p14) target = $region8
  $region5: #{sar_head_forward.25} parent=0 // loop_body
    %s18 = ssub.s32 %s13, 1
    %s19 = ssub.s32 %s13, 2
    %s20 = sadd.s32 %s13, 1
    %s21 = ssub.s32 %s13, %s20
    %p22 = scmp.eq.s32.totalorder %s21, 0
    %s24 = sadd.s32 %s23, 1
    %s25 = scalar_select %p22, %s23, %s24
    %p28 = pneg %p22
    %p29 = scmp.eq.s32.totalorder %s13, 1
    %p30 = por %p28, %p29
    %p31 = scmp.ne.s32.totalorder %s23, %s26
    %p32 = scmp.eq.s32.totalorder %s13, 0
    %p33 = por %p31, %p32
    %p34 = scmp.ne.s32.totalorder %s23, %s26
    %p35 = scmp.eq.s32.totalorder %s18, 1
    %p36 = por %p34, %p35
    %p37 = scmp.ne.s32.totalorder %s26, %s27
    %p38 = scmp.eq.s32.totalorder %s18, 0
    %p39 = por %p37, %p38
    %p40 = scmp.ne.s32.totalorder %s26, %s27
    %p41 = scmp.eq.s32.totalorder %s19, 1
    %p42 = por %p40, %p41
    %p44 = scmp.ne.s32.totalorder %s27, %s43
    %p45 = scmp.eq.s32.totalorder %s19, 0
    %p46 = por %p44, %p45
    %s47 = ssub.s32 %s13, %s20
    %p48 = scmp.eq.s32.totalorder %s47, 0
    %s50 = sadd.s32 %s49, 1
    %s51 = scalar_select %p48, %s49, %s50
    %p54 = pneg %p48
    %p55 = scmp.eq.s32.totalorder %s13, 1
    %p56 = por %p54, %p55
    %p57 = scmp.ne.s32.totalorder %s49, %s52
    %p58 = scmp.eq.s32.totalorder %s13, 0
    %p59 = por %p57, %p58
    %p60 = scmp.ne.s32.totalorder %s49, %s52
    %p61 = scmp.eq.s32.totalorder %s18, 1
    %p62 = por %p60, %p61
    %p63 = scmp.ne.s32.totalorder %s52, %s53
    %p64 = scmp.eq.s32.totalorder %s18, 0
    %p65 = por %p63, %p64
    %p66 = scmp.ne.s32.totalorder %s52, %s53
    %p67 = scmp.eq.s32.totalorder %s19, 1
    %p68 = por %p66, %p67
    %p70 = scmp.ne.s32.totalorder %s53, %s69
    %p71 = scmp.eq.s32.totalorder %s19, 0
    %p72 = por %p70, %p71
    %s73 = ssub.s32 %s13, %s20
    %p74 = scmp.eq.s32.totalorder %s73, 0
    %s76 = sadd.s32 %s75, 1
    %s77 = scalar_select %p74, %s75, %s76
    %p80 = pneg %p74
    %p81 = scmp.eq.s32.totalorder %s13, 1
    %p82 = por %p80, %p81
    %p83 = scmp.ne.s32.totalorder %s75, %s78
    %p84 = scmp.eq.s32.totalorder %s13, 0
    %p85 = por %p83, %p84
    %p86 = scmp.ne.s32.totalorder %s75, %s78
    %p87 = scmp.eq.s32.totalorder %s18, 1
    %p88 = por %p86, %p87
    %p89 = scmp.ne.s32.totalorder %s78, %s79
    %p90 = scmp.eq.s32.totalorder %s18, 0
    %p91 = por %p89, %p90
    %p92 = scmp.ne.s32.totalorder %s78, %s79
    %p93 = scmp.eq.s32.totalorder %s19, 1
    %p94 = por %p92, %p93
    %p96 = scmp.ne.s32.totalorder %s79, %s95
    %p97 = scmp.eq.s32.totalorder %s19, 0
    %p98 = por %p96, %p97
    %s100 = sadd.s32 %s99, 1
    %p103 = scmp.eq.s32.totalorder %s13, 1
    %p104 = scmp.ne.s32.totalorder %s99, %s101
    %p105 = scmp.eq.s32.totalorder %s13, 0
    %p106 = por %p104, %p105
    %p107 = scmp.ne.s32.totalorder %s99, %s101
    %p108 = scmp.eq.s32.totalorder %s18, 1
    %p109 = por %p107, %p108
    %p110 = scmp.ne.s32.totalorder %s101, %s102
    %p111 = scmp.eq.s32.totalorder %s18, 0
    %p112 = por %p110, %p111
    %p113 = scmp.ne.s32.totalorder %s101, %s102
    %p114 = scmp.eq.s32.totalorder %s19, 1
    %p115 = por %p113, %p114
    %p117 = scmp.ne.s32.totalorder %s102, %s116
    %p118 = scmp.eq.s32.totalorder %s19, 0
    %p119 = por %p117, %p118
    %s121 = sadd.s32 %s120, 1
    %p124 = scmp.eq.s32.totalorder %s13, 1
    %p125 = scmp.ne.s32.totalorder %s120, %s122
    %p126 = scmp.eq.s32.totalorder %s13, 0
    %p127 = por %p125, %p126
    %p128 = scmp.ne.s32.totalorder %s120, %s122
    %p129 = scmp.eq.s32.totalorder %s18, 1
    %p130 = por %p128, %p129
    %p131 = scmp.ne.s32.totalorder %s122, %s123
    %p132 = scmp.eq.s32.totalorder %s18, 0
    %p133 = por %p131, %p132
    %p134 = scmp.ne.s32.totalorder %s122, %s123
    %p135 = scmp.eq.s32.totalorder %s19, 1
    %p136 = por %p134, %p135
    %p138 = scmp.ne.s32.totalorder %s123, %s137
    %p139 = scmp.eq.s32.totalorder %s19, 0
    %p140 = por %p138, %p139
    %s142 = sadd.s32 %s141, 1
    %p145 = scmp.eq.s32.totalorder %s13, 1
    %p146 = scmp.ne.s32.totalorder %s141, %s143
    %p147 = scmp.eq.s32.totalorder %s13, 0
    %p148 = por %p146, %p147
    %p149 = scmp.ne.s32.totalorder %s141, %s143
    %p150 = scmp.eq.s32.totalorder %s18, 1
    %p151 = por %p149, %p150
    %p152 = scmp.ne.s32.totalorder %s143, %s144
    %p153 = scmp.eq.s32.totalorder %s18, 0
    %p154 = por %p152, %p153
    %p155 = scmp.ne.s32.totalorder %s143, %s144
    %p156 = scmp.eq.s32.totalorder %s19, 1
    %p157 = por %p155, %p156
    %p159 = scmp.ne.s32.totalorder %s144, %s158
    %p160 = scmp.eq.s32.totalorder %s19, 0
    %p161 = por %p159, %p160
    %s163 = sadd.s32 %s162, 1
    %p166 = scmp.eq.s32.totalorder %s13, 1
    %p167 = scmp.ne.s32.totalorder %s162, %s164
    %p168 = scmp.eq.s32.totalorder %s13, 0
    %p169 = por %p167, %p168
    %p170 = scmp.ne.s32.totalorder %s162, %s164
    %p171 = scmp.eq.s32.totalorder %s18, 1
    %p172 = por %p170, %p171
    %p173 = scmp.ne.s32.totalorder %s164, %s165
    %p174 = scmp.eq.s32.totalorder %s18, 0
    %p175 = por %p173, %p174
    %p176 = scmp.ne.s32.totalorder %s164, %s165
    %p177 = scmp.eq.s32.totalorder %s19, 1
    %p178 = por %p176, %p177
    %p180 = scmp.ne.s32.totalorder %s165, %s179
    %p181 = scmp.eq.s32.totalorder %s19, 0
    %p182 = por %p180, %p181
    %s183 = ssub.s32 %s13, %s20
    %p184 = scmp.eq.s32.totalorder %s183, 0
    %s186 = sadd.s32 %s185, 1
    %s187 = scalar_select %p184, %s185, %s186
    %p190 = pneg %p184
    %p191 = scmp.eq.s32.totalorder %s13, 1
    %p192 = por %p190, %p191
    %p193 = scmp.ne.s32.totalorder %s185, %s188
    %p194 = scmp.eq.s32.totalorder %s13, 0
    %p195 = por %p193, %p194
    %p196 = scmp.ne.s32.totalorder %s185, %s188
    %p197 = scmp.eq.s32.totalorder %s18, 1
    %p198 = por %p196, %p197
    %p199 = scmp.ne.s32.totalorder %s188, %s189
    %p200 = scmp.eq.s32.totalorder %s18, 0
    %p201 = por %p199, %p200
    %p202 = scmp.ne.s32.totalorder %s188, %s189
    %p203 = scmp.eq.s32.totalorder %s19, 1
    %p204 = por %p202, %p203
    %p206 = scmp.ne.s32.totalorder %s189, %s205
    %p207 = scmp.eq.s32.totalorder %s19, 0
    %p208 = por %p206, %p207
    %p209 = scmp.le.s32.totalorder 1, %s13
    %p210 = scmp.lt.s32.totalorder %s13, 3
    %p211 = pnand %p209, %p210
    %p212 = pneg %p211
    // Predicated region
    $region9: #{sar_head_forward.25} parent=5 // pred_check
      _
    $region10: #{sar_head_forward.25} parent=5 // pred_check_branch
      %214 = sbr.rel (%p211) target = $region12
    $region11: #{sar_head_forward.25} parent=5 // pred_region
      %s215 = ssub.s32 %s13, 1
      // Predicated region
      $region13: #{sar_head_forward.25} parent=11 // pred_check
        %p216 = pneg %p112
      $region14: #{sar_head_forward.25} parent=11 // pred_check_branch
        %218 = sbr.rel (%p216) target = $region16
      $region15: #{sar_head_forward.25} parent=11 // pred_region
        _
      $region16: #{sar_head_forward.25} parent=11 // pred_fallthru
        _
      // Predicated region
      $region17: #{sar_head_forward.25} parent=11 // pred_check
        %p219 = pneg %p133
      $region18: #{sar_head_forward.25} parent=11 // pred_check_branch
        %221 = sbr.rel (%p219) target = $region20
      $region19: #{sar_head_forward.25} parent=11 // pred_region
        _
      $region20: #{sar_head_forward.25} parent=11 // pred_fallthru
        _
      // Predicated region
      $region21: #{sar_head_forward.25} parent=11 // pred_check
        %p222 = pneg %p154
      $region22: #{sar_head_forward.25} parent=11 // pred_check_branch
        %224 = sbr.rel (%p222) target = $region24
      $region23: #{sar_head_forward.25} parent=11 // pred_region
        _
      $region24: #{sar_head_forward.25} parent=11 // pred_fallthru
        _
      // Predicated region
      $region25: #{sar_head_forward.25} parent=11 // pred_check
        %p225 = pneg %p175
      $region26: #{sar_head_forward.25} parent=11 // pred_check_branch
        %227 = sbr.rel (%p225) target = $region28
      $region27: #{sar_head_forward.25} parent=11 // pred_region
        _
      $region28: #{sar_head_forward.25} parent=11 // pred_fallthru
        _
    $region12: #{sar_head_forward.25} parent=5 // pred_fallthru
      _
    %p228 = scmp.lt.s32.totalorder %s13, 2
    // Predicated region
    $region29: #{sar_head_forward.25} parent=5 // pred_check
      %p229 = pneg %p228
    $region30: #{sar_head_forward.25} parent=5 // pred_check_branch
      %231 = sbr.rel (%p229) target = $region32
    $region31: #{sar_head_forward.25} parent=5 // pred_region
      // Predicated region
      $region33: #{sar_head_forward.25} parent=31 // pred_check
        %p232 = pneg %p33
      $region34: #{sar_head_forward.25} parent=31 // pred_check_branch
        %234 = sbr.rel (%p232) target = $region36
      $region35: #{sar_head_forward.25} parent=31 // pred_region
        %p235 = scmp.lt.s32.totalorder %s13, 1
        %s236 = scalar_select %p235, %s13, 1
        %s237 = smul.addr %s236, 4
        %s238 = scalar_lea.vmem %s0, %s237
      $region36: #{sar_head_forward.25} parent=31 // pred_fallthru
        _
      // Predicated region
      $region37: #{sar_head_forward.25} parent=31 // pred_check
        %p239 = pneg %p59
      $region38: #{sar_head_forward.25} parent=31 // pred_check_branch
        %241 = sbr.rel (%p239) target = $region40
      $region39: #{sar_head_forward.25} parent=31 // pred_region
        %p242 = scmp.lt.s32.totalorder %s13, 1
        %s243 = scalar_select %p242, %s13, 1
        %s244 = smul.addr %s243, 4
        %s245 = scalar_lea.vmem %s1, %s244
      $region40: #{sar_head_forward.25} parent=31 // pred_fallthru
        _
      // Predicated region
      $region41: #{sar_head_forward.25} parent=31 // pred_check
        %p246 = pneg %p85
      $region42: #{sar_head_forward.25} parent=31 // pred_check_branch
        %248 = sbr.rel (%p246) target = $region44
      $region43: #{sar_head_forward.25} parent=31 // pred_region
        %p249 = scmp.lt.s32.totalorder %s13, 1
        %s250 = scalar_select %p249, %s13, 1
        %s251 = scalar_lea.vmem %s2, %s250
      $region44: #{sar_head_forward.25} parent=31 // pred_fallthru
        _
    $region32: #{sar_head_forward.25} parent=5 // pred_fallthru
      _
    %p252 = scmp.le.s32.totalorder 1, %s13
    %p253 = scmp.lt.s32.totalorder %s13, 3
    %p254 = pnand %p252, %p253
    %p255 = pneg %p254
    // Predicated region
    $region45: #{sar_head_forward.25} parent=5 // pred_check
      _
    $region46: #{sar_head_forward.25} parent=5 // pred_check_branch
      %257 = sbr.rel (%p254) target = $region48
    $region47: #{sar_head_forward.25} parent=5 // pred_region
      %s258 = ssub.s32 %s13, 1
      %p259 = scmp.lt.s32.totalorder %s18, 1
      %s260 = scalar_select %p259, %s18, 1
      %s261 = smul.addr %s260, 4
      %s262 = scalar_lea.vmem %s0, %s261
      %p263 = pneg %p39
      %p264 = pneg %p36
      %p265 = scmp.lt.s32.totalorder %s18, 1
      %s266 = scalar_select %p265, %s18, 1
      %s267 = smul.addr %s266, 4
      %s268 = scalar_lea.vmem %s1, %s267
      %p269 = pneg %p65
      %p270 = pneg %p62
      %p271 = scmp.lt.s32.totalorder %s18, 1
      %s272 = scalar_select %p271, %s18, 1
      %s273 = scalar_lea.vmem %s2, %s272
      %p274 = pneg %p91
      %p275 = pneg %p88
      %p276 = pneg %p112
      %p277 = pneg %p109
      %p278 = pneg %p133
      %p279 = pneg %p130
      %p280 = pneg %p154
      %p281 = pneg %p151
      %p282 = pneg %p175
      %p283 = pneg %p172
      %p284 = pneg %p201
      %p285 = pneg %p198
      %p286 = scmp.lt.s32.totalorder %s18, 1
      %s287 = scalar_select %p286, %s18, 1
      %s288 = smul.addr %s287, 8
      %s289 = scalar_lea.vmem %s7, %s288
      %p290 = scmp.lt.s32.totalorder %s18, 1
      %s291 = scalar_select %p290, %s18, 1
      %s292 = smul.addr %s291, 4
      %s293 = scalar_lea.vmem %s0, %s292
      %p294 = scmp.lt.s32.totalorder %s18, 1
      %s295 = scalar_select %p294, %s18, 1
      %s296 = smul.addr %s295, 4
      %s297 = scalar_lea.vmem %s1, %s296
      %p298 = scmp.lt.s32.totalorder %s18, 1
      %s299 = scalar_select %p298, %s18, 1
      %s300 = scalar_lea.vmem %s2, %s299
      %p301 = scmp.lt.s32.totalorder %s18, 1
      %s302 = scalar_select %p301, %s18, 1
      %s303 = smul.addr %s302, 8
      %s304 = scalar_lea.vmem %s7, %s303
      %v306 = vld [vmem:[%s300] sm:$0x1]
      %v307 = vld [vmem:[%s5] sm:$0xf]
      %v308 = vld [vmem:[%s5 + $0x4] sm:$0xf]
      %v309 = vld [vmem:[%s5 + $0x8] sm:$0xf]
      %v310 = vld [vmem:[%s5 + $0xc] sm:$0xf]
      %v311 = vld [vmem:[%s6] sm:$0x1]
      %v316 = vunpack.c.l.b16 %v307
      %v317 = vunpack.c.l.b16 %v308
      %v318 = vunpack.c.l.b16 %v309
      %v319 = vunpack.c.l.b16 %v310
      %v320 = vpack.c.b16 %v317, %v316
      %v321 = vpack.c.b16 %v319, %v318
      %vm324 = vcmask 261120
      %v326 = vsel %vm324, %v306, 0
      %328 = vmatprep.subr.bf16.mxu0 0
      %329 = vmatpush1.bf16.msra.mxu0 %v320
      %330 = vmatprep.subr.bf16.mxu0 0
      %331 = vmatpush1.bf16.msra.mxu0 %v321
      %332 = vmatprep.subr.bf16.mxu0 0
      %333 = vmatpush1.bf16.msra.mxu0 0
      %334 = vmatprep.subr.bf16.mxu0 0
      %335 = vmatpush1.bf16.msra.mxu0 0
      %336 = vmatprep.subr.bf16.mxu0 0
      %337 = vmatpush1.bf16.msra.mxu0 0
      %338 = vmatprep.subr.bf16.mxu0 0
      %339 = vmatpush1.bf16.msra.mxu0 0
      %340 = vmatprep.subr.bf16.mxu0 0
      %341 = vmatpush1.bf16.msra.mxu0 0
      %342 = vmatprep.subr.bf16.mxu0 0
      %343 = vmatpush1.bf16.msra.mxu0 0
      %344 = vmatprep.subr.bf16.mxu0 0
      %345 = vmatpush1.bf16.msra.mxu0 0
      %346 = vmatprep.subr.bf16.mxu0 0
      %347 = vmatpush1.bf16.msra.mxu0 0
      %348 = vmatprep.subr.bf16.mxu0 0
      %349 = vmatpush1.bf16.msra.mxu0 0
      %350 = vmatprep.subr.bf16.mxu0 0
      %351 = vmatpush1.bf16.msra.mxu0 0
      %352 = vmatprep.subr.bf16.mxu0 0
      %353 = vmatpush1.bf16.msra.mxu0 0
      %354 = vmatprep.subr.bf16.mxu0 0
      %355 = vmatpush1.bf16.msra.mxu0 0
      %356 = vmatprep.subr.bf16.mxu0 0
      %357 = vmatpush1.bf16.msra.mxu0 0
      %358 = vmatprep.subr.bf16.mxu0 0
      %359 = vmatpush1.bf16.msra.mxu0 0
      %360 = vmatprep.mubr.bf16.mxu0 0
      %361 = vmatmul.mubr.bf16.gmra.mrb[0].mxu0 %v326
      %v362 = vpop.f32.mrb[0].mxu0
      %v363 = vadd.f32 %v311, %v362
      %v364 = vpop.f32.mrb[0].mxu0
      %v365 = vpop.f32.mrb[0].mxu0
      %v366 = vpop.f32.mrb[0].mxu0
      %367 = vdwg.mxu0
      %v368 = vld [vmem:[%s293] sm:$0xf]
      %v369 = vld [vmem:[%s3] sm:$0xf]
      %v370 = vld [vmem:[%s3 + $0x4] sm:$0xf]
      %v371 = vld [vmem:[%s3 + $0x8] sm:$0xf]
      %v372 = vld [vmem:[%s3 + $0xc] sm:$0xf]
      %v373 = vld [vmem:[%s297] sm:$0xf]
      %v374 = vld [vmem:[%s4] sm:$0xf]
      %v375 = vld [vmem:[%s4 + $0x4] sm:$0xf]
      %v376 = vld [vmem:[%s4 + $0x8] sm:$0xf]
      %v377 = vld [vmem:[%s4 + $0xc] sm:$0xf]
      %v382 = vunpack.c.l.b16 %v374
      %v383 = vunpack.c.l.b16 %v375
      %v384 = vunpack.c.l.b16 %v376
      %v385 = vunpack.c.l.b16 %v377
      %v386 = vpack.c.b16 %v383, %v382
      %v387 = vpack.c.b16 %v385, %v384
      %v391 = vsel %vm324, %v373, 0
      %393 = vmatprep.subr.bf16.mxu0 0
      %394 = vmatpush1.bf16.msra.mxu0 %v386
      %395 = vmatprep.subr.bf16.mxu0 0
      %396 = vmatpush1.bf16.msra.mxu0 %v387
      %397 = vmatprep.subr.bf16.mxu0 0
      %398 = vmatpush1.bf16.msra.mxu0 0
      %399 = vmatprep.subr.bf16.mxu0 0
      %400 = vmatpush1.bf16.msra.mxu0 0
      %401 = vmatprep.subr.bf16.mxu0 0
      %402 = vmatpush1.bf16.msra.mxu0 0
      %403 = vmatprep.subr.bf16.mxu0 0
      %404 = vmatpush1.bf16.msra.mxu0 0
      %405 = vmatprep.subr.bf16.mxu0 0
      %406 = vmatpush1.bf16.msra.mxu0 0
      %407 = vmatprep.subr.bf16.mxu0 0
      %408 = vmatpush1.bf16.msra.mxu0 0
      %409 = vmatprep.subr.bf16.mxu0 0
      %410 = vmatpush1.bf16.msra.mxu0 0
      %411 = vmatprep.subr.bf16.mxu0 0
      %412 = vmatpush1.bf16.msra.mxu0 0
      %413 = vmatprep.subr.bf16.mxu0 0
      %414 = vmatpush1.bf16.msra.mxu0 0
      %415 = vmatprep.subr.bf16.mxu0 0
      %416 = vmatpush1.bf16.msra.mxu0 0
      %417 = vmatprep.subr.bf16.mxu0 0
      %418 = vmatpush1.bf16.msra.mxu0 0
      %419 = vmatprep.subr.bf16.mxu0 0
      %420 = vmatpush1.bf16.msra.mxu0 0
      %421 = vmatprep.subr.bf16.mxu0 0
      %422 = vmatpush1.bf16.msra.mxu0 0
      %423 = vmatprep.subr.bf16.mxu0 0
      %424 = vmatpush1.bf16.msra.mxu0 0
      %425 = vmatprep.mubr.bf16.mxu0 0
      %426 = vmatmul.mubr.bf16.gmra.mrb[0].mxu0 %v391
      %v427 = vpop.f32.mrb[0].mxu0
      %v428 = vadd.f32 0.0, %v427
      %v429 = vpop.f32.mrb[0].mxu0
      %v430 = vpop.f32.mrb[0].mxu0
      %v431 = vpop.f32.mrb[0].mxu0
      %432 = vdwg.mxu0
      %v437 = vunpack.c.l.b16 %v369
      %v438 = vunpack.c.l.b16 %v370
      %v439 = vunpack.c.l.b16 %v371
      %v440 = vunpack.c.l.b16 %v372
      %v441 = vpack.c.b16 %v438, %v437
      %v442 = vpack.c.b16 %v440, %v439
      %v446 = vsel %vm324, %v368, 0
      %448 = vmatprep.subr.bf16.mxu0 0
      %449 = vmatpush1.bf16.msra.mxu0 %v441
      %450 = vmatprep.subr.bf16.mxu0 0
      %451 = vmatpush1.bf16.msra.mxu0 %v442
      %452 = vmatprep.subr.bf16.mxu0 0
      %453 = vmatpush1.bf16.msra.mxu0 0
      %454 = vmatprep.subr.bf16.mxu0 0
      %455 = vmatpush1.bf16.msra.mxu0 0
      %456 = vmatprep.subr.bf16.mxu0 0
      %457 = vmatpush1.bf16.msra.mxu0 0
      %458 = vmatprep.subr.bf16.mxu0 0
      %459 = vmatpush1.bf16.msra.mxu0 0
      %460 = vmatprep.subr.bf16.mxu0 0
      %461 = vmatpush1.bf16.msra.mxu0 0
      %462 = vmatprep.subr.bf16.mxu0 0
      %463 = vmatpush1.bf16.msra.mxu0 0
      %464 = vmatprep.subr.bf16.mxu0 0
      %465 = vmatpush1.bf16.msra.mxu0 0
      %466 = vmatprep.subr.bf16.mxu0 0
      %467 = vmatpush1.bf16.msra.mxu0 0
      %468 = vmatprep.subr.bf16.mxu0 0
      %469 = vmatpush1.bf16.msra.mxu0 0
      %470 = vmatprep.subr.bf16.mxu0 0
      %471 = vmatpush1.bf16.msra.mxu0 0
      %472 = vmatprep.subr.bf16.mxu0 0
      %473 = vmatpush1.bf16.msra.mxu0 0
      %474 = vmatprep.subr.bf16.mxu0 0
      %475 = vmatpush1.bf16.msra.mxu0 0
      %476 = vmatprep.subr.bf16.mxu0 0
      %477 = vmatpush1.bf16.msra.mxu0 0
      %478 = vmatprep.subr.bf16.mxu0 0
      %479 = vmatpush1.bf16.msra.mxu0 0
      %480 = vmatprep.mubr.bf16.mxu0 0
      %481 = vmatmul.mubr.bf16.gmra.mrb[0].mxu0 %v446
      %v482 = vpop.f32.mrb[0].mxu0
      %v483 = vadd.f32 %v428, %v482
      %v484 = vpop.f32.mrb[0].mxu0
      %v485 = vpop.f32.mrb[0].mxu0
      %v486 = vpop.f32.mrb[0].mxu0
      %487 = vdwg.mxu0
      %v488 = vlaneseq
      %v489 = vshrl.u32 %v488, 7
      %v490 = vsub.s32 0, %v489
      %v491 = vrot.slane %v363, %v490
      %v492 = vadd.f32 %v483, %v491
      %493 = vst [vmem:[%s304] sm:$0x7f] %v492
      %p494 = scmp.lt.s32.totalorder %s18, 1
      %s495 = scalar_select %p494, %s18, 1
      %s496 = smul.addr %s495, 8
      %s497 = scalar_lea.vmem %s7, %s496
      // Predicated region
      $region49: #{sar_head_forward.25} parent=47 // pred_check
        %p498 = pneg %p198
      $region50: #{sar_head_forward.25} parent=47 // pred_check_branch
        %500 = sbr.rel (%p498) target = $region52
      $region51: #{sar_head_forward.25} parent=47 // pred_region
        _
      $region52: #{sar_head_forward.25} parent=47 // pred_fallthru
        _
    $region48: #{sar_head_forward.25} parent=5 // pred_fallthru
      _
    %p501 = scmp.le.s32.totalorder 2, %s13
    // Predicated region
    $region53: #{sar_head_forward.25} parent=5 // pred_check
      %p502 = pneg %p501
    $region54: #{sar_head_forward.25} parent=5 // pred_check_branch
      %504 = sbr.rel (%p502) target = $region56
    $region55: #{sar_head_forward.25} parent=5 // pred_region
      %s505 = ssub.s32 %s13, 2
      // Predicated region
      $region57: #{sar_head_forward.25} parent=55 // pred_check
        %p506 = pneg %p204
      $region58: #{sar_head_forward.25} parent=55 // pred_check_branch
        %508 = sbr.rel (%p506) target = $region60
      $region59: #{sar_head_forward.25} parent=55 // pred_region
        %p509 = scmp.lt.s32.totalorder %s19, 1
        %s510 = scalar_select %p509, %s19, 1
        %s511 = smul.addr %s510, 8
        %s512 = scalar_lea.vmem %s7, %s511
      $region60: #{sar_head_forward.25} parent=55 // pred_fallthru
        _
    $region56: #{sar_head_forward.25} parent=5 // pred_fallthru
      _
  $region6: #{sar_head_forward.25} parent=0 // loop_footer
    %s17 = sadd.s32 1, %s13
  $region7: #{sar_head_forward.25} parent=0 // loop_footer_branch
    %12 = sbr.rel target = $region3
  $region8: #{sar_head_forward.25} parent=0 // loop_exit
    _

// kernel: sar_head_forward.24
$region0: #{sar_head_forward.24}
  #allocation0 [shape = 'u32[]', space=smem, size = 0x4, offset = 0x4, fixed_abs, tag = 'smem constant byte address 0x4 - core index']
  #allocation1 [shape = 'u32[144,128]{1,0:T(1,128)}', space=vmem, size = 0x12000, scoped, tag = 'internal scratch']
  %s0 = inlined_call_operand.vmem [shape: bf16[2,8,128], index: 0, kind: input, shape index: {}]
  %s1 = inlined_call_operand.vmem [shape: f32[2,32,128], index: 1, kind: input, shape index: {}]
  %s2 = inlined_call_operand.vmem [shape: f32[1,128], index: 2, kind: input, shape index: {}]
  %s3 = inlined_call_operand.vmem [shape: bf16[2,32,32], index: 3, kind: input, shape index: {}]
  %s4 = inlined_call_operand.vmem [shape: bf16[2,8,32], index: 4, kind: output, shape index: {}]
  %s5 = sld [smem:[#allocation0]]
  $region49: #{sar_head_forward.24} parent=0
    _
  %s7 = ssub.s32 1, %s5
  %s8 = scalar_select 0, %s7, %s5
  loop: start=0, step=1, limit=4
  $region2: #{sar_head_forward.24} parent=0 // loop_pre_header
    _
  $region3: #{sar_head_forward.24} parent=0 // loop_header
    %s10 = sphi 0, %s14
    %p11 = scmp.ge.s32.totalorder %s10, 4
    %s17 = sphi 0, %s29
    %s18 = sphi 0, %s25
    %s19 = sphi 0, %s17
    %s20 = sphi 0, %s18
    %s21 = sphi 0, %s19
    %s22 = sphi 0, %s20
    %s34 = sphi 0, %s36
    %s37 = sphi 0, %s34
    %s38 = sphi 0, %s37
    %s54 = sphi 0, %s38
    %s60 = sphi 0, %s62
    %s63 = sphi 0, %s60
    %s64 = sphi 0, %s63
    %s80 = sphi 0, %s64
    %s84 = sphi 0, %s84
    %s86 = sphi 0, %s84
    %s87 = sphi 0, %s86
    %s101 = sphi 0, %s87
    %s107 = sphi 0, %s109
    %s110 = sphi 0, %s107
    %s111 = sphi 0, %s110
    %s127 = sphi 0, %s111
    %s135 = sphi 0, %s137
    %s138 = sphi 0, %s135
    %s139 = sphi 0, %s138
    %s155 = sphi 0, %s139
  $region4: #{sar_head_forward.24} parent=0 // loop_header_branch
    %13 = sbr.rel (%p11) target = $region8
  $region5: #{sar_head_forward.24} parent=0 // loop_body
    %s15 = ssub.s32 %s10, 1
    %s16 = ssub.s32 %s10, 2
    %s23 = sadd.s32 1, %s18
    %p24 = scmp.ge.s32.totalorder %s23, 1
    %s25 = scalar_select %p24, 0, %s23
    %s26 = sadd.s32 1, %s17
    %s27 = scalar_select %p24, %s26, %s17
    %p28 = scmp.ge.s32.totalorder %s27, 2
    %s29 = scalar_select %p28, 0, %s27
    %s30 = ssub.s32 %s17, %s29
    %s31 = ssub.s32 %s18, %s25
    %s32 = sor.u32 %s30, %s31
    %p33 = scmp.eq.s32.totalorder %s32, 0
    %s35 = sadd.s32 %s34, 1
    %s36 = scalar_select %p33, %s34, %s35
    %p39 = pneg %p33
    %p40 = scmp.eq.s32.totalorder %s10, 1
    %p41 = por %p39, %p40
    %p42 = scmp.ne.s32.totalorder %s34, %s37
    %p43 = scmp.eq.s32.totalorder %s10, 0
    %p44 = por %p42, %p43
    %p45 = scmp.ne.s32.totalorder %s34, %s37
    %p46 = scmp.eq.s32.totalorder %s15, 1
    %p47 = por %p45, %p46
    %p48 = scmp.ne.s32.totalorder %s37, %s38
    %p49 = scmp.eq.s32.totalorder %s15, 0
    %p50 = por %p48, %p49
    %p51 = scmp.ne.s32.totalorder %s37, %s38
    %p52 = scmp.eq.s32.totalorder %s16, 1
    %p53 = por %p51, %p52
    %p55 = scmp.ne.s32.totalorder %s38, %s54
    %p56 = scmp.eq.s32.totalorder %s16, 0
    %p57 = por %p55, %p56
    %s58 = ssub.s32 %s17, %s29
    %p59 = scmp.eq.s32.totalorder %s58, 0
    %s61 = sadd.s32 %s60, 1
    %s62 = scalar_select %p59, %s60, %s61
    %p65 = pneg %p59
    %p66 = scmp.eq.s32.totalorder %s10, 1
    %p67 = por %p65, %p66
    %p68 = scmp.ne.s32.totalorder %s60, %s63
    %p69 = scmp.eq.s32.totalorder %s10, 0
    %p70 = por %p68, %p69
    %p71 = scmp.ne.s32.totalorder %s60, %s63
    %p72 = scmp.eq.s32.totalorder %s15, 1
    %p73 = por %p71, %p72
    %p74 = scmp.ne.s32.totalorder %s63, %s64
    %p75 = scmp.eq.s32.totalorder %s15, 0
    %p76 = por %p74, %p75
    %p77 = scmp.ne.s32.totalorder %s63, %s64
    %p78 = scmp.eq.s32.totalorder %s16, 1
    %p79 = por %p77, %p78
    %p81 = scmp.ne.s32.totalorder %s64, %s80
    %p82 = scmp.eq.s32.totalorder %s16, 0
    %p83 = por %p81, %p82
    %s85 = sadd.s32 %s84, 1
    %p88 = scmp.eq.s32.totalorder %s10, 1
    %p89 = scmp.ne.s32.totalorder %s84, %s86
    %p90 = scmp.eq.s32.totalorder %s10, 0
    %p91 = por %p89, %p90
    %p92 = scmp.ne.s32.totalorder %s84, %s86
    %p93 = scmp.eq.s32.totalorder %s15, 1
    %p94 = por %p92, %p93
    %p95 = scmp.ne.s32.totalorder %s86, %s87
    %p96 = scmp.eq.s32.totalorder %s15, 0
    %p97 = por %p95, %p96
    %p98 = scmp.ne.s32.totalorder %s86, %s87
    %p99 = scmp.eq.s32.totalorder %s16, 1
    %p100 = por %p98, %p99
    %p102 = scmp.ne.s32.totalorder %s87, %s101
    %p103 = scmp.eq.s32.totalorder %s16, 0
    %p104 = por %p102, %p103
    %s105 = ssub.s32 %s17, %s29
    %p106 = scmp.eq.s32.totalorder %s105, 0
    %s108 = sadd.s32 %s107, 1
    %s109 = scalar_select %p106, %s107, %s108
    %p112 = pneg %p106
    %p113 = scmp.eq.s32.totalorder %s10, 1
    %p114 = por %p112, %p113
    %p115 = scmp.ne.s32.totalorder %s107, %s110
    %p116 = scmp.eq.s32.totalorder %s10, 0
    %p117 = por %p115, %p116
    %p118 = scmp.ne.s32.totalorder %s107, %s110
    %p119 = scmp.eq.s32.totalorder %s15, 1
    %p120 = por %p118, %p119
    %p121 = scmp.ne.s32.totalorder %s110, %s111
    %p122 = scmp.eq.s32.totalorder %s15, 0
    %p123 = por %p121, %p122
    %p124 = scmp.ne.s32.totalorder %s110, %s111
    %p125 = scmp.eq.s32.totalorder %s16, 1
    %p126 = por %p124, %p125
    %p128 = scmp.ne.s32.totalorder %s111, %s127
    %p129 = scmp.eq.s32.totalorder %s16, 0
    %p130 = por %p128, %p129
    %s131 = ssub.s32 %s17, %s29
    %s132 = ssub.s32 %s18, %s25
    %s133 = sor.u32 %s131, %s132
    %p134 = scmp.eq.s32.totalorder %s133, 0
    %s136 = sadd.s32 %s135, 1
    %s137 = scalar_select %p134, %s135, %s136
    %p140 = pneg %p134
    %p141 = scmp.eq.s32.totalorder %s10, 1
    %p142 = por %p140, %p141
    %p143 = scmp.ne.s32.totalorder %s135, %s138
    %p144 = scmp.eq.s32.totalorder %s10, 0
    %p145 = por %p143, %p144
    %p146 = scmp.ne.s32.totalorder %s135, %s138
    %p147 = scmp.eq.s32.totalorder %s15, 1
    %p148 = por %p146, %p147
    %p149 = scmp.ne.s32.totalorder %s138, %s139
    %p150 = scmp.eq.s32.totalorder %s15, 0
    %p151 = por %p149, %p150
    %p152 = scmp.ne.s32.totalorder %s138, %s139
    %p153 = scmp.eq.s32.totalorder %s16, 1
    %p154 = por %p152, %p153
    %p156 = scmp.ne.s32.totalorder %s139, %s155
    %p157 = scmp.eq.s32.totalorder %s16, 0
    %p158 = por %p156, %p157
    %p159 = scmp.le.s32.totalorder 1, %s10
    %p160 = scmp.lt.s32.totalorder %s10, 3
    %p161 = pnand %p159, %p160
    %p162 = pneg %p161
    // Predicated region
    $region9: #{sar_head_forward.24} parent=5 // pred_check
      _
    $region10: #{sar_head_forward.24} parent=5 // pred_check_branch
      %164 = sbr.rel (%p161) target = $region12
    $region11: #{sar_head_forward.24} parent=5 // pred_region
      %s165 = ssub.s32 %s10, 1
      // Predicated region
      $region13: #{sar_head_forward.24} parent=11 // pred_check
        %p166 = pneg %p97
      $region14: #{sar_head_forward.24} parent=11 // pred_check_branch
        %168 = sbr.rel (%p166) target = $region16
      $region15: #{sar_head_forward.24} parent=11 // pred_region
        _
      $region16: #{sar_head_forward.24} parent=11 // pred_fallthru
        _
    $region12: #{sar_head_forward.24} parent=5 // pred_fallthru
      _
    %p169 = scmp.lt.s32.totalorder %s10, 2
    // Predicated region
    $region17: #{sar_head_forward.24} parent=5 // pred_check
      %p170 = pneg %p169
    $region18: #{sar_head_forward.24} parent=5 // pred_check_branch
      %172 = sbr.rel (%p170) target = $region20
    $region19: #{sar_head_forward.24} parent=5 // pred_region
      // Predicated region
      $region21: #{sar_head_forward.24} parent=19 // pred_check
        %p173 = pneg %p44
      $region22: #{sar_head_forward.24} parent=19 // pred_check_branch
        %175 = sbr.rel (%p173) target = $region24
      $region23: #{sar_head_forward.24} parent=19 // pred_region
        %p176 = scmp.lt.s32.totalorder %s17, 1
        %s177 = scalar_select %p176, %s17, 1
        %p178 = scmp.lt.s32.totalorder %s18, 0
        %s179 = scalar_select %p178, %s18, 0
        %s180 = sadd.s32 %s179, %s177
        %s181 = smul.addr %s180, 4
        %s182 = scalar_lea.vmem %s0, %s181
      $region24: #{sar_head_forward.24} parent=19 // pred_fallthru
        _
      // Predicated region
      $region25: #{sar_head_forward.24} parent=19 // pred_check
        %p183 = pneg %p70
      $region26: #{sar_head_forward.24} parent=19 // pred_check_branch
        %185 = sbr.rel (%p183) target = $region28
      $region27: #{sar_head_forward.24} parent=19 // pred_region
        %p186 = scmp.lt.s32.totalorder %s17, 1
        %s187 = scalar_select %p186, %s17, 1
        %s188 = smul.addr %s187, 4
        %s189 = smul.addr %s188, 8
        %s190 = scalar_lea.vmem %s1, %s189
      $region28: #{sar_head_forward.24} parent=19 // pred_fallthru
        _
      // Predicated region
      $region29: #{sar_head_forward.24} parent=19 // pred_check
        %p191 = pneg %p117
      $region30: #{sar_head_forward.24} parent=19 // pred_check_branch
        %193 = sbr.rel (%p191) target = $region32
      $region31: #{sar_head_forward.24} parent=19 // pred_region
        %p194 = scmp.lt.s32.totalorder %s17, 1
        %s195 = scalar_select %p194, %s17, 1
        %s196 = smul.addr %s195, 4
        %s197 = smul.addr %s196, 4
        %s198 = scalar_lea.vmem %s3, %s197
      $region32: #{sar_head_forward.24} parent=19 // pred_fallthru
        _
    $region20: #{sar_head_forward.24} parent=5 // pred_fallthru
      _
    %p199 = scmp.le.s32.totalorder 1, %s10
    %p200 = scmp.lt.s32.totalorder %s10, 3
    %p201 = pnand %p199, %p200
    %p202 = pneg %p201
    // Predicated region
    $region33: #{sar_head_forward.24} parent=5 // pred_check
      _
    $region34: #{sar_head_forward.24} parent=5 // pred_check_branch
      %204 = sbr.rel (%p201) target = $region36
    $region35: #{sar_head_forward.24} parent=5 // pred_region
      %s205 = ssub.s32 %s10, 1
      %p206 = scmp.lt.s32.totalorder %s19, 1
      %s207 = scalar_select %p206, %s19, 1
      %p208 = scmp.lt.s32.totalorder %s20, 0
      %s209 = scalar_select %p208, %s20, 0
      %s210 = sadd.s32 %s209, %s207
      %s211 = smul.addr %s210, 4
      %s212 = scalar_lea.vmem %s0, %s211
      %p213 = pneg %p50
      %p214 = pneg %p47
      %p215 = scmp.lt.s32.totalorder %s19, 1
      %s216 = scalar_select %p215, %s19, 1
      %s217 = smul.addr %s216, 4
      %s218 = smul.addr %s217, 8
      %s219 = scalar_lea.vmem %s1, %s218
      %p220 = pneg %p76
      %p221 = pneg %p73
      %p222 = pneg %p97
      %p223 = pneg %p94
      %p224 = scmp.lt.s32.totalorder %s19, 1
      %s225 = scalar_select %p224, %s19, 1
      %s226 = smul.addr %s225, 4
      %s227 = smul.addr %s226, 4
      %s228 = scalar_lea.vmem %s3, %s227
      %p229 = pneg %p123
      %p230 = pneg %p120
      %p231 = pneg %p151
      %p232 = pneg %p148
      %p233 = scmp.lt.s32.totalorder %s19, 1
      %s234 = scalar_select %p233, %s19, 1
      %p235 = scmp.lt.s32.totalorder %s20, 0
      %s236 = scalar_select %p235, %s20, 0
      %s237 = sadd.s32 %s236, %s234
      %s238 = smul.addr %s237, 4
      %s239 = scalar_lea.vmem %s4, %s238
      %p240 = scmp.lt.s32.totalorder %s19, 1
      %s241 = scalar_select %p240, %s19, 1
      %p242 = scmp.lt.s32.totalorder %s20, 0
      %s243 = scalar_select %p242, %s20, 0
      %s244 = sadd.s32 %s243, %s241
      %s245 = smul.addr %s244, 4
      %s246 = scalar_lea.vmem %s0, %s245
      %p247 = scmp.lt.s32.totalorder %s19, 1
      %s248 = scalar_select %p247, %s19, 1
      %s249 = smul.addr %s248, 4
      %s250 = smul.addr %s249, 8
      %s251 = scalar_lea.vmem %s1, %s250
      %p252 = scmp.lt.s32.totalorder %s19, 1
      %s253 = scalar_select %p252, %s19, 1
      %s254 = smul.addr %s253, 4
      %s255 = smul.addr %s254, 4
      %s256 = scalar_lea.vmem %s3, %s255
      %p257 = scmp.lt.s32.totalorder %s19, 1
      %s258 = scalar_select %p257, %s19, 1
      %p259 = scmp.lt.s32.totalorder %s20, 0
      %s260 = scalar_select %p259, %s20, 0
      %s261 = sadd.s32 %s260, %s258
      %s262 = smul.addr %s261, 4
      %s263 = scalar_lea.vmem %s4, %s262
      %v265 = vld [vmem:[%s246] sm:$0xf]
      %v266 = vld [vmem:[%s251] sm:$0xff]
      %v267 = vld [vmem:[%s251 + $0x8] sm:$0xff]
      %v268 = vld [vmem:[%s251 + $0x10] sm:$0xff]
      %v269 = vld [vmem:[%s251 + $0x18] sm:$0xff]
      %v270 = vpack.c.bf16 %v267, %v266
      %v271 = vpack.c.bf16 %v269, %v268
      %v274 = vunpack.c.l.s4 1966171168
      %v275 = vunpack.c.0.s8 %v274
      %v276 = vlaneseq
      %v277 = vshrl.u32 %v276, 7
      %v278 = vsub.s32 %v275, %v277
      %v279 = vrot.slane %v265, %v278
      %v280 = vcombine.high %v279, %v279
      %v282 = vunpack.c.l.s4 1966171168
      %v283 = vunpack.c.0.s8 %v282
      %v284 = vlaneseq
      %v285 = vshrl.u32 %v284, 7
      %v286 = vsub.s32 %v283, %v285
      %v287 = vrot.slane %v279, %v286
      %v289 = vunpack.c.l.s4 1966171168
      %v290 = vunpack.c.0.s8 %v289
      %v291 = vlaneseq
      %v292 = vshrl.u32 %v291, 7
      %v293 = vsub.s32 %v290, %v292
      %v294 = vrot.slane %v280, %v293
      %v295 = vcombine.high %v287, %v287
      %v296 = vcombine.high %v294, %v294
      %v297 = vunpack.i.l.s16 %v287
      %v298 = vunpack.i.h.s16 %v287
      %v299 = vunpack.i.l.s16 %v294
      %v300 = vunpack.i.h.s16 %v294
      %v301 = vunpack.i.l.s16 %v295
      %v302 = vunpack.i.h.s16 %v295
      %v303 = vunpack.i.l.s16 %v296
      %v304 = vunpack.i.h.s16 %v296
      %v305 = vpack.i.b16 %v297, %v297
      %v306 = vpack.i.b16 %v298, %v298
      %v307 = vpack.i.b16 %v299, %v299
      %v308 = vpack.i.b16 %v300, %v300
      %v309 = vpack.i.b16 %v301, %v301
      %v310 = vpack.i.b16 %v302, %v302
      %v311 = vpack.i.b16 %v303, %v303
      %v312 = vpack.i.b16 %v304, %v304
      %v313 = vlaneseq
      %v314 = vshrl.u32 %v313, 7
      %v315 = vsub.s32 0, %v314
      %v316 = vrot.slane %v305, %v315
      %v317 = vlaneseq
      %v318 = vshrl.u32 %v317, 7
      %v319 = vsub.s32 0, %v318
      %v320 = vrot.slane %v306, %v319
      %v321 = vlaneseq
      %v322 = vshrl.u32 %v321, 7
      %v323 = vsub.s32 0, %v322
      %v324 = vrot.slane %v307, %v323
      %v325 = vlaneseq
      %v326 = vshrl.u32 %v325, 7
      %v327 = vsub.s32 0, %v326
      %v328 = vrot.slane %v308, %v327
      %v329 = vlaneseq
      %v330 = vshrl.u32 %v329, 7
      %v331 = vsub.s32 0, %v330
      %v332 = vrot.slane %v309, %v331
      %v333 = vlaneseq
      %v334 = vshrl.u32 %v333, 7
      %v335 = vsub.s32 0, %v334
      %v336 = vrot.slane %v310, %v335
      %v337 = vlaneseq
      %v338 = vshrl.u32 %v337, 7
      %v339 = vsub.s32 0, %v338
      %v340 = vrot.slane %v311, %v339
      %v341 = vlaneseq
      %v342 = vshrl.u32 %v341, 7
      %v343 = vsub.s32 0, %v342
      %v344 = vrot.slane %v312, %v343
      %v346 = vpack.i.b16 %v316, %v316
      %v348 = vlaneseq
      %v349 = vshrl.u32 %v348, 7
      %v350 = vsub.s32 0, %v349
      %v351 = vrot.slane %v346, %v350
      %v353 = vpack.i.b16 %v320, %v320
      %v355 = vlaneseq
      %v356 = vshrl.u32 %v355, 7
      %v357 = vsub.s32 0, %v356
      %v358 = vrot.slane %v353, %v357
      %v360 = vpack.i.b16 %v324, %v324
      %v362 = vlaneseq
      %v363 = vshrl.u32 %v362, 7
      %v364 = vsub.s32 0, %v363
      %v365 = vrot.slane %v360, %v364
      %v367 = vpack.i.b16 %v328, %v328
      %v369 = vlaneseq
      %v370 = vshrl.u32 %v369, 7
      %v371 = vsub.s32 0, %v370
      %v372 = vrot.slane %v367, %v371
      %v374 = vpack.i.b16 %v332, %v332
      %v376 = vlaneseq
      %v377 = vshrl.u32 %v376, 7
      %v378 = vsub.s32 0, %v377
      %v379 = vrot.slane %v374, %v378
      %v381 = vpack.i.b16 %v336, %v336
      %v383 = vlaneseq
      %v384 = vshrl.u32 %v383, 7
      %v385 = vsub.s32 0, %v384
      %v386 = vrot.slane %v381, %v385
      %v388 = vpack.i.b16 %v340, %v340
      %v390 = vlaneseq
      %v391 = vshrl.u32 %v390, 7
      %v392 = vsub.s32 0, %v391
      %v393 = vrot.slane %v388, %v392
      %v395 = vpack.i.b16 %v344, %v344
      %v397 = vlaneseq
      %v398 = vshrl.u32 %v397, 7
      %v399 = vsub.s32 0, %v398
      %v400 = vrot.slane %v395, %v399
      %v401 = vadd.bf16 %v351, %v270
      %v402 = vadd.bf16 %v351, %v271
      %v403 = vadd.bf16 %v358, %v270
      %v404 = vadd.bf16 %v358, %v271
      %v405 = vadd.bf16 %v365, %v270
      %v406 = vadd.bf16 %v365, %v271
      %v407 = vadd.bf16 %v372, %v270
      %v408 = vadd.bf16 %v372, %v271
      %v409 = vadd.bf16 %v379, %v270
      %v410 = vadd.bf16 %v379, %v271
      %v411 = vadd.bf16 %v386, %v270
      %v412 = vadd.bf16 %v386, %v271
      %v413 = vadd.bf16 %v393, %v270
      %v414 = vadd.bf16 %v393, %v271
      %v415 = vadd.bf16 %v400, %v270
      %v416 = vadd.bf16 %v400, %v271
      %v417 = vtanh.bf16.pop %v401
      %v418 = vtanh.bf16.pop %v402
      %v419 = vtanh.bf16.pop %v403
      %v420 = vtanh.bf16.pop %v404
      %v421 = vtanh.bf16.pop %v405
      %v422 = vtanh.bf16.pop %v406
      %v423 = vtanh.bf16.pop %v407
      %v424 = vtanh.bf16.pop %v408
      %v425 = vtanh.bf16.pop %v409
      %v426 = vtanh.bf16.pop %v410
      %v427 = vtanh.bf16.pop %v411
      %v428 = vtanh.bf16.pop %v412
      %v429 = vtanh.bf16.pop %v413
      %v430 = vtanh.bf16.pop %v414
      %v431 = vtanh.bf16.pop %v415
      %v432 = vtanh.bf16.pop %v416
      %v433 = vld [vmem:[%s2] sm:$0x1]
      %v434 = vunpack.c.l.bf16 %v417
      %v435 = vunpack.c.h.bf16 %v417
      %v436 = vunpack.c.l.bf16 %v418
      %v437 = vunpack.c.h.bf16 %v418
      %v438 = vunpack.c.l.bf16 %v419
      %v439 = vunpack.c.h.bf16 %v419
      %v440 = vunpack.c.l.bf16 %v420
      %v441 = vunpack.c.h.bf16 %v420
      %v442 = vunpack.c.l.bf16 %v421
      %v443 = vunpack.c.h.bf16 %v421
      %v444 = vunpack.c.l.bf16 %v422
      %v445 = vunpack.c.h.bf16 %v422
      %v446 = vunpack.c.l.bf16 %v423
      %v447 = vunpack.c.h.bf16 %v423
      %v448 = vunpack.c.l.bf16 %v424
      %v449 = vunpack.c.h.bf16 %v424
      %v450 = vunpack.c.l.bf16 %v425
      %v451 = vunpack.c.h.bf16 %v425
      %v452 = vunpack.c.l.bf16 %v426
      %v453 = vunpack.c.h.bf16 %v426
      %v454 = vunpack.c.l.bf16 %v427
      %v455 = vunpack.c.h.bf16 %v427
      %v456 = vunpack.c.l.bf16 %v428
      %v457 = vunpack.c.h.bf16 %v428
      %v458 = vunpack.c.l.bf16 %v429
      %v459 = vunpack.c.h.bf16 %v429
      %v460 = vunpack.c.l.bf16 %v430
      %v461 = vunpack.c.h.bf16 %v430
      %v462 = vunpack.c.l.bf16 %v431
      %v463 = vunpack.c.h.bf16 %v431
      %v464 = vunpack.c.l.bf16 %v432
      %v465 = vunpack.c.h.bf16 %v432
      %v467 = vlaneseq
      %v468 = vshrl.u32 %v467, 7
      %v469 = vsub.s32 0, %v468
      %v470 = vrot.slane %v433, %v469
      %v472 = vmul.f32 %v434, %v470
      %v473 = vmul.f32 %v435, %v470
      %v474 = vmul.f32 %v436, %v470
      %v475 = vmul.f32 %v437, %v470
      %v476 = vmul.f32 %v438, %v470
      %v477 = vmul.f32 %v439, %v470
      %v478 = vmul.f32 %v440, %v470
      %v479 = vmul.f32 %v441, %v470
      %v480 = vmul.f32 %v442, %v470
      %v481 = vmul.f32 %v443, %v470
      %v482 = vmul.f32 %v444, %v470
      %v483 = vmul.f32 %v445, %v470
      %v484 = vmul.f32 %v446, %v470
      %v485 = vmul.f32 %v447, %v470
      %v486 = vmul.f32 %v448, %v470
      %v487 = vmul.f32 %v449, %v470
      %v488 = vmul.f32 %v450, %v470
      %v489 = vmul.f32 %v451, %v470
      %v490 = vmul.f32 %v452, %v470
      %v491 = vmul.f32 %v453, %v470
      %v492 = vmul.f32 %v454, %v470
      %v493 = vmul.f32 %v455, %v470
      %v494 = vmul.f32 %v456, %v470
      %v495 = vmul.f32 %v457, %v470
      %v496 = vmul.f32 %v458, %v470
      %v497 = vmul.f32 %v459, %v470
      %v498 = vmul.f32 %v460, %v470
      %v499 = vmul.f32 %v461, %v470
      %v500 = vmul.f32 %v462, %v470
      %v501 = vmul.f32 %v463, %v470
      %v502 = vmul.f32 %v464, %v470
      %v503 = vmul.f32 %v465, %v470
      %504 = vadd.xlane.f32.xlu0 %v472
      %v505 = vpop.xlane.xlu0 %504
      %506 = vadd.xlane.f32.xlu0 %v473
      %v507 = vpop.xlane.xlu0 %506
      %508 = vadd.xlane.f32.xlu0 %v474
      %v509 = vpop.xlane.xlu0 %508
      %510 = vadd.xlane.f32.xlu0 %v475
      %v511 = vpop.xlane.xlu0 %510
      %512 = vadd.xlane.f32.xlu0 %v476
      %v513 = vpop.xlane.xlu0 %512
      %514 = vadd.xlane.f32.xlu0 %v477
      %v515 = vpop.xlane.xlu0 %514
      %516 = vadd.xlane.f32.xlu0 %v478
      %v517 = vpop.xlane.xlu0 %516
      %518 = vadd.xlane.f32.xlu0 %v479
      %v519 = vpop.xlane.xlu0 %518
      %520 = vadd.xlane.f32.xlu0 %v480
      %v521 = vpop.xlane.xlu0 %520
      %522 = vadd.xlane.f32.xlu0 %v481
      %v523 = vpop.xlane.xlu0 %522
      %524 = vadd.xlane.f32.xlu0 %v482
      %v525 = vpop.xlane.xlu0 %524
      %526 = vadd.xlane.f32.xlu0 %v483
      %v527 = vpop.xlane.xlu0 %526
      %528 = vadd.xlane.f32.xlu0 %v484
      %v529 = vpop.xlane.xlu0 %528
      %530 = vadd.xlane.f32.xlu0 %v485
      %v531 = vpop.xlane.xlu0 %530
      %532 = vadd.xlane.f32.xlu0 %v486
      %v533 = vpop.xlane.xlu0 %532
      %534 = vadd.xlane.f32.xlu0 %v487
      %v535 = vpop.xlane.xlu0 %534
      %536 = vadd.xlane.f32.xlu0 %v488
      %v537 = vpop.xlane.xlu0 %536
      %538 = vadd.xlane.f32.xlu0 %v489
      %v539 = vpop.xlane.xlu0 %538
      %540 = vadd.xlane.f32.xlu0 %v490
      %v541 = vpop.xlane.xlu0 %540
      %542 = vadd.xlane.f32.xlu0 %v491
      %v543 = vpop.xlane.xlu0 %542
      %544 = vadd.xlane.f32.xlu0 %v492
      %v545 = vpop.xlane.xlu0 %544
      %546 = vadd.xlane.f32.xlu0 %v493
      %v547 = vpop.xlane.xlu0 %546
      %548 = vadd.xlane.f32.xlu0 %v494
      %v549 = vpop.xlane.xlu0 %548
      %550 = vadd.xlane.f32.xlu0 %v495
      %v551 = vpop.xlane.xlu0 %550
      %552 = vadd.xlane.f32.xlu0 %v496
      %v553 = vpop.xlane.xlu0 %552
      %554 = vadd.xlane.f32.xlu0 %v497
      %v555 = vpop.xlane.xlu0 %554
      %556 = vadd.xlane.f32.xlu0 %v498
      %v557 = vpop.xlane.xlu0 %556
      %558 = vadd.xlane.f32.xlu0 %v499
      %v559 = vpop.xlane.xlu0 %558
      %560 = vadd.xlane.f32.xlu0 %v500
      %v561 = vpop.xlane.xlu0 %560
      %562 = vadd.xlane.f32.xlu0 %v501
      %v563 = vpop.xlane.xlu0 %562
      %564 = vadd.xlane.f32.xlu0 %v502
      %v565 = vpop.xlane.xlu0 %564
      %566 = vadd.xlane.f32.xlu0 %v503
      %v567 = vpop.xlane.xlu0 %566
      %v600 = vlaneseq
      %v601 = vand.u32 %v600, 127
      %v602 = vlaneseq
      %v603 = vshrl.u32 %v602, 7
      %v604 = vsub.s32 %v601, %v603
      %v605 = vrot.slane %v505, %v604
      %v606 = vadd.s32 %v601, 4294967288
      %v607 = vlaneseq
      %v608 = vshrl.u32 %v607, 7
      %v609 = vsub.s32 %v606, %v608
      %v610 = vrot.slane %v507, %v609
      %vm611 = vcmask 130112
      %v612 = vsel %vm611, %v610, %v605
      %v613 = vadd.s32 %v601, 4294967280
      %v614 = vlaneseq
      %v615 = vshrl.u32 %v614, 7
      %v616 = vsub.s32 %v613, %v615
      %v617 = vrot.slane %v509, %v616
      %vm618 = vcmask 195712
      %v619 = vsel %vm618, %v617, %v612
      %v620 = vadd.s32 %v601, 4294967272
      %v621 = vlaneseq
      %v622 = vshrl.u32 %v621, 7
      %v623 = vsub.s32 %v620, %v622
      %v624 = vrot.slane %v511, %v623
      %vm625 = vcmask 261312
      %v626 = vsel %vm625, %v624, %v619
      %v627 = vlaneseq
      %v628 = vshrl.u32 %v627, 7
      %v629 = vsub.s32 %v601, %v628
      %v630 = vrot.slane %v513, %v629
      %v631 = vlaneseq
      %v632 = vshrl.u32 %v631, 7
      %v633 = vsub.s32 %v606, %v632
      %v634 = vrot.slane %v515, %v633
      %v635 = vsel %vm611, %v634, %v630
      %v636 = vlaneseq
      %v637 = vshrl.u32 %v636, 7
      %v638 = vsub.s32 %v613, %v637
      %v639 = vrot.slane %v517, %v638
      %v640 = vsel %vm618, %v639, %v635
      %v641 = vlaneseq
      %v642 = vshrl.u32 %v641, 7
      %v643 = vsub.s32 %v620, %v642
      %v644 = vrot.slane %v519, %v643
      %v645 = vsel %vm625, %v644, %v640
      %v646 = vlaneseq
      %v647 = vshrl.u32 %v646, 7
      %v648 = vsub.s32 %v601, %v647
      %v649 = vrot.slane %v521, %v648
      %v650 = vlaneseq
      %v651 = vshrl.u32 %v650, 7
      %v652 = vsub.s32 %v606, %v651
      %v653 = vrot.slane %v523, %v652
      %v654 = vsel %vm611, %v653, %v649
      %v655 = vlaneseq
      %v656 = vshrl.u32 %v655, 7
      %v657 = vsub.s32 %v613, %v656
      %v658 = vrot.slane %v525, %v657
      %v659 = vsel %vm618, %v658, %v654
      %v660 = vlaneseq
      %v661 = vshrl.u32 %v660, 7
      %v662 = vsub.s32 %v620, %v661
      %v663 = vrot.slane %v527, %v662
      %v664 = vsel %vm625, %v663, %v659
      %v665 = vlaneseq
      %v666 = vshrl.u32 %v665, 7
      %v667 = vsub.s32 %v601, %v666
      %v668 = vrot.slane %v529, %v667
      %v669 = vlaneseq
      %v670 = vshrl.u32 %v669, 7
      %v671 = vsub.s32 %v606, %v670
      %v672 = vrot.slane %v531, %v671
      %v673 = vsel %vm611, %v672, %v668
      %v674 = vlaneseq
      %v675 = vshrl.u32 %v674, 7
      %v676 = vsub.s32 %v613, %v675
      %v677 = vrot.slane %v533, %v676
      %v678 = vsel %vm618, %v677, %v673
      %v679 = vlaneseq
      %v680 = vshrl.u32 %v679, 7
      %v681 = vsub.s32 %v620, %v680
      %v682 = vrot.slane %v535, %v681
      %v683 = vsel %vm625, %v682, %v678
      %v684 = vlaneseq
      %v685 = vshrl.u32 %v684, 7
      %v686 = vsub.s32 %v601, %v685
      %v687 = vrot.slane %v537, %v686
      %v688 = vlaneseq
      %v689 = vshrl.u32 %v688, 7
      %v690 = vsub.s32 %v606, %v689
      %v691 = vrot.slane %v539, %v690
      %v692 = vsel %vm611, %v691, %v687
      %v693 = vlaneseq
      %v694 = vshrl.u32 %v693, 7
      %v695 = vsub.s32 %v613, %v694
      %v696 = vrot.slane %v541, %v695
      %v697 = vsel %vm618, %v696, %v692
      %v698 = vlaneseq
      %v699 = vshrl.u32 %v698, 7
      %v700 = vsub.s32 %v620, %v699
      %v701 = vrot.slane %v543, %v700
      %v702 = vsel %vm625, %v701, %v697
      %v703 = vlaneseq
      %v704 = vshrl.u32 %v703, 7
      %v705 = vsub.s32 %v601, %v704
      %v706 = vrot.slane %v545, %v705
      %v707 = vlaneseq
      %v708 = vshrl.u32 %v707, 7
      %v709 = vsub.s32 %v606, %v708
      %v710 = vrot.slane %v547, %v709
      %v711 = vsel %vm611, %v710, %v706
      %v712 = vlaneseq
      %v713 = vshrl.u32 %v712, 7
      %v714 = vsub.s32 %v613, %v713
      %v715 = vrot.slane %v549, %v714
      %v716 = vsel %vm618, %v715, %v711
      %v717 = vlaneseq
      %v718 = vshrl.u32 %v717, 7
      %v719 = vsub.s32 %v620, %v718
      %v720 = vrot.slane %v551, %v719
      %v721 = vsel %vm625, %v720, %v716
      %v722 = vlaneseq
      %v723 = vshrl.u32 %v722, 7
      %v724 = vsub.s32 %v601, %v723
      %v725 = vrot.slane %v553, %v724
      %v726 = vlaneseq
      %v727 = vshrl.u32 %v726, 7
      %v728 = vsub.s32 %v606, %v727
      %v729 = vrot.slane %v555, %v728
      %v730 = vsel %vm611, %v729, %v725
      %v731 = vlaneseq
      %v732 = vshrl.u32 %v731, 7
      %v733 = vsub.s32 %v613, %v732
      %v734 = vrot.slane %v557, %v733
      %v735 = vsel %vm618, %v734, %v730
      %v736 = vlaneseq
      %v737 = vshrl.u32 %v736, 7
      %v738 = vsub.s32 %v620, %v737
      %v739 = vrot.slane %v559, %v738
      %v740 = vsel %vm625, %v739, %v735
      %v741 = vlaneseq
      %v742 = vshrl.u32 %v741, 7
      %v743 = vsub.s32 %v601, %v742
      %v744 = vrot.slane %v561, %v743
      %v745 = vlaneseq
      %v746 = vshrl.u32 %v745, 7
      %v747 = vsub.s32 %v606, %v746
      %v748 = vrot.slane %v563, %v747
      %v749 = vsel %vm611, %v748, %v744
      %v750 = vlaneseq
      %v751 = vshrl.u32 %v750, 7
      %v752 = vsub.s32 %v613, %v751
      %v753 = vrot.slane %v565, %v752
      %v754 = vsel %vm618, %v753, %v749
      %v755 = vlaneseq
      %v756 = vshrl.u32 %v755, 7
      %v757 = vsub.s32 %v620, %v756
      %v758 = vrot.slane %v567, %v757
      %v759 = vsel %vm625, %v758, %v754
      %vm760 = vcmask 1041409
      %v761 = vsel %vm760, %v645, %v626
      %vm762 = vcmask 1042434
      %v763 = vsel %vm762, %v664, %v761
      %vm764 = vcmask 1043459
      %v765 = vsel %vm764, %v683, %v763
      %vm766 = vcmask 1044484
      %v767 = vsel %vm766, %v702, %v765
      %vm768 = vcmask 1045509
      %v769 = vsel %vm768, %v721, %v767
      %vm770 = vcmask 1046534
      %v771 = vsel %vm770, %v740, %v769
      %vm772 = vcmask 1047559
      %v773 = vsel %vm772, %v759, %v771
      %vm775 = vcmask 261120
      %v776 = vsel %vm775, %v773, -inf
      %777 = vmax.xlane.f32.xlu0 %v776
      %v778 = vpop.xlane.xlu0 %777
      %v780 = vlaneseq
      %v781 = vshrl.u32 %v780, 7
      %v782 = vsub.s32 0, %v781
      %v783 = vrot.slane %v778, %v782
      %v784 = vlaneseq
      %v785 = vshrl.u32 %v784, 7
      %v786 = vsub.s32 1, %v785
      %v787 = vrot.slane %v778, %v786
      %v788 = vlaneseq
      %v789 = vshrl.u32 %v788, 7
      %v790 = vsub.s32 2, %v789
      %v791 = vrot.slane %v778, %v790
      %v792 = vlaneseq
      %v793 = vshrl.u32 %v792, 7
      %v794 = vsub.s32 3, %v793
      %v795 = vrot.slane %v778, %v794
      %v796 = vlaneseq
      %v797 = vshrl.u32 %v796, 7
      %v798 = vsub.s32 4, %v797
      %v799 = vrot.slane %v778, %v798
      %v800 = vlaneseq
      %v801 = vshrl.u32 %v800, 7
      %v802 = vsub.s32 5, %v801
      %v803 = vrot.slane %v778, %v802
      %v804 = vlaneseq
      %v805 = vshrl.u32 %v804, 7
      %v806 = vsub.s32 6, %v805
      %v807 = vrot.slane %v778, %v806
      %v808 = vlaneseq
      %v809 = vshrl.u32 %v808, 7
      %v810 = vsub.s32 7, %v809
      %v811 = vrot.slane %v778, %v810
      %v820 = vsub.f32 %v505, %v783
      %v821 = vsub.f32 %v507, %v783
      %v822 = vsub.f32 %v509, %v783
      %v823 = vsub.f32 %v511, %v783
      %v824 = vsub.f32 %v513, %v787
      %v825 = vsub.f32 %v515, %v787
      %v826 = vsub.f32 %v517, %v787
      %v827 = vsub.f32 %v519, %v787
      %v828 = vsub.f32 %v521, %v791
      %v829 = vsub.f32 %v523, %v791
      %v830 = vsub.f32 %v525, %v791
      %v831 = vsub.f32 %v527, %v791
      %v832 = vsub.f32 %v529, %v795
      %v833 = vsub.f32 %v531, %v795
      %v834 = vsub.f32 %v533, %v795
      %v835 = vsub.f32 %v535, %v795
      %v836 = vsub.f32 %v537, %v799
      %v837 = vsub.f32 %v539, %v799
      %v838 = vsub.f32 %v541, %v799
      %v839 = vsub.f32 %v543, %v799
      %v840 = vsub.f32 %v545, %v803
      %v841 = vsub.f32 %v547, %v803
      %v842 = vsub.f32 %v549, %v803
      %v843 = vsub.f32 %v551, %v803
      %v844 = vsub.f32 %v553, %v807
      %v845 = vsub.f32 %v555, %v807
      %v846 = vsub.f32 %v557, %v807
      %v847 = vsub.f32 %v559, %v807
      %v848 = vsub.f32 %v561, %v811
      %v849 = vsub.f32 %v563, %v811
      %v850 = vsub.f32 %v565, %v811
      %v851 = vsub.f32 %v567, %v811
      %v852 = vmul.f32 %v820, 1.442695
      %v853 = vpow.pop %v852
      %v854 = vmul.f32 %v821, 1.442695
      %v855 = vpow.pop %v854
      %v856 = vmul.f32 %v822, 1.442695
      %v857 = vpow.pop %v856
      %v858 = vmul.f32 %v823, 1.442695
      %v859 = vpow.pop %v858
      %v860 = vmul.f32 %v824, 1.442695
      %v861 = vpow.pop %v860
      %v862 = vmul.f32 %v825, 1.442695
      %v863 = vpow.pop %v862
      %v864 = vmul.f32 %v826, 1.442695
      %v865 = vpow.pop %v864
      %v866 = vmul.f32 %v827, 1.442695
      %v867 = vpow.pop %v866
      %v868 = vmul.f32 %v828, 1.442695
      %v869 = vpow.pop %v868
      %v870 = vmul.f32 %v829, 1.442695
      %v871 = vpow.pop %v870
      %v872 = vmul.f32 %v830, 1.442695
      %v873 = vpow.pop %v872
      %v874 = vmul.f32 %v831, 1.442695
      %v875 = vpow.pop %v874
      %v876 = vmul.f32 %v832, 1.442695
      %v877 = vpow.pop %v876
      %v878 = vmul.f32 %v833, 1.442695
      %v879 = vpow.pop %v878
      %v880 = vmul.f32 %v834, 1.442695
      %v881 = vpow.pop %v880
      %v882 = vmul.f32 %v835, 1.442695
      %v883 = vpow.pop %v882
      %v884 = vmul.f32 %v836, 1.442695
      %v885 = vpow.pop %v884
      %v886 = vmul.f32 %v837, 1.442695
      %v887 = vpow.pop %v886
      %v888 = vmul.f32 %v838, 1.442695
      %v889 = vpow.pop %v888
      %v890 = vmul.f32 %v839, 1.442695
      %v891 = vpow.pop %v890
      %v892 = vmul.f32 %v840, 1.442695
      %v893 = vpow.pop %v892
      %v894 = vmul.f32 %v841, 1.442695
      %v895 = vpow.pop %v894
      %v896 = vmul.f32 %v842, 1.442695
      %v897 = vpow.pop %v896
      %v898 = vmul.f32 %v843, 1.442695
      %v899 = vpow.pop %v898
      %v900 = vmul.f32 %v844, 1.442695
      %v901 = vpow.pop %v900
      %v902 = vmul.f32 %v845, 1.442695
      %v903 = vpow.pop %v902
      %v904 = vmul.f32 %v846, 1.442695
      %v905 = vpow.pop %v904
      %v906 = vmul.f32 %v847, 1.442695
      %v907 = vpow.pop %v906
      %v908 = vmul.f32 %v848, 1.442695
      %v909 = vpow.pop %v908
      %v910 = vmul.f32 %v849, 1.442695
      %v911 = vpow.pop %v910
      %v912 = vmul.f32 %v850, 1.442695
      %v913 = vpow.pop %v912
      %v914 = vmul.f32 %v851, 1.442695
      %v915 = vpow.pop %v914
      %948 = vset.pattern.permute.xlu0 0
      %949 = vperm.xlu0 %948, %v853
      %v950 = vpop.permute.xlu0 %949
      %951 = vset.pattern.permute.xlu0 0
      %952 = vperm.xlu0 %951, %v855
      %v953 = vpop.permute.xlu0 %952
      %954 = vset.pattern.permute.xlu0 0
      %955 = vperm.xlu0 %954, %v857
      %v956 = vpop.permute.xlu0 %955
      %957 = vset.pattern.permute.xlu0 0
      %958 = vperm.xlu0 %957, %v859
      %v959 = vpop.permute.xlu0 %958
      %960 = vset.pattern.permute.xlu0 0
      %961 = vperm.xlu0 %960, %v861
      %v962 = vpop.permute.xlu0 %961
      %963 = vset.pattern.permute.xlu0 0
      %964 = vperm.xlu0 %963, %v863
      %v965 = vpop.permute.xlu0 %964
      %966 = vset.pattern.permute.xlu0 0
      %967 = vperm.xlu0 %966, %v865
      %v968 = vpop.permute.xlu0 %967
      %969 = vset.pattern.permute.xlu0 0
      %970 = vperm.xlu0 %969, %v867
      %v971 = vpop.permute.xlu0 %970
      %972 = vset.pattern.permute.xlu0 0
      %973 = vperm.xlu0 %972, %v869
      %v974 = vpop.permute.xlu0 %973
      %975 = vset.pattern.permute.xlu0 0
      %976 = vperm.xlu0 %975, %v871
      %v977 = vpop.permute.xlu0 %976
      %978 = vset.pattern.permute.xlu0 0
      %979 = vperm.xlu0 %978, %v873
      %v980 = vpop.permute.xlu0 %979
      %981 = vset.pattern.permute.xlu0 0
      %982 = vperm.xlu0 %981, %v875
      %v983 = vpop.permute.xlu0 %982
      %984 = vset.pattern.permute.xlu0 0
      %985 = vperm.xlu0 %984, %v877
      %v986 = vpop.permute.xlu0 %985
      %987 = vset.pattern.permute.xlu0 0
      %988 = vperm.xlu0 %987, %v879
      %v989 = vpop.permute.xlu0 %988
      %990 = vset.pattern.permute.xlu0 0
      %991 = vperm.xlu0 %990, %v881
      %v992 = vpop.permute.xlu0 %991
      %993 = vset.pattern.permute.xlu0 0
      %994 = vperm.xlu0 %993, %v883
      %v995 = vpop.permute.xlu0 %994
      %996 = vset.pattern.permute.xlu0 0
      %997 = vperm.xlu0 %996, %v885
      %v998 = vpop.permute.xlu0 %997
      %999 = vset.pattern.permute.xlu0 0
      %1000 = vperm.xlu0 %999, %v887
      %v1001 = vpop.permute.xlu0 %1000
      %1002 = vset.pattern.permute.xlu0 0
      %1003 = vperm.xlu0 %1002, %v889
      %v1004 = vpop.permute.xlu0 %1003
      %1005 = vset.pattern.permute.xlu0 0
      %1006 = vperm.xlu0 %1005, %v891
      %v1007 = vpop.permute.xlu0 %1006
      %1008 = vset.pattern.permute.xlu0 0
      %1009 = vperm.xlu0 %1008, %v893
      %v1010 = vpop.permute.xlu0 %1009
      %1011 = vset.pattern.permute.xlu0 0
      %1012 = vperm.xlu0 %1011, %v895
      %v1013 = vpop.permute.xlu0 %1012
      %1014 = vset.pattern.permute.xlu0 0
      %1015 = vperm.xlu0 %1014, %v897
      %v1016 = vpop.permute.xlu0 %1015
      %1017 = vset.pattern.permute.xlu0 0
      %1018 = vperm.xlu0 %1017, %v899
      %v1019 = vpop.permute.xlu0 %1018
      %1020 = vset.pattern.permute.xlu0 0
      %1021 = vperm.xlu0 %1020, %v901
      %v1022 = vpop.permute.xlu0 %1021
      %1023 = vset.pattern.permute.xlu0 0
      %1024 = vperm.xlu0 %1023, %v903
      %v1025 = vpop.permute.xlu0 %1024
      %1026 = vset.pattern.permute.xlu0 0
      %1027 = vperm.xlu0 %1026, %v905
      %v1028 = vpop.permute.xlu0 %1027
      %1029 = vset.pattern.permute.xlu0 0
      %1030 = vperm.xlu0 %1029, %v907
      %v1031 = vpop.permute.xlu0 %1030
      %1032 = vset.pattern.permute.xlu0 0
      %1033 = vperm.xlu0 %1032, %v909
      %v1034 = vpop.permute.xlu0 %1033
      %1035 = vset.pattern.permute.xlu0 0
      %1036 = vperm.xlu0 %1035, %v911
      %v1037 = vpop.permute.xlu0 %1036
      %1038 = vset.pattern.permute.xlu0 0
      %1039 = vperm.xlu0 %1038, %v913
      %v1040 = vpop.permute.xlu0 %1039
      %1041 = vset.pattern.permute.xlu0 0
      %1042 = vperm.xlu0 %1041, %v915
      %v1043 = vpop.permute.xlu0 %1042
      %v1044 = vlaneseq
      %v1045 = vshrl.u32 %v1044, 7
      %v1046 = vsub.s32 %v601, %v1045
      %v1047 = vrot.slane %v950, %v1046
      %v1048 = vlaneseq
      %v1049 = vshrl.u32 %v1048, 7
      %v1050 = vsub.s32 %v606, %v1049
      %v1051 = vrot.slane %v953, %v1050
      %v1052 = vsel %vm611, %v1051, %v1047
      %v1053 = vlaneseq
      %v1054 = vshrl.u32 %v1053, 7
      %v1055 = vsub.s32 %v613, %v1054
      %v1056 = vrot.slane %v956, %v1055
      %v1057 = vsel %vm618, %v1056, %v1052
      %v1058 = vlaneseq
      %v1059 = vshrl.u32 %v1058, 7
      %v1060 = vsub.s32 %v620, %v1059
      %v1061 = vrot.slane %v959, %v1060
      %v1062 = vsel %vm625, %v1061, %v1057
      %v1063 = vlaneseq
      %v1064 = vshrl.u32 %v1063, 7
      %v1065 = vsub.s32 %v601, %v1064
      %v1066 = vrot.slane %v962, %v1065
      %v1067 = vlaneseq
      %v1068 = vshrl.u32 %v1067, 7
      %v1069 = vsub.s32 %v606, %v1068
      %v1070 = vrot.slane %v965, %v1069
      %v1071 = vsel %vm611, %v1070, %v1066
      %v1072 = vlaneseq
      %v1073 = vshrl.u32 %v1072, 7
      %v1074 = vsub.s32 %v613, %v1073
      %v1075 = vrot.slane %v968, %v1074
      %v1076 = vsel %vm618, %v1075, %v1071
      %v1077 = vlaneseq
      %v1078 = vshrl.u32 %v1077, 7
      %v1079 = vsub.s32 %v620, %v1078
      %v1080 = vrot.slane %v971, %v1079
      %v1081 = vsel %vm625, %v1080, %v1076
      %v1082 = vlaneseq
      %v1083 = vshrl.u32 %v1082, 7
      %v1084 = vsub.s32 %v601, %v1083
      %v1085 = vrot.slane %v974, %v1084
      %v1086 = vlaneseq
      %v1087 = vshrl.u32 %v1086, 7
      %v1088 = vsub.s32 %v606, %v1087
      %v1089 = vrot.slane %v977, %v1088
      %v1090 = vsel %vm611, %v1089, %v1085
      %v1091 = vlaneseq
      %v1092 = vshrl.u32 %v1091, 7
      %v1093 = vsub.s32 %v613, %v1092
      %v1094 = vrot.slane %v980, %v1093
      %v1095 = vsel %vm618, %v1094, %v1090
      %v1096 = vlaneseq
      %v1097 = vshrl.u32 %v1096, 7
      %v1098 = vsub.s32 %v620, %v1097
      %v1099 = vrot.slane %v983, %v1098
      %v1100 = vsel %vm625, %v1099, %v1095
      %v1101 = vlaneseq
      %v1102 = vshrl.u32 %v1101, 7
      %v1103 = vsub.s32 %v601, %v1102
      %v1104 = vrot.slane %v986, %v1103
      %v1105 = vlaneseq
      %v1106 = vshrl.u32 %v1105, 7
      %v1107 = vsub.s32 %v606, %v1106
      %v1108 = vrot.slane %v989, %v1107
      %v1109 = vsel %vm611, %v1108, %v1104
      %v1110 = vlaneseq
      %v1111 = vshrl.u32 %v1110, 7
      %v1112 = vsub.s32 %v613, %v1111
      %v1113 = vrot.slane %v992, %v1112
      %v1114 = vsel %vm618, %v1113, %v1109
      %v1115 = vlaneseq
      %v1116 = vshrl.u32 %v1115, 7
      %v1117 = vsub.s32 %v620, %v1116
      %v1118 = vrot.slane %v995, %v1117
      %v1119 = vsel %vm625, %v1118, %v1114
      %v1120 = vlaneseq
      %v1121 = vshrl.u32 %v1120, 7
      %v1122 = vsub.s32 %v601, %v1121
      %v1123 = vrot.slane %v998, %v1122
      %v1124 = vlaneseq
      %v1125 = vshrl.u32 %v1124, 7
      %v1126 = vsub.s32 %v606, %v1125
      %v1127 = vrot.slane %v1001, %v1126
      %v1128 = vsel %vm611, %v1127, %v1123
      %v1129 = vlaneseq
      %v1130 = vshrl.u32 %v1129, 7
      %v1131 = vsub.s32 %v613, %v1130
      %v1132 = vrot.slane %v1004, %v1131
      %v1133 = vsel %vm618, %v1132, %v1128
      %v1134 = vlaneseq
      %v1135 = vshrl.u32 %v1134, 7
      %v1136 = vsub.s32 %v620, %v1135
      %v1137 = vrot.slane %v1007, %v1136
      %v1138 = vsel %vm625, %v1137, %v1133
      %v1139 = vlaneseq
      %v1140 = vshrl.u32 %v1139, 7
      %v1141 = vsub.s32 %v601, %v1140
      %v1142 = vrot.slane %v1010, %v1141
      %v1143 = vlaneseq
      %v1144 = vshrl.u32 %v1143, 7
      %v1145 = vsub.s32 %v606, %v1144
      %v1146 = vrot.slane %v1013, %v1145
      %v1147 = vsel %vm611, %v1146, %v1142
      %v1148 = vlaneseq
      %v1149 = vshrl.u32 %v1148, 7
      %v1150 = vsub.s32 %v613, %v1149
      %v1151 = vrot.slane %v1016, %v1150
      %v1152 = vsel %vm618, %v1151, %v1147
      %v1153 = vlaneseq
      %v1154 = vshrl.u32 %v1153, 7
      %v1155 = vsub.s32 %v620, %v1154
      %v1156 = vrot.slane %v1019, %v1155
      %v1157 = vsel %vm625, %v1156, %v1152
      %v1158 = vlaneseq
      %v1159 = vshrl.u32 %v1158, 7
      %v1160 = vsub.s32 %v601, %v1159
      %v1161 = vrot.slane %v1022, %v1160
      %v1162 = vlaneseq
      %v1163 = vshrl.u32 %v1162, 7
      %v1164 = vsub.s32 %v606, %v1163
      %v1165 = vrot.slane %v1025, %v1164
      %v1166 = vsel %vm611, %v1165, %v1161
      %v1167 = vlaneseq
      %v1168 = vshrl.u32 %v1167, 7
      %v1169 = vsub.s32 %v613, %v1168
      %v1170 = vrot.slane %v1028, %v1169
      %v1171 = vsel %vm618, %v1170, %v1166
      %v1172 = vlaneseq
      %v1173 = vshrl.u32 %v1172, 7
      %v1174 = vsub.s32 %v620, %v1173
      %v1175 = vrot.slane %v1031, %v1174
      %v1176 = vsel %vm625, %v1175, %v1171
      %v1177 = vlaneseq
      %v1178 = vshrl.u32 %v1177, 7
      %v1179 = vsub.s32 %v601, %v1178
      %v1180 = vrot.slane %v1034, %v1179
      %v1181 = vlaneseq
      %v1182 = vshrl.u32 %v1181, 7
      %v1183 = vsub.s32 %v606, %v1182
      %v1184 = vrot.slane %v1037, %v1183
      %v1185 = vsel %vm611, %v1184, %v1180
      %v1186 = vlaneseq
      %v1187 = vshrl.u32 %v1186, 7
      %v1188 = vsub.s32 %v613, %v1187
      %v1189 = vrot.slane %v1040, %v1188
      %v1190 = vsel %vm618, %v1189, %v1185
      %v1191 = vlaneseq
      %v1192 = vshrl.u32 %v1191, 7
      %v1193 = vsub.s32 %v620, %v1192
      %v1194 = vrot.slane %v1043, %v1193
      %v1195 = vsel %vm625, %v1194, %v1190
      %v1196 = vsel %vm760, %v1081, %v1062
      %v1197 = vsel %vm762, %v1100, %v1196
      %v1198 = vsel %vm764, %v1119, %v1197
      %v1199 = vsel %vm766, %v1138, %v1198
      %v1200 = vsel %vm768, %v1157, %v1199
      %v1201 = vsel %vm770, %v1176, %v1200
      %v1202 = vsel %vm772, %v1195, %v1201
      %v1204 = vsel %vm775, %v1202, 0.0
      %1205 = vadd.xlane.f32.xlu0 %v1204
      %v1206 = vpop.xlane.xlu0 %1205
      %v1207 = vrcp.pop %v1206
      %v1209 = vlaneseq
      %v1210 = vshrl.u32 %v1209, 7
      %v1211 = vsub.s32 0, %v1210
      %v1212 = vrot.slane %v1207, %v1211
      %v1213 = vlaneseq
      %v1214 = vshrl.u32 %v1213, 7
      %v1215 = vsub.s32 1, %v1214
      %v1216 = vrot.slane %v1207, %v1215
      %v1217 = vlaneseq
      %v1218 = vshrl.u32 %v1217, 7
      %v1219 = vsub.s32 2, %v1218
      %v1220 = vrot.slane %v1207, %v1219
      %v1221 = vlaneseq
      %v1222 = vshrl.u32 %v1221, 7
      %v1223 = vsub.s32 3, %v1222
      %v1224 = vrot.slane %v1207, %v1223
      %v1225 = vlaneseq
      %v1226 = vshrl.u32 %v1225, 7
      %v1227 = vsub.s32 4, %v1226
      %v1228 = vrot.slane %v1207, %v1227
      %v1229 = vlaneseq
      %v1230 = vshrl.u32 %v1229, 7
      %v1231 = vsub.s32 5, %v1230
      %v1232 = vrot.slane %v1207, %v1231
      %v1233 = vlaneseq
      %v1234 = vshrl.u32 %v1233, 7
      %v1235 = vsub.s32 6, %v1234
      %v1236 = vrot.slane %v1207, %v1235
      %v1237 = vlaneseq
      %v1238 = vshrl.u32 %v1237, 7
      %v1239 = vsub.s32 7, %v1238
      %v1240 = vrot.slane %v1207, %v1239
      %v1249 = vmul.f32 %v853, %v1212
      %v1250 = vmul.f32 %v855, %v1212
      %v1251 = vmul.f32 %v857, %v1212
      %v1252 = vmul.f32 %v859, %v1212
      %v1253 = vmul.f32 %v861, %v1216
      %v1254 = vmul.f32 %v863, %v1216
      %v1255 = vmul.f32 %v865, %v1216
      %v1256 = vmul.f32 %v867, %v1216
      %v1257 = vmul.f32 %v869, %v1220
      %v1258 = vmul.f32 %v871, %v1220
      %v1259 = vmul.f32 %v873, %v1220
      %v1260 = vmul.f32 %v875, %v1220
      %v1261 = vmul.f32 %v877, %v1224
      %v1262 = vmul.f32 %v879, %v1224
      %v1263 = vmul.f32 %v881, %v1224
      %v1264 = vmul.f32 %v883, %v1224
      %v1265 = vmul.f32 %v885, %v1228
      %v1266 = vmul.f32 %v887, %v1228
      %v1267 = vmul.f32 %v889, %v1228
      %v1268 = vmul.f32 %v891, %v1228
      %v1269 = vmul.f32 %v893, %v1232
      %v1270 = vmul.f32 %v895, %v1232
      %v1271 = vmul.f32 %v897, %v1232
      %v1272 = vmul.f32 %v899, %v1232
      %v1273 = vmul.f32 %v901, %v1236
      %v1274 = vmul.f32 %v903, %v1236
      %v1275 = vmul.f32 %v905, %v1236
      %v1276 = vmul.f32 %v907, %v1236
      %v1277 = vmul.f32 %v909, %v1240
      %v1278 = vmul.f32 %v911, %v1240
      %v1279 = vmul.f32 %v913, %v1240
      %v1280 = vmul.f32 %v915, %v1240
      %v1281 = vpack.c.bf16 %v1250, %v1249
      %v1282 = vpack.c.bf16 %v1252, %v1251
      %v1283 = vpack.c.bf16 %v1254, %v1253
      %v1284 = vpack.c.bf16 %v1256, %v1255
      %v1285 = vpack.c.bf16 %v1258, %v1257
      %v1286 = vpack.c.bf16 %v1260, %v1259
      %v1287 = vpack.c.bf16 %v1262, %v1261
      %v1288 = vpack.c.bf16 %v1264, %v1263
      %v1289 = vpack.c.bf16 %v1266, %v1265
      %v1290 = vpack.c.bf16 %v1268, %v1267
      %v1291 = vpack.c.bf16 %v1270, %v1269
      %v1292 = vpack.c.bf16 %v1272, %v1271
      %v1293 = vpack.c.bf16 %v1274, %v1273
      %v1294 = vpack.c.bf16 %v1276, %v1275
      %v1295 = vpack.c.bf16 %v1278, %v1277
      %v1296 = vpack.c.bf16 %v1280, %v1279
      %v1297 = vld [vmem:[%s256] sm:$0xf]
      %v1298 = vld [vmem:[%s256 + $0x4] sm:$0xf]
      %v1299 = vld [vmem:[%s256 + $0x8] sm:$0xf]
      %v1300 = vld [vmem:[%s256 + $0xc] sm:$0xf]
      %v1317 = vunpack.c.l.b16 %v1281
      %v1318 = vunpack.c.h.b16 %v1281
      %v1319 = vunpack.c.l.b16 %v1282
      %v1320 = vunpack.c.h.b16 %v1282
      %v1321 = vunpack.c.l.b16 %v1283
      %v1322 = vunpack.c.h.b16 %v1283
      %v1323 = vunpack.c.l.b16 %v1284
      %v1324 = vunpack.c.h.b16 %v1284
      %v1325 = vunpack.c.l.b16 %v1285
      %v1326 = vunpack.c.h.b16 %v1285
      %v1327 = vunpack.c.l.b16 %v1286
      %v1328 = vunpack.c.h.b16 %v1286
      %v1329 = vunpack.c.l.b16 %v1287
      %v1330 = vunpack.c.h.b16 %v1287
      %v1331 = vunpack.c.l.b16 %v1288
      %v1332 = vunpack.c.h.b16 %v1288
      %v1333 = vunpack.c.l.b16 %v1289
      %v1334 = vunpack.c.h.b16 %v1289
      %v1335 = vunpack.c.l.b16 %v1290
      %v1336 = vunpack.c.h.b16 %v1290
      %v1337 = vunpack.c.l.b16 %v1291
      %v1338 = vunpack.c.h.b16 %v1291
      %v1339 = vunpack.c.l.b16 %v1292
      %v1340 = vunpack.c.h.b16 %v1292
      %v1341 = vunpack.c.l.b16 %v1293
      %v1342 = vunpack.c.h.b16 %v1293
      %v1343 = vunpack.c.l.b16 %v1294
      %v1344 = vunpack.c.h.b16 %v1294
      %v1345 = vunpack.c.l.b16 %v1295
      %v1346 = vunpack.c.h.b16 %v1295
      %v1347 = vunpack.c.l.b16 %v1296
      %v1348 = vunpack.c.h.b16 %v1296
      %1349 = vset.pattern.permute.xlu0 0
      %1350 = vperm.xlu0 %1349, %v1317
      %v1351 = vpop.permute.xlu0 %1350
      %1352 = vset.pattern.permute.xlu0 0
      %1353 = vperm.xlu0 %1352, %v1318
      %v1354 = vpop.permute.xlu0 %1353
      %1355 = vset.pattern.permute.xlu0 0
      %1356 = vperm.xlu0 %1355, %v1319
      %v1357 = vpop.permute.xlu0 %1356
      %1358 = vset.pattern.permute.xlu0 0
      %1359 = vperm.xlu0 %1358, %v1320
      %v1360 = vpop.permute.xlu0 %1359
      %1361 = vset.pattern.permute.xlu0 0
      %1362 = vperm.xlu0 %1361, %v1321
      %v1363 = vpop.permute.xlu0 %1362
      %1364 = vset.pattern.permute.xlu0 0
      %1365 = vperm.xlu0 %1364, %v1322
      %v1366 = vpop.permute.xlu0 %1365
      %1367 = vset.pattern.permute.xlu0 0
      %1368 = vperm.xlu0 %1367, %v1323
      %v1369 = vpop.permute.xlu0 %1368
      %1370 = vset.pattern.permute.xlu0 0
      %1371 = vperm.xlu0 %1370, %v1324
      %v1372 = vpop.permute.xlu0 %1371
      %1373 = vset.pattern.permute.xlu0 0
      %1374 = vperm.xlu0 %1373, %v1325
      %v1375 = vpop.permute.xlu0 %1374
      %1376 = vset.pattern.permute.xlu0 0
      %1377 = vperm.xlu0 %1376, %v1326
      %v1378 = vpop.permute.xlu0 %1377
      %1379 = vset.pattern.permute.xlu0 0
      %1380 = vperm.xlu0 %1379, %v1327
      %v1381 = vpop.permute.xlu0 %1380
      %1382 = vset.pattern.permute.xlu0 0
      %1383 = vperm.xlu0 %1382, %v1328
      %v1384 = vpop.permute.xlu0 %1383
      %1385 = vset.pattern.permute.xlu0 0
      %1386 = vperm.xlu0 %1385, %v1329
      %v1387 = vpop.permute.xlu0 %1386
      %1388 = vset.pattern.permute.xlu0 0
      %1389 = vperm.xlu0 %1388, %v1330
      %v1390 = vpop.permute.xlu0 %1389
      %1391 = vset.pattern.permute.xlu0 0
      %1392 = vperm.xlu0 %1391, %v1331
      %v1393 = vpop.permute.xlu0 %1392
      %1394 = vset.pattern.permute.xlu0 0
      %1395 = vperm.xlu0 %1394, %v1332
      %v1396 = vpop.permute.xlu0 %1395
      %1397 = vset.pattern.permute.xlu0 0
      %1398 = vperm.xlu0 %1397, %v1333
      %v1399 = vpop.permute.xlu0 %1398
      %1400 = vset.pattern.permute.xlu0 0
      %1401 = vperm.xlu0 %1400, %v1334
      %v1402 = vpop.permute.xlu0 %1401
      %1403 = vset.pattern.permute.xlu0 0
      %1404 = vperm.xlu0 %1403, %v1335
      %v1405 = vpop.permute.xlu0 %1404
      %1406 = vset.pattern.permute.xlu0 0
      %1407 = vperm.xlu0 %1406, %v1336
      %v1408 = vpop.permute.xlu0 %1407
      %1409 = vset.pattern.permute.xlu0 0
      %1410 = vperm.xlu0 %1409, %v1337
      %v1411 = vpop.permute.xlu0 %1410
      %1412 = vset.pattern.permute.xlu0 0
      %1413 = vperm.xlu0 %1412, %v1338
      %v1414 = vpop.permute.xlu0 %1413
      %1415 = vset.pattern.permute.xlu0 0
      %1416 = vperm.xlu0 %1415, %v1339
      %v1417 = vpop.permute.xlu0 %1416
      %1418 = vset.pattern.permute.xlu0 0
      %1419 = vperm.xlu0 %1418, %v1340
      %v1420 = vpop.permute.xlu0 %1419
      %1421 = vset.pattern.permute.xlu0 0
      %1422 = vperm.xlu0 %1421, %v1341
      %v1423 = vpop.permute.xlu0 %1422
      %1424 = vset.pattern.permute.xlu0 0
      %1425 = vperm.xlu0 %1424, %v1342
      %v1426 = vpop.permute.xlu0 %1425
      %1427 = vset.pattern.permute.xlu0 0
      %1428 = vperm.xlu0 %1427, %v1343
      %v1429 = vpop.permute.xlu0 %1428
      %1430 = vset.pattern.permute.xlu0 0
      %1431 = vperm.xlu0 %1430, %v1344
      %v1432 = vpop.permute.xlu0 %1431
      %1433 = vset.pattern.permute.xlu0 0
      %1434 = vperm.xlu0 %1433, %v1345
      %v1435 = vpop.permute.xlu0 %1434
      %1436 = vset.pattern.permute.xlu0 0
      %1437 = vperm.xlu0 %1436, %v1346
      %v1438 = vpop.permute.xlu0 %1437
      %1439 = vset.pattern.permute.xlu0 0
      %1440 = vperm.xlu0 %1439, %v1347
      %v1441 = vpop.permute.xlu0 %1440
      %1442 = vset.pattern.permute.xlu0 0
      %1443 = vperm.xlu0 %1442, %v1348
      %v1444 = vpop.permute.xlu0 %1443
      %v1445 = vlaneseq
      %v1446 = vshrl.u32 %v1445, 7
      %v1447 = vsub.s32 %v601, %v1446
      %v1448 = vrot.slane %v1351, %v1447
      %v1449 = vlaneseq
      %v1450 = vshrl.u32 %v1449, 7
      %v1451 = vsub.s32 %v606, %v1450
      %v1452 = vrot.slane %v1354, %v1451
      %v1453 = vsel %vm611, %v1452, %v1448
      %v1454 = vlaneseq
      %v1455 = vshrl.u32 %v1454, 7
      %v1456 = vsub.s32 %v613, %v1455
      %v1457 = vrot.slane %v1357, %v1456
      %v1458 = vsel %vm618, %v1457, %v1453
      %v1459 = vlaneseq
      %v1460 = vshrl.u32 %v1459, 7
      %v1461 = vsub.s32 %v620, %v1460
      %v1462 = vrot.slane %v1360, %v1461
      %v1463 = vsel %vm625, %v1462, %v1458
      %v1464 = vlaneseq
      %v1465 = vshrl.u32 %v1464, 7
      %v1466 = vsub.s32 %v601, %v1465
      %v1467 = vrot.slane %v1363, %v1466
      %v1468 = vlaneseq
      %v1469 = vshrl.u32 %v1468, 7
      %v1470 = vsub.s32 %v606, %v1469
      %v1471 = vrot.slane %v1366, %v1470
      %v1472 = vsel %vm611, %v1471, %v1467
      %v1473 = vlaneseq
      %v1474 = vshrl.u32 %v1473, 7
      %v1475 = vsub.s32 %v613, %v1474
      %v1476 = vrot.slane %v1369, %v1475
      %v1477 = vsel %vm618, %v1476, %v1472
      %v1478 = vlaneseq
      %v1479 = vshrl.u32 %v1478, 7
      %v1480 = vsub.s32 %v620, %v1479
      %v1481 = vrot.slane %v1372, %v1480
      %v1482 = vsel %vm625, %v1481, %v1477
      %v1483 = vlaneseq
      %v1484 = vshrl.u32 %v1483, 7
      %v1485 = vsub.s32 %v601, %v1484
      %v1486 = vrot.slane %v1375, %v1485
      %v1487 = vlaneseq
      %v1488 = vshrl.u32 %v1487, 7
      %v1489 = vsub.s32 %v606, %v1488
      %v1490 = vrot.slane %v1378, %v1489
      %v1491 = vsel %vm611, %v1490, %v1486
      %v1492 = vlaneseq
      %v1493 = vshrl.u32 %v1492, 7
      %v1494 = vsub.s32 %v613, %v1493
      %v1495 = vrot.slane %v1381, %v1494
      %v1496 = vsel %vm618, %v1495, %v1491
      %v1497 = vlaneseq
      %v1498 = vshrl.u32 %v1497, 7
      %v1499 = vsub.s32 %v620, %v1498
      %v1500 = vrot.slane %v1384, %v1499
      %v1501 = vsel %vm625, %v1500, %v1496
      %v1502 = vlaneseq
      %v1503 = vshrl.u32 %v1502, 7
      %v1504 = vsub.s32 %v601, %v1503
      %v1505 = vrot.slane %v1387, %v1504
      %v1506 = vlaneseq
      %v1507 = vshrl.u32 %v1506, 7
      %v1508 = vsub.s32 %v606, %v1507
      %v1509 = vrot.slane %v1390, %v1508
      %v1510 = vsel %vm611, %v1509, %v1505
      %v1511 = vlaneseq
      %v1512 = vshrl.u32 %v1511, 7
      %v1513 = vsub.s32 %v613, %v1512
      %v1514 = vrot.slane %v1393, %v1513
      %v1515 = vsel %vm618, %v1514, %v1510
      %v1516 = vlaneseq
      %v1517 = vshrl.u32 %v1516, 7
      %v1518 = vsub.s32 %v620, %v1517
      %v1519 = vrot.slane %v1396, %v1518
      %v1520 = vsel %vm625, %v1519, %v1515
      %v1521 = vlaneseq
      %v1522 = vshrl.u32 %v1521, 7
      %v1523 = vsub.s32 %v601, %v1522
      %v1524 = vrot.slane %v1399, %v1523
      %v1525 = vlaneseq
      %v1526 = vshrl.u32 %v1525, 7
      %v1527 = vsub.s32 %v606, %v1526
      %v1528 = vrot.slane %v1402, %v1527
      %v1529 = vsel %vm611, %v1528, %v1524
      %v1530 = vlaneseq
      %v1531 = vshrl.u32 %v1530, 7
      %v1532 = vsub.s32 %v613, %v1531
      %v1533 = vrot.slane %v1405, %v1532
      %v1534 = vsel %vm618, %v1533, %v1529
      %v1535 = vlaneseq
      %v1536 = vshrl.u32 %v1535, 7
      %v1537 = vsub.s32 %v620, %v1536
      %v1538 = vrot.slane %v1408, %v1537
      %v1539 = vsel %vm625, %v1538, %v1534
      %v1540 = vlaneseq
      %v1541 = vshrl.u32 %v1540, 7
      %v1542 = vsub.s32 %v601, %v1541
      %v1543 = vrot.slane %v1411, %v1542
      %v1544 = vlaneseq
      %v1545 = vshrl.u32 %v1544, 7
      %v1546 = vsub.s32 %v606, %v1545
      %v1547 = vrot.slane %v1414, %v1546
      %v1548 = vsel %vm611, %v1547, %v1543
      %v1549 = vlaneseq
      %v1550 = vshrl.u32 %v1549, 7
      %v1551 = vsub.s32 %v613, %v1550
      %v1552 = vrot.slane %v1417, %v1551
      %v1553 = vsel %vm618, %v1552, %v1548
      %v1554 = vlaneseq
      %v1555 = vshrl.u32 %v1554, 7
      %v1556 = vsub.s32 %v620, %v1555
      %v1557 = vrot.slane %v1420, %v1556
      %v1558 = vsel %vm625, %v1557, %v1553
      %v1559 = vlaneseq
      %v1560 = vshrl.u32 %v1559, 7
      %v1561 = vsub.s32 %v601, %v1560
      %v1562 = vrot.slane %v1423, %v1561
      %v1563 = vlaneseq
      %v1564 = vshrl.u32 %v1563, 7
      %v1565 = vsub.s32 %v606, %v1564
      %v1566 = vrot.slane %v1426, %v1565
      %v1567 = vsel %vm611, %v1566, %v1562
      %v1568 = vlaneseq
      %v1569 = vshrl.u32 %v1568, 7
      %v1570 = vsub.s32 %v613, %v1569
      %v1571 = vrot.slane %v1429, %v1570
      %v1572 = vsel %vm618, %v1571, %v1567
      %v1573 = vlaneseq
      %v1574 = vshrl.u32 %v1573, 7
      %v1575 = vsub.s32 %v620, %v1574
      %v1576 = vrot.slane %v1432, %v1575
      %v1577 = vsel %vm625, %v1576, %v1572
      %v1578 = vlaneseq
      %v1579 = vshrl.u32 %v1578, 7
      %v1580 = vsub.s32 %v601, %v1579
      %v1581 = vrot.slane %v1435, %v1580
      %v1582 = vlaneseq
      %v1583 = vshrl.u32 %v1582, 7
      %v1584 = vsub.s32 %v606, %v1583
      %v1585 = vrot.slane %v1438, %v1584
      %v1586 = vsel %vm611, %v1585, %v1581
      %v1587 = vlaneseq
      %v1588 = vshrl.u32 %v1587, 7
      %v1589 = vsub.s32 %v613, %v1588
      %v1590 = vrot.slane %v1441, %v1589
      %v1591 = vsel %vm618, %v1590, %v1586
      %v1592 = vlaneseq
      %v1593 = vshrl.u32 %v1592, 7
      %v1594 = vsub.s32 %v620, %v1593
      %v1595 = vrot.slane %v1444, %v1594
      %v1596 = vsel %vm625, %v1595, %v1591
      %v1597 = vsel %vm760, %v1482, %v1463
      %v1598 = vsel %vm762, %v1501, %v1597
      %v1599 = vsel %vm764, %v1520, %v1598
      %v1600 = vsel %vm766, %v1539, %v1599
      %v1601 = vsel %vm768, %v1558, %v1600
      %v1602 = vsel %vm770, %v1577, %v1601
      %v1603 = vsel %vm772, %v1596, %v1602
      %v1604 = vpack.c.b16 %v1603, %v1603
      %v1609 = vunpack.c.l.b16 %v1297
      %v1610 = vunpack.c.l.b16 %v1298
      %v1611 = vunpack.c.l.b16 %v1299
      %v1612 = vunpack.c.l.b16 %v1300
      %v1613 = vpack.c.b16 %v1610, %v1609
      %v1614 = vpack.c.b16 %v1612, %v1611
      %v1616 = vsel %vm775, %v1604, 0
      %v1619 = vsel %vm775, %v1613, 0
      %v1622 = vsel %vm775, %v1614, 0
      %1624 = vmatprep.subr.bf16.mxu0 0
      %1625 = vmatpush1.bf16.xpose.msra.mxu0 %v1619
      %1626 = vmatprep.subr.bf16.mxu0 0
      %1627 = vmatpush1.bf16.xpose.msra.mxu0 %v1622
      %1628 = vmatprep.subr.bf16.mxu0 0
      %1629 = vmatpush1.bf16.xpose.msra.mxu0 0
      %1630 = vmatprep.subr.bf16.mxu0 0
      %1631 = vmatpush1.bf16.xpose.msra.mxu0 0
      %1632 = vmatprep.subr.bf16.mxu0 0
      %1633 = vmatpush1.bf16.xpose.msra.mxu0 0
      %1634 = vmatprep.subr.bf16.mxu0 0
      %1635 = vmatpush1.bf16.xpose.msra.mxu0 0
      %1636 = vmatprep.subr.bf16.mxu0 0
      %1637 = vmatpush1.bf16.xpose.msra.mxu0 0
      %1638 = vmatprep.subr.bf16.mxu0 0
      %1639 = vmatpush1.bf16.xpose.msra.mxu0 0
      %1640 = vmatprep.subr.bf16.mxu0 0
      %1641 = vmatpush1.bf16.xpose.msra.mxu0 0
      %1642 = vmatprep.subr.bf16.mxu0 0
      %1643 = vmatpush1.bf16.xpose.msra.mxu0 0
      %1644 = vmatprep.subr.bf16.mxu0 0
      %1645 = vmatpush1.bf16.xpose.msra.mxu0 0
      %1646 = vmatprep.subr.bf16.mxu0 0
      %1647 = vmatpush1.bf16.xpose.msra.mxu0 0
      %1648 = vmatprep.subr.bf16.mxu0 0
      %1649 = vmatpush1.bf16.xpose.msra.mxu0 0
      %1650 = vmatprep.subr.bf16.mxu0 0
      %1651 = vmatpush1.bf16.xpose.msra.mxu0 0
      %1652 = vmatprep.subr.bf16.mxu0 0
      %1653 = vmatpush1.bf16.xpose.msra.mxu0 0
      %1654 = vmatprep.subr.bf16.mxu0 0
      %1655 = vmatpush1.bf16.xpose.msra.mxu0 0
      %1656 = vmatprep.mubr.bf16.mxu0 0
      %1657 = vmatmul.mubr.bf16.gmra.mrb[0].mxu0 %v1616
      %v1658 = vpop.f32.mrb[0].mxu0
      %v1659 = vadd.f32 0.0, %v1658
      %v1660 = vpop.f32.mrb[0].mxu0
      %v1661 = vpop.f32.mrb[0].mxu0
      %v1662 = vpop.f32.mrb[0].mxu0
      %1663 = vdwg.mxu0
      %v1664 = vpack.c.bf16 %v1659, %v1659
      %vm1665 = vcmask 257024
      %1666 = vst.msk [vmem:[%s263] sm:$0xf] %vm1665, %v1664
      %p1667 = scmp.lt.s32.totalorder %s19, 1
      %s1668 = scalar_select %p1667, %s19, 1
      %p1669 = scmp.lt.s32.totalorder %s20, 0
      %s1670 = scalar_select %p1669, %s20, 0
      %s1671 = sadd.s32 %s1670, %s1668
      %s1672 = smul.addr %s1671, 4
      %s1673 = scalar_lea.vmem %s4, %s1672
      // Predicated region
      $region37: #{sar_head_forward.24} parent=35 // pred_check
        %p1674 = pneg %p148
      $region38: #{sar_head_forward.24} parent=35 // pred_check_branch
        %1676 = sbr.rel (%p1674) target = $region40
      $region39: #{sar_head_forward.24} parent=35 // pred_region
        _
      $region40: #{sar_head_forward.24} parent=35 // pred_fallthru
        _
    $region36: #{sar_head_forward.24} parent=5 // pred_fallthru
      _
    %p1677 = scmp.le.s32.totalorder 2, %s10
    // Predicated region
    $region41: #{sar_head_forward.24} parent=5 // pred_check
      %p1678 = pneg %p1677
    $region42: #{sar_head_forward.24} parent=5 // pred_check_branch
      %1680 = sbr.rel (%p1678) target = $region44
    $region43: #{sar_head_forward.24} parent=5 // pred_region
      %s1681 = ssub.s32 %s10, 2
      // Predicated region
      $region45: #{sar_head_forward.24} parent=43 // pred_check
        %p1682 = pneg %p154
      $region46: #{sar_head_forward.24} parent=43 // pred_check_branch
        %1684 = sbr.rel (%p1682) target = $region48
      $region47: #{sar_head_forward.24} parent=43 // pred_region
        %p1685 = scmp.lt.s32.totalorder %s21, 1
        %s1686 = scalar_select %p1685, %s21, 1
        %p1687 = scmp.lt.s32.totalorder %s22, 0
        %s1688 = scalar_select %p1687, %s22, 0
        %s1689 = sadd.s32 %s1688, %s1686
        %s1690 = smul.addr %s1689, 4
        %s1691 = scalar_lea.vmem %s4, %s1690
      $region48: #{sar_head_forward.24} parent=43 // pred_fallthru
        _
    $region44: #{sar_head_forward.24} parent=5 // pred_fallthru
      _
  $region6: #{sar_head_forward.24} parent=0 // loop_footer
    %s14 = sadd.s32 1, %s10
  $region7: #{sar_head_forward.24} parent=0 // loop_footer_branch
    %9 = sbr.rel target = $region3
  $region8: #{sar_head_forward.24} parent=0 // loop_exit
    _

// kernel: sar_head_forward.23
$region0: #{sar_head_forward.23}
  #allocation0 [shape = 'u32[]', space=smem, size = 0x4, offset = 0x4, fixed_abs, tag = 'smem constant byte address 0x4 - core index']
  #allocation1 [shape = 'u32[144,128]{1,0:T(1,128)}', space=vmem, size = 0x12000, scoped, tag = 'internal scratch']
  %s0 = inlined_call_operand.vmem [shape: bf16[2,70,32], index: 0, kind: input, shape index: {}]
  %s1 = inlined_call_operand.vmem [shape: bf16[9,32,128], index: 1, kind: input, shape index: {}]
  %s2 = inlined_call_operand.vmem [shape: f32[1,128], index: 2, kind: input, shape index: {}]
  %s3 = inlined_call_operand.vmem [shape: f32[2,40,128], index: 3, kind: output, shape index: {}]
  %s4 = sld [smem:[#allocation0]]
  $region45: #{sar_head_forward.23} parent=0
    _
  %s6 = ssub.s32 1, %s4
  %s7 = scalar_select 0, %s6, %s4
  loop: start=0, step=1, limit=4
  $region2: #{sar_head_forward.23} parent=0 // loop_pre_header
    _
  $region3: #{sar_head_forward.23} parent=0 // loop_header
    %s9 = sphi 0, %s13
    %p10 = scmp.ge.s32.totalorder %s9, 4
    %s19 = sphi 0, %s21
    %s22 = sphi 0, %s19
    %s23 = sphi 0, %s22
    %s39 = sphi 0, %s23
    %s43 = sphi 0, %s43
    %s45 = sphi 0, %s43
    %s46 = sphi 0, %s45
    %s60 = sphi 0, %s46
    %s64 = sphi 0, %s64
    %s66 = sphi 0, %s64
    %s67 = sphi 0, %s66
    %s81 = sphi 0, %s67
    %s87 = sphi 0, %s89
    %s90 = sphi 0, %s87
    %s91 = sphi 0, %s90
    %s107 = sphi 0, %s91
  $region4: #{sar_head_forward.23} parent=0 // loop_header_branch
    %12 = sbr.rel (%p10) target = $region8
  $region5: #{sar_head_forward.23} parent=0 // loop_body
    %s14 = ssub.s32 %s9, 1
    %s15 = ssub.s32 %s9, 2
    %s16 = sadd.s32 %s9, 1
    %s17 = ssub.s32 %s9, %s16
    %p18 = scmp.eq.s32.totalorder %s17, 0
    %s20 = sadd.s32 %s19, 1
    %s21 = scalar_select %p18, %s19, %s20
    %p24 = pneg %p18
    %p25 = scmp.eq.s32.totalorder %s9, 1
    %p26 = por %p24, %p25
    %p27 = scmp.ne.s32.totalorder %s19, %s22
    %p28 = scmp.eq.s32.totalorder %s9, 0
    %p29 = por %p27, %p28
    %p30 = scmp.ne.s32.totalorder %s19, %s22
    %p31 = scmp.eq.s32.totalorder %s14, 1
    %p32 = por %p30, %p31
    %p33 = scmp.ne.s32.totalorder %s22, %s23
    %p34 = scmp.eq.s32.totalorder %s14, 0
    %p35 = por %p33, %p34
    %p36 = scmp.ne.s32.totalorder %s22, %s23
    %p37 = scmp.eq.s32.totalorder %s15, 1
    %p38 = por %p36, %p37
    %p40 = scmp.ne.s32.totalorder %s23, %s39
    %p41 = scmp.eq.s32.totalorder %s15, 0
    %p42 = por %p40, %p41
    %s44 = sadd.s32 %s43, 1
    %p47 = scmp.eq.s32.totalorder %s9, 1
    %p48 = scmp.ne.s32.totalorder %s43, %s45
    %p49 = scmp.eq.s32.totalorder %s9, 0
    %p50 = por %p48, %p49
    %p51 = scmp.ne.s32.totalorder %s43, %s45
    %p52 = scmp.eq.s32.totalorder %s14, 1
    %p53 = por %p51, %p52
    %p54 = scmp.ne.s32.totalorder %s45, %s46
    %p55 = scmp.eq.s32.totalorder %s14, 0
    %p56 = por %p54, %p55
    %p57 = scmp.ne.s32.totalorder %s45, %s46
    %p58 = scmp.eq.s32.totalorder %s15, 1
    %p59 = por %p57, %p58
    %p61 = scmp.ne.s32.totalorder %s46, %s60
    %p62 = scmp.eq.s32.totalorder %s15, 0
    %p63 = por %p61, %p62
    %s65 = sadd.s32 %s64, 1
    %p68 = scmp.eq.s32.totalorder %s9, 1
    %p69 = scmp.ne.s32.totalorder %s64, %s66
    %p70 = scmp.eq.s32.totalorder %s9, 0
    %p71 = por %p69, %p70
    %p72 = scmp.ne.s32.totalorder %s64, %s66
    %p73 = scmp.eq.s32.totalorder %s14, 1
    %p74 = por %p72, %p73
    %p75 = scmp.ne.s32.totalorder %s66, %s67
    %p76 = scmp.eq.s32.totalorder %s14, 0
    %p77 = por %p75, %p76
    %p78 = scmp.ne.s32.totalorder %s66, %s67
    %p79 = scmp.eq.s32.totalorder %s15, 1
    %p80 = por %p78, %p79
    %p82 = scmp.ne.s32.totalorder %s67, %s81
    %p83 = scmp.eq.s32.totalorder %s15, 0
    %p84 = por %p82, %p83
    %s85 = ssub.s32 %s9, %s16
    %p86 = scmp.eq.s32.totalorder %s85, 0
    %s88 = sadd.s32 %s87, 1
    %s89 = scalar_select %p86, %s87, %s88
    %p92 = pneg %p86
    %p93 = scmp.eq.s32.totalorder %s9, 1
    %p94 = por %p92, %p93
    %p95 = scmp.ne.s32.totalorder %s87, %s90
    %p96 = scmp.eq.s32.totalorder %s9, 0
    %p97 = por %p95, %p96
    %p98 = scmp.ne.s32.totalorder %s87, %s90
    %p99 = scmp.eq.s32.totalorder %s14, 1
    %p100 = por %p98, %p99
    %p101 = scmp.ne.s32.totalorder %s90, %s91
    %p102 = scmp.eq.s32.totalorder %s14, 0
    %p103 = por %p101, %p102
    %p104 = scmp.ne.s32.totalorder %s90, %s91
    %p105 = scmp.eq.s32.totalorder %s15, 1
    %p106 = por %p104, %p105
    %p108 = scmp.ne.s32.totalorder %s91, %s107
    %p109 = scmp.eq.s32.totalorder %s15, 0
    %p110 = por %p108, %p109
    %p111 = scmp.le.s32.totalorder 1, %s9
    %p112 = scmp.lt.s32.totalorder %s9, 3
    %p113 = pnand %p111, %p112
    %p114 = pneg %p113
    // Predicated region
    $region9: #{sar_head_forward.23} parent=5 // pred_check
      _
    $region10: #{sar_head_forward.23} parent=5 // pred_check_branch
      %116 = sbr.rel (%p113) target = $region12
    $region11: #{sar_head_forward.23} parent=5 // pred_region
      %s117 = ssub.s32 %s9, 1
      // Predicated region
      $region13: #{sar_head_forward.23} parent=11 // pred_check
        %p118 = pneg %p56
      $region14: #{sar_head_forward.23} parent=11 // pred_check_branch
        %120 = sbr.rel (%p118) target = $region16
      $region15: #{sar_head_forward.23} parent=11 // pred_region
        _
      $region16: #{sar_head_forward.23} parent=11 // pred_fallthru
        _
      // Predicated region
      $region17: #{sar_head_forward.23} parent=11 // pred_check
        %p121 = pneg %p77
      $region18: #{sar_head_forward.23} parent=11 // pred_check_branch
        %123 = sbr.rel (%p121) target = $region20
      $region19: #{sar_head_forward.23} parent=11 // pred_region
        _
      $region20: #{sar_head_forward.23} parent=11 // pred_fallthru
        _
    $region12: #{sar_head_forward.23} parent=5 // pred_fallthru
      _
    %p124 = scmp.lt.s32.totalorder %s9, 2
    // Predicated region
    $region21: #{sar_head_forward.23} parent=5 // pred_check
      %p125 = pneg %p124
    $region22: #{sar_head_forward.23} parent=5 // pred_check_branch
      %127 = sbr.rel (%p125) target = $region24
    $region23: #{sar_head_forward.23} parent=5 // pred_region
      // Predicated region
      $region25: #{sar_head_forward.23} parent=23 // pred_check
        %p128 = pneg %p29
      $region26: #{sar_head_forward.23} parent=23 // pred_check_branch
        %130 = sbr.rel (%p128) target = $region28
      $region27: #{sar_head_forward.23} parent=23 // pred_region
        %p131 = scmp.lt.s32.totalorder %s9, 1
        %s132 = scalar_select %p131, %s9, 1
        %s133 = smul.addr %s132, 9
        %s134 = smul.addr %s133, 4
        %s135 = scalar_lea.vmem %s0, %s134
      $region28: #{sar_head_forward.23} parent=23 // pred_fallthru
        _
    $region24: #{sar_head_forward.23} parent=5 // pred_fallthru
      _
    %p136 = scmp.le.s32.totalorder 1, %s9
    %p137 = scmp.lt.s32.totalorder %s9, 3
    %p138 = pnand %p136, %p137
    %p139 = pneg %p138
    // Predicated region
    $region29: #{sar_head_forward.23} parent=5 // pred_check
      _
    $region30: #{sar_head_forward.23} parent=5 // pred_check_branch
      %141 = sbr.rel (%p138) target = $region32
    $region31: #{sar_head_forward.23} parent=5 // pred_region
      %s142 = ssub.s32 %s9, 1
      %p143 = scmp.lt.s32.totalorder %s14, 1
      %s144 = scalar_select %p143, %s14, 1
      %s145 = smul.addr %s144, 9
      %s146 = smul.addr %s145, 4
      %s147 = scalar_lea.vmem %s0, %s146
      %p148 = pneg %p35
      %p149 = pneg %p32
      %p150 = pneg %p56
      %p151 = pneg %p53
      %p152 = pneg %p77
      %p153 = pneg %p74
      %p154 = pneg %p103
      %p155 = pneg %p100
      %p156 = scmp.lt.s32.totalorder %s14, 1
      %s157 = scalar_select %p156, %s14, 1
      %s158 = smul.addr %s157, 5
      %s159 = smul.addr %s158, 8
      %s160 = scalar_lea.vmem %s3, %s159
      %p161 = scmp.lt.s32.totalorder %s14, 1
      %s162 = scalar_select %p161, %s14, 1
      %s163 = smul.addr %s162, 9
      %s164 = smul.addr %s163, 4
      %s165 = scalar_lea.vmem %s0, %s164
      %p166 = scmp.lt.s32.totalorder %s14, 1
      %s167 = scalar_select %p166, %s14, 1
      %s168 = smul.addr %s167, 5
      %s169 = smul.addr %s168, 8
      %s170 = scalar_lea.vmem %s3, %s169
      %v172 = vld [vmem:[%s2] sm:$0x1]
      %v174 = vlaneseq
      %v175 = vshrl.u32 %v174, 7
      %v176 = vsub.s32 0, %v175
      %v177 = vrot.slane %v172, %v176
      %179 = vst [vmem:[%s170] sm:$0xff] %v177
      %180 = vst [vmem:[%s170 + $0x8] sm:$0xff] %v177
      %181 = vst [vmem:[%s170 + $0x10] sm:$0xff] %v177
      %182 = vst [vmem:[%s170 + $0x18] sm:$0xff] %v177
      %183 = vst [vmem:[%s170 + $0x20] sm:$0xff] %v177
      %v184 = vld [vmem:[%s165] sm:$0xf]
      %v185 = vld [vmem:[%s165 + $0x4] sm:$0xf]
      %v186 = vld [vmem:[%s165 + $0x8] sm:$0xf]
      %v187 = vld [vmem:[%s165 + $0xc] sm:$0xf]
      %v188 = vld [vmem:[%s165 + $0x10] sm:$0xf]
      %v189 = vld [vmem:[%s170] sm:$0xff]
      %v190 = vld [vmem:[%s170 + $0x8] sm:$0xff]
      %v191 = vld [vmem:[%s170 + $0x10] sm:$0xff]
      %v192 = vld [vmem:[%s170 + $0x18] sm:$0xff]
      %v193 = vld [vmem:[%s170 + $0x20] sm:$0xff]
      %v194 = vld [vmem:[%s1] sm:$0xf]
      %v195 = vld [vmem:[%s1 + $0x4] sm:$0xf]
      %v196 = vld [vmem:[%s1 + $0x8] sm:$0xf]
      %v197 = vld [vmem:[%s1 + $0xc] sm:$0xf]
      %v203 = vunpack.c.l.b16 %v184
      %v204 = vunpack.c.l.b16 %v185
      %v205 = vunpack.c.l.b16 %v186
      %v206 = vunpack.c.l.b16 %v187
      %v207 = vunpack.c.l.b16 %v188
      %v208 = vpack.c.b16 %v204, %v203
      %v209 = vpack.c.b16 %v206, %v205
      %v210 = vpack.c.b16 %v207, %v207
      %v215 = vunpack.c.l.b16 %v194
      %v216 = vunpack.c.l.b16 %v195
      %v217 = vunpack.c.l.b16 %v196
      %v218 = vunpack.c.l.b16 %v197
      %v219 = vpack.c.b16 %v216, %v215
      %v220 = vpack.c.b16 %v218, %v217
      %vm223 = vcmask 261120
      %v225 = vsel %vm223, %v208, 0
      %v228 = vsel %vm223, %v209, 0
      %v231 = vsel %vm223, %v210, 0
      %233 = vmatprep.subr.bf16.mxu0 0
      %234 = vmatpush1.bf16.msra.mxu0 %v219
      %235 = vmatprep.subr.bf16.mxu0 0
      %236 = vmatpush1.bf16.msra.mxu0 %v220
      %237 = vmatprep.subr.bf16.mxu0 0
      %238 = vmatpush1.bf16.msra.mxu0 0
      %239 = vmatprep.subr.bf16.mxu0 0
      %240 = vmatpush1.bf16.msra.mxu0 0
      %241 = vmatprep.subr.bf16.mxu0 0
      %242 = vmatpush1.bf16.msra.mxu0 0
      %243 = vmatprep.subr.bf16.mxu0 0
      %244 = vmatpush1.bf16.msra.mxu0 0
      %245 = vmatprep.subr.bf16.mxu0 0
      %246 = vmatpush1.bf16.msra.mxu0 0
      %247 = vmatprep.subr.bf16.mxu0 0
      %248 = vmatpush1.bf16.msra.mxu0 0
      %249 = vmatprep.subr.bf16.mxu0 0
      %250 = vmatpush1.bf16.msra.mxu0 0
      %251 = vmatprep.subr.bf16.mxu0 0
      %252 = vmatpush1.bf16.msra.mxu0 0
      %253 = vmatprep.subr.bf16.mxu0 0
      %254 = vmatpush1.bf16.msra.mxu0 0
      %255 = vmatprep.subr.bf16.mxu0 0
      %256 = vmatpush1.bf16.msra.mxu0 0
      %257 = vmatprep.subr.bf16.mxu0 0
      %258 = vmatpush1.bf16.msra.mxu0 0
      %259 = vmatprep.subr.bf16.mxu0 0
      %260 = vmatpush1.bf16.msra.mxu0 0
      %261 = vmatprep.subr.bf16.mxu0 0
      %262 = vmatpush1.bf16.msra.mxu0 0
      %263 = vmatprep.subr.bf16.mxu0 0
      %264 = vmatpush1.bf16.msra.mxu0 0
      %265 = vmatprep.mubr.bf16.mxu0 0
      %266 = vmatmul.mubr.bf16.gmra.mrb[0].mxu0 %v225
      %v267 = vpop.f32.mrb[0].mxu0
      %v268 = vadd.f32 0.0, %v267
      %v269 = vpop.f32.mrb[0].mxu0
      %v270 = vpop.f32.mrb[0].mxu0
      %v271 = vadd.f32 0.0, %v270
      %v272 = vpop.f32.mrb[0].mxu0
      %273 = vmatprep.mubr.bf16.mxu0 0
      %274 = vmatmul.mubr.bf16.gmra.mrb[0].mxu0 %v228
      %v275 = vpop.f32.mrb[0].mxu0
      %v276 = vadd.f32 0.0, %v275
      %v277 = vpop.f32.mrb[0].mxu0
      %v278 = vpop.f32.mrb[0].mxu0
      %v279 = vadd.f32 0.0, %v278
      %v280 = vpop.f32.mrb[0].mxu0
      %281 = vmatprep.mubr.bf16.mxu0 0
      %282 = vmatmul.mubr.bf16.gmra.mrb[0].mxu0 %v231
      %v283 = vpop.f32.mrb[0].mxu0
      %v284 = vadd.f32 0.0, %v283
      %v285 = vpop.f32.mrb[0].mxu0
      %v286 = vpop.f32.mrb[0].mxu0
      %v287 = vpop.f32.mrb[0].mxu0
      %288 = vdwg.mxu0
      %v289 = vadd.f32 %v189, %v268
      %v290 = vadd.f32 %v190, %v271
      %v291 = vadd.f32 %v191, %v276
      %v292 = vadd.f32 %v192, %v279
      %v293 = vadd.f32 %v193, %v284
      %294 = vst [vmem:[%s170] sm:$0xff] %v289
      %295 = vst [vmem:[%s170 + $0x8] sm:$0xff] %v290
      %296 = vst [vmem:[%s170 + $0x10] sm:$0xff] %v291
      %297 = vst [vmem:[%s170 + $0x18] sm:$0xff] %v292
      %298 = vst [vmem:[%s170 + $0x20] sm:$0xff] %v293
      %v299 = vld [vmem:[%s165] sm:$0xf]
      %v300 = vld [vmem:[%s165 + $0x4] sm:$0xf]
      %v301 = vld [vmem:[%s165 + $0x8] sm:$0xf]
      %v302 = vld [vmem:[%s165 + $0xc] sm:$0xf]
      %v303 = vld [vmem:[%s165 + $0x10] sm:$0xf]
      %v304 = vld [vmem:[%s165 + $0x14] sm:$0x1]
      %v305 = vld [vmem:[%s170] sm:$0xff]
      %v306 = vld [vmem:[%s170 + $0x8] sm:$0xff]
      %v307 = vld [vmem:[%s170 + $0x10] sm:$0xff]
      %v308 = vld [vmem:[%s170 + $0x18] sm:$0xff]
      %v309 = vld [vmem:[%s170 + $0x20] sm:$0xff]
      %s310 = scalar_lea.vmem %s1, 16
      %v311 = vld [vmem:[%s310] sm:$0xf]
      %v312 = vld [vmem:[%s310 + $0x4] sm:$0xf]
      %v313 = vld [vmem:[%s310 + $0x8] sm:$0xf]
      %v314 = vld [vmem:[%s310 + $0xc] sm:$0xf]
      %v321 = vunpack.c.l.b16 %v299
      %v322 = vunpack.c.l.b16 %v300
      %v323 = vunpack.c.l.b16 %v301
      %v324 = vunpack.c.l.b16 %v302
      %v325 = vunpack.c.l.b16 %v303
      %v326 = vunpack.c.l.b16 %v304
      %v327 = vpack.c.b16 %v322, %v321
      %v328 = vpack.c.b16 %v324, %v323
      %v329 = vpack.c.b16 %v326, %v325
      %vm330 = vsmask.f32 7424
      %v332 = vshrl.u32 %v327, 16
      %v334 = vshll.u32 %v327, 16
      %v336 = vrot.slane %v334, 1
      %v337 = vor.u32 %v332, %v336
      %v339 = vshll.u32 %v328, 16
      %v341 = vrot.slane %v339, 1
      %v342 = vsel %vm330, %v337, %v341
      %v343 = vshrl.u32 %v328, 16
      %v345 = vor.u32 %v343, %v341
      %v347 = vshll.u32 %v329, 16
      %v349 = vrot.slane %v347, 1
      %v350 = vsel %vm330, %v345, %v349
      %v351 = vshrl.u32 %v329, 16
      %v353 = vor.u32 %v351, %v349
      %v358 = vunpack.c.l.b16 %v311
      %v359 = vunpack.c.l.b16 %v312
      %v360 = vunpack.c.l.b16 %v313
      %v361 = vunpack.c.l.b16 %v314
      %v362 = vpack.c.b16 %v359, %v358
      %v363 = vpack.c.b16 %v361, %v360
      %v367 = vsel %vm223, %v342, 0
      %v370 = vsel %vm223, %v350, 0
      %v373 = vsel %vm223, %v353, 0
      %375 = vmatprep.subr.bf16.mxu0 0
      %376 = vmatpush1.bf16.msra.mxu0 %v362
      %377 = vmatprep.subr.bf16.mxu0 0
      %378 = vmatpush1.bf16.msra.mxu0 %v363
      %379 = vmatprep.subr.bf16.mxu0 0
      %380 = vmatpush1.bf16.msra.mxu0 0
      %381 = vmatprep.subr.bf16.mxu0 0
      %382 = vmatpush1.bf16.msra.mxu0 0
      %383 = vmatprep.subr.bf16.mxu0 0
      %384 = vmatpush1.bf16.msra.mxu0 0
      %385 = vmatprep.subr.bf16.mxu0 0
      %386 = vmatpush1.bf16.msra.mxu0 0
      %387 = vmatprep.subr.bf16.mxu0 0
      %388 = vmatpush1.bf16.msra.mxu0 0
      %389 = vmatprep.subr.bf16.mxu0 0
      %390 = vmatpush1.bf16.msra.mxu0 0
      %391 = vmatprep.subr.bf16.mxu0 0
      %392 = vmatpush1.bf16.msra.mxu0 0
      %393 = vmatprep.subr.bf16.mxu0 0
      %394 = vmatpush1.bf16.msra.mxu0 0
      %395 = vmatprep.subr.bf16.mxu0 0
      %396 = vmatpush1.bf16.msra.mxu0 0
      %397 = vmatprep.subr.bf16.mxu0 0
      %398 = vmatpush1.bf16.msra.mxu0 0
      %399 = vmatprep.subr.bf16.mxu0 0
      %400 = vmatpush1.bf16.msra.mxu0 0
      %401 = vmatprep.subr.bf16.mxu0 0
      %402 = vmatpush1.bf16.msra.mxu0 0
      %403 = vmatprep.subr.bf16.mxu0 0
      %404 = vmatpush1.bf16.msra.mxu0 0
      %405 = vmatprep.subr.bf16.mxu0 0
      %406 = vmatpush1.bf16.msra.mxu0 0
      %407 = vmatprep.mubr.bf16.mxu0 0
      %408 = vmatmul.mubr.bf16.gmra.mrb[0].mxu0 %v367
      %v409 = vpop.f32.mrb[0].mxu0
      %v410 = vadd.f32 0.0, %v409
      %v411 = vpop.f32.mrb[0].mxu0
      %v412 = vpop.f32.mrb[0].mxu0
      %v413 = vadd.f32 0.0, %v412
      %v414 = vpop.f32.mrb[0].mxu0
      %415 = vmatprep.mubr.bf16.mxu0 0
      %416 = vmatmul.mubr.bf16.gmra.mrb[0].mxu0 %v370
      %v417 = vpop.f32.mrb[0].mxu0
      %v418 = vadd.f32 0.0, %v417
      %v419 = vpop.f32.mrb[0].mxu0
      %v420 = vpop.f32.mrb[0].mxu0
      %v421 = vadd.f32 0.0, %v420
      %v422 = vpop.f32.mrb[0].mxu0
      %423 = vmatprep.mubr.bf16.mxu0 0
      %424 = vmatmul.mubr.bf16.gmra.mrb[0].mxu0 %v373
      %v425 = vpop.f32.mrb[0].mxu0
      %v426 = vadd.f32 0.0, %v425
      %v427 = vpop.f32.mrb[0].mxu0
      %v428 = vpop.f32.mrb[0].mxu0
      %v429 = vpop.f32.mrb[0].mxu0
      %430 = vdwg.mxu0
      %v431 = vadd.f32 %v305, %v410
      %v432 = vadd.f32 %v306, %v413
      %v433 = vadd.f32 %v307, %v418
      %v434 = vadd.f32 %v308, %v421
      %v435 = vadd.f32 %v309, %v426
      %436 = vst [vmem:[%s170] sm:$0xff] %v431
      %437 = vst [vmem:[%s170 + $0x8] sm:$0xff] %v432
      %438 = vst [vmem:[%s170 + $0x10] sm:$0xff] %v433
      %439 = vst [vmem:[%s170 + $0x18] sm:$0xff] %v434
      %440 = vst [vmem:[%s170 + $0x20] sm:$0xff] %v435
      %v441 = vld [vmem:[%s165] sm:$0xe]
      %v442 = vld [vmem:[%s165 + $0x4] sm:$0xf]
      %v443 = vld [vmem:[%s165 + $0x8] sm:$0xf]
      %v444 = vld [vmem:[%s165 + $0xc] sm:$0xf]
      %v445 = vld [vmem:[%s165 + $0x10] sm:$0xf]
      %v446 = vld [vmem:[%s165 + $0x14] sm:$0x1]
      %v447 = vld [vmem:[%s170] sm:$0xff]
      %v448 = vld [vmem:[%s170 + $0x8] sm:$0xff]
      %v449 = vld [vmem:[%s170 + $0x10] sm:$0xff]
      %v450 = vld [vmem:[%s170 + $0x18] sm:$0xff]
      %v451 = vld [vmem:[%s170 + $0x20] sm:$0xff]
      %s452 = scalar_lea.vmem %s1, 32
      %v453 = vld [vmem:[%s452] sm:$0xf]
      %v454 = vld [vmem:[%s452 + $0x4] sm:$0xf]
      %v455 = vld [vmem:[%s452 + $0x8] sm:$0xf]
      %v456 = vld [vmem:[%s452 + $0xc] sm:$0xf]
      %v463 = vunpack.c.l.b16 %v441
      %v464 = vunpack.c.l.b16 %v442
      %v465 = vunpack.c.l.b16 %v443
      %v466 = vunpack.c.l.b16 %v444
      %v467 = vunpack.c.l.b16 %v445
      %v468 = vunpack.c.l.b16 %v446
      %v469 = vpack.c.b16 %v464, %v463
      %v470 = vpack.c.b16 %v466, %v465
      %v471 = vpack.c.b16 %v468, %v467
      %vm472 = vcmask 1046528
      %v473 = vrot.slane %v469, 1
      %v474 = vrot.slane %v470, 1
      %v475 = vsel %vm472, %v473, %v474
      %v476 = vrot.slane %v471, 1
      %v477 = vsel %vm472, %v474, %v476
      %v482 = vunpack.c.l.b16 %v453
      %v483 = vunpack.c.l.b16 %v454
      %v484 = vunpack.c.l.b16 %v455
      %v485 = vunpack.c.l.b16 %v456
      %v486 = vpack.c.b16 %v483, %v482
      %v487 = vpack.c.b16 %v485, %v484
      %v491 = vsel %vm223, %v475, 0
      %v494 = vsel %vm223, %v477, 0
      %v497 = vsel %vm223, %v476, 0
      %499 = vmatprep.subr.bf16.mxu0 0
      %500 = vmatpush1.bf16.msra.mxu0 %v486
      %501 = vmatprep.subr.bf16.mxu0 0
      %502 = vmatpush1.bf16.msra.mxu0 %v487
      %503 = vmatprep.subr.bf16.mxu0 0
      %504 = vmatpush1.bf16.msra.mxu0 0
      %505 = vmatprep.subr.bf16.mxu0 0
      %506 = vmatpush1.bf16.msra.mxu0 0
      %507 = vmatprep.subr.bf16.mxu0 0
      %508 = vmatpush1.bf16.msra.mxu0 0
      %509 = vmatprep.subr.bf16.mxu0 0
      %510 = vmatpush1.bf16.msra.mxu0 0
      %511 = vmatprep.subr.bf16.mxu0 0
      %512 = vmatpush1.bf16.msra.mxu0 0
      %513 = vmatprep.subr.bf16.mxu0 0
      %514 = vmatpush1.bf16.msra.mxu0 0
      %515 = vmatprep.subr.bf16.mxu0 0
      %516 = vmatpush1.bf16.msra.mxu0 0
      %517 = vmatprep.subr.bf16.mxu0 0
      %518 = vmatpush1.bf16.msra.mxu0 0
      %519 = vmatprep.subr.bf16.mxu0 0
      %520 = vmatpush1.bf16.msra.mxu0 0
      %521 = vmatprep.subr.bf16.mxu0 0
      %522 = vmatpush1.bf16.msra.mxu0 0
      %523 = vmatprep.subr.bf16.mxu0 0
      %524 = vmatpush1.bf16.msra.mxu0 0
      %525 = vmatprep.subr.bf16.mxu0 0
      %526 = vmatpush1.bf16.msra.mxu0 0
      %527 = vmatprep.subr.bf16.mxu0 0
      %528 = vmatpush1.bf16.msra.mxu0 0
      %529 = vmatprep.subr.bf16.mxu0 0
      %530 = vmatpush1.bf16.msra.mxu0 0
      %531 = vmatprep.mubr.bf16.mxu0 0
      %532 = vmatmul.mubr.bf16.gmra.mrb[0].mxu0 %v491
      %v533 = vpop.f32.mrb[0].mxu0
      %v534 = vadd.f32 0.0, %v533
      %v535 = vpop.f32.mrb[0].mxu0
      %v536 = vpop.f32.mrb[0].mxu0
      %v537 = vadd.f32 0.0, %v536
      %v538 = vpop.f32.mrb[0].mxu0
      %539 = vmatprep.mubr.bf16.mxu0 0
      %540 = vmatmul.mubr.bf16.gmra.mrb[0].mxu0 %v494
      %v541 = vpop.f32.mrb[0].mxu0
      %v542 = vadd.f32 0.0, %v541
      %v543 = vpop.f32.mrb[0].mxu0
      %v544 = vpop.f32.mrb[0].mxu0
      %v545 = vadd.f32 0.0, %v544
      %v546 = vpop.f32.mrb[0].mxu0
      %547 = vmatprep.mubr.bf16.mxu0 0
      %548 = vmatmul.mubr.bf16.gmra.mrb[0].mxu0 %v497
      %v549 = vpop.f32.mrb[0].mxu0
      %v550 = vadd.f32 0.0, %v549
      %v551 = vpop.f32.mrb[0].mxu0
      %v552 = vpop.f32.mrb[0].mxu0
      %v553 = vpop.f32.mrb[0].mxu0
      %554 = vdwg.mxu0
      %v555 = vadd.f32 %v447, %v534
      %v556 = vadd.f32 %v448, %v537
      %v557 = vadd.f32 %v449, %v542
      %v558 = vadd.f32 %v450, %v545
      %v559 = vadd.f32 %v451, %v550
      %560 = vst [vmem:[%s170] sm:$0xff] %v555
      %561 = vst [vmem:[%s170 + $0x8] sm:$0xff] %v556
      %562 = vst [vmem:[%s170 + $0x10] sm:$0xff] %v557
      %563 = vst [vmem:[%s170 + $0x18] sm:$0xff] %v558
      %564 = vst [vmem:[%s170 + $0x20] sm:$0xff] %v559
      %v565 = vld [vmem:[%s165 + $0x4] sm:$0xe]
      %v566 = vld [vmem:[%s165 + $0x8] sm:$0xf]
      %v567 = vld [vmem:[%s165 + $0xc] sm:$0xf]
      %v568 = vld [vmem:[%s165 + $0x10] sm:$0xf]
      %v569 = vld [vmem:[%s165 + $0x14] sm:$0xf]
      %v570 = vld [vmem:[%s165 + $0x18] sm:$0x1]
      %v571 = vld [vmem:[%s170] sm:$0xff]
      %v572 = vld [vmem:[%s170 + $0x8] sm:$0xff]
      %v573 = vld [vmem:[%s170 + $0x10] sm:$0xff]
      %v574 = vld [vmem:[%s170 + $0x18] sm:$0xff]
      %v575 = vld [vmem:[%s170 + $0x20] sm:$0xff]
      %s576 = scalar_lea.vmem %s1, 48
      %v577 = vld [vmem:[%s576] sm:$0xf]
      %v578 = vld [vmem:[%s576 + $0x4] sm:$0xf]
      %v579 = vld [vmem:[%s576 + $0x8] sm:$0xf]
      %v580 = vld [vmem:[%s576 + $0xc] sm:$0xf]
      %v587 = vunpack.c.l.b16 %v565
      %v588 = vunpack.c.l.b16 %v566
      %v589 = vunpack.c.l.b16 %v567
      %v590 = vunpack.c.l.b16 %v568
      %v591 = vunpack.c.l.b16 %v569
      %v592 = vunpack.c.l.b16 %v570
      %v593 = vpack.c.b16 %v588, %v587
      %v594 = vpack.c.b16 %v590, %v589
      %v595 = vpack.c.b16 %v592, %v591
      %v596 = vrot.slane %v593, 1
      %v597 = vrot.slane %v594, 1
      %v598 = vsel %vm472, %v596, %v597
      %v599 = vrot.slane %v595, 1
      %v600 = vsel %vm472, %v597, %v599
      %v605 = vunpack.c.l.b16 %v577
      %v606 = vunpack.c.l.b16 %v578
      %v607 = vunpack.c.l.b16 %v579
      %v608 = vunpack.c.l.b16 %v580
      %v609 = vpack.c.b16 %v606, %v605
      %v610 = vpack.c.b16 %v608, %v607
      %v614 = vsel %vm223, %v598, 0
      %v617 = vsel %vm223, %v600, 0
      %v620 = vsel %vm223, %v599, 0
      %622 = vmatprep.subr.bf16.mxu0 0
      %623 = vmatpush1.bf16.msra.mxu0 %v609
      %624 = vmatprep.subr.bf16.mxu0 0
      %625 = vmatpush1.bf16.msra.mxu0 %v610
      %626 = vmatprep.subr.bf16.mxu0 0
      %627 = vmatpush1.bf16.msra.mxu0 0
      %628 = vmatprep.subr.bf16.mxu0 0
      %629 = vmatpush1.bf16.msra.mxu0 0
      %630 = vmatprep.subr.bf16.mxu0 0
      %631 = vmatpush1.bf16.msra.mxu0 0
      %632 = vmatprep.subr.bf16.mxu0 0
      %633 = vmatpush1.bf16.msra.mxu0 0
      %634 = vmatprep.subr.bf16.mxu0 0
      %635 = vmatpush1.bf16.msra.mxu0 0
      %636 = vmatprep.subr.bf16.mxu0 0
      %637 = vmatpush1.bf16.msra.mxu0 0
      %638 = vmatprep.subr.bf16.mxu0 0
      %639 = vmatpush1.bf16.msra.mxu0 0
      %640 = vmatprep.subr.bf16.mxu0 0
      %641 = vmatpush1.bf16.msra.mxu0 0
      %642 = vmatprep.subr.bf16.mxu0 0
      %643 = vmatpush1.bf16.msra.mxu0 0
      %644 = vmatprep.subr.bf16.mxu0 0
      %645 = vmatpush1.bf16.msra.mxu0 0
      %646 = vmatprep.subr.bf16.mxu0 0
      %647 = vmatpush1.bf16.msra.mxu0 0
      %648 = vmatprep.subr.bf16.mxu0 0
      %649 = vmatpush1.bf16.msra.mxu0 0
      %650 = vmatprep.subr.bf16.mxu0 0
      %651 = vmatpush1.bf16.msra.mxu0 0
      %652 = vmatprep.subr.bf16.mxu0 0
      %653 = vmatpush1.bf16.msra.mxu0 0
      %654 = vmatprep.mubr.bf16.mxu0 0
      %655 = vmatmul.mubr.bf16.gmra.mrb[0].mxu0 %v614
      %v656 = vpop.f32.mrb[0].mxu0
      %v657 = vadd.f32 0.0, %v656
      %v658 = vpop.f32.mrb[0].mxu0
      %v659 = vpop.f32.mrb[0].mxu0
      %v660 = vadd.f32 0.0, %v659
      %v661 = vpop.f32.mrb[0].mxu0
      %662 = vmatprep.mubr.bf16.mxu0 0
      %663 = vmatmul.mubr.bf16.gmra.mrb[0].mxu0 %v617
      %v664 = vpop.f32.mrb[0].mxu0
      %v665 = vadd.f32 0.0, %v664
      %v666 = vpop.f32.mrb[0].mxu0
      %v667 = vpop.f32.mrb[0].mxu0
      %v668 = vadd.f32 0.0, %v667
      %v669 = vpop.f32.mrb[0].mxu0
      %670 = vmatprep.mubr.bf16.mxu0 0
      %671 = vmatmul.mubr.bf16.gmra.mrb[0].mxu0 %v620
      %v672 = vpop.f32.mrb[0].mxu0
      %v673 = vadd.f32 0.0, %v672
      %v674 = vpop.f32.mrb[0].mxu0
      %v675 = vpop.f32.mrb[0].mxu0
      %v676 = vpop.f32.mrb[0].mxu0
      %677 = vdwg.mxu0
      %v678 = vadd.f32 %v571, %v657
      %v679 = vadd.f32 %v572, %v660
      %v680 = vadd.f32 %v573, %v665
      %v681 = vadd.f32 %v574, %v668
      %v682 = vadd.f32 %v575, %v673
      %683 = vst [vmem:[%s170] sm:$0xff] %v678
      %684 = vst [vmem:[%s170 + $0x8] sm:$0xff] %v679
      %685 = vst [vmem:[%s170 + $0x10] sm:$0xff] %v680
      %686 = vst [vmem:[%s170 + $0x18] sm:$0xff] %v681
      %687 = vst [vmem:[%s170 + $0x20] sm:$0xff] %v682
      %v688 = vld [vmem:[%s165 + $0x4] sm:$0xe]
      %v689 = vld [vmem:[%s165 + $0x8] sm:$0xf]
      %v690 = vld [vmem:[%s165 + $0xc] sm:$0xf]
      %v691 = vld [vmem:[%s165 + $0x10] sm:$0xf]
      %v692 = vld [vmem:[%s165 + $0x14] sm:$0xf]
      %v693 = vld [vmem:[%s165 + $0x18] sm:$0x3]
      %v694 = vld [vmem:[%s170] sm:$0xff]
      %v695 = vld [vmem:[%s170 + $0x8] sm:$0xff]
      %v696 = vld [vmem:[%s170 + $0x10] sm:$0xff]
      %v697 = vld [vmem:[%s170 + $0x18] sm:$0xff]
      %v698 = vld [vmem:[%s170 + $0x20] sm:$0xff]
      %s699 = scalar_lea.vmem %s1, 64
      %v700 = vld [vmem:[%s699] sm:$0xf]
      %v701 = vld [vmem:[%s699 + $0x4] sm:$0xf]
      %v702 = vld [vmem:[%s699 + $0x8] sm:$0xf]
      %v703 = vld [vmem:[%s699 + $0xc] sm:$0xf]
      %v710 = vunpack.c.l.b16 %v688
      %v711 = vunpack.c.l.b16 %v689
      %v712 = vunpack.c.l.b16 %v690
      %v713 = vunpack.c.l.b16 %v691
      %v714 = vunpack.c.l.b16 %v692
      %v715 = vunpack.c.l.b16 %v693
      %v716 = vpack.c.b16 %v711, %v710
      %v717 = vpack.c.b16 %v713, %v712
      %v718 = vpack.c.b16 %v715, %v714
      %vm719 = vsmask.f32 6400
      %v721 = vshrl.u32 %v716, 16
      %v723 = vrot.slane %v721, 1
      %v724 = vshll.u32 %v716, 16
      %v726 = vrot.slane %v724, 2
      %v727 = vor.u32 %v723, %v726
      %v729 = vshrl.u32 %v717, 16
      %v731 = vrot.slane %v729, 1
      %v732 = vshll.u32 %v717, 16
      %v734 = vrot.slane %v732, 2
      %v735 = vor.u32 %v731, %v734
      %v736 = vsel %vm719, %v727, %v735
      %v738 = vshrl.u32 %v718, 16
      %v740 = vrot.slane %v738, 1
      %v741 = vshll.u32 %v718, 16
      %v743 = vrot.slane %v741, 2
      %v744 = vor.u32 %v740, %v743
      %v745 = vsel %vm719, %v735, %v744
      %v750 = vunpack.c.l.b16 %v700
      %v751 = vunpack.c.l.b16 %v701
      %v752 = vunpack.c.l.b16 %v702
      %v753 = vunpack.c.l.b16 %v703
      %v754 = vpack.c.b16 %v751, %v750
      %v755 = vpack.c.b16 %v753, %v752
      %v759 = vsel %vm223, %v736, 0
      %v762 = vsel %vm223, %v745, 0
      %v765 = vsel %vm223, %v744, 0
      %767 = vmatprep.subr.bf16.mxu0 0
      %768 = vmatpush1.bf16.msra.mxu0 %v754
      %769 = vmatprep.subr.bf16.mxu0 0
      %770 = vmatpush1.bf16.msra.mxu0 %v755
      %771 = vmatprep.subr.bf16.mxu0 0
      %772 = vmatpush1.bf16.msra.mxu0 0
      %773 = vmatprep.subr.bf16.mxu0 0
      %774 = vmatpush1.bf16.msra.mxu0 0
      %775 = vmatprep.subr.bf16.mxu0 0
      %776 = vmatpush1.bf16.msra.mxu0 0
      %777 = vmatprep.subr.bf16.mxu0 0
      %778 = vmatpush1.bf16.msra.mxu0 0
      %779 = vmatprep.subr.bf16.mxu0 0
      %780 = vmatpush1.bf16.msra.mxu0 0
      %781 = vmatprep.subr.bf16.mxu0 0
      %782 = vmatpush1.bf16.msra.mxu0 0
      %783 = vmatprep.subr.bf16.mxu0 0
      %784 = vmatpush1.bf16.msra.mxu0 0
      %785 = vmatprep.subr.bf16.mxu0 0
      %786 = vmatpush1.bf16.msra.mxu0 0
      %787 = vmatprep.subr.bf16.mxu0 0
      %788 = vmatpush1.bf16.msra.mxu0 0
      %789 = vmatprep.subr.bf16.mxu0 0
      %790 = vmatpush1.bf16.msra.mxu0 0
      %791 = vmatprep.subr.bf16.mxu0 0
      %792 = vmatpush1.bf16.msra.mxu0 0
      %793 = vmatprep.subr.bf16.mxu0 0
      %794 = vmatpush1.bf16.msra.mxu0 0
      %795 = vmatprep.subr.bf16.mxu0 0
      %796 = vmatpush1.bf16.msra.mxu0 0
      %797 = vmatprep.subr.bf16.mxu0 0
      %798 = vmatpush1.bf16.msra.mxu0 0
      %799 = vmatprep.mubr.bf16.mxu0 0
      %800 = vmatmul.mubr.bf16.gmra.mrb[0].mxu0 %v759
      %v801 = vpop.f32.mrb[0].mxu0
      %v802 = vadd.f32 0.0, %v801
      %v803 = vpop.f32.mrb[0].mxu0
      %v804 = vpop.f32.mrb[0].mxu0
      %v805 = vadd.f32 0.0, %v804
      %v806 = vpop.f32.mrb[0].mxu0
      %807 = vmatprep.mubr.bf16.mxu0 0
      %808 = vmatmul.mubr.bf16.gmra.mrb[0].mxu0 %v762
      %v809 = vpop.f32.mrb[0].mxu0
      %v810 = vadd.f32 0.0, %v809
      %v811 = vpop.f32.mrb[0].mxu0
      %v812 = vpop.f32.mrb[0].mxu0
      %v813 = vadd.f32 0.0, %v812
      %v814 = vpop.f32.mrb[0].mxu0
      %815 = vmatprep.mubr.bf16.mxu0 0
      %816 = vmatmul.mubr.bf16.gmra.mrb[0].mxu0 %v765
      %v817 = vpop.f32.mrb[0].mxu0
      %v818 = vadd.f32 0.0, %v817
      %v819 = vpop.f32.mrb[0].mxu0
      %v820 = vpop.f32.mrb[0].mxu0
      %v821 = vpop.f32.mrb[0].mxu0
      %822 = vdwg.mxu0
      %v823 = vadd.f32 %v694, %v802
      %v824 = vadd.f32 %v695, %v805
      %v825 = vadd.f32 %v696, %v810
      %v826 = vadd.f32 %v697, %v813
      %v827 = vadd.f32 %v698, %v818
      %828 = vst [vmem:[%s170] sm:$0xff] %v823
      %829 = vst [vmem:[%s170 + $0x8] sm:$0xff] %v824
      %830 = vst [vmem:[%s170 + $0x10] sm:$0xff] %v825
      %831 = vst [vmem:[%s170 + $0x18] sm:$0xff] %v826
      %832 = vst [vmem:[%s170 + $0x20] sm:$0xff] %v827
      %v833 = vld [vmem:[%s165 + $0x4] sm:$0xc]
      %v834 = vld [vmem:[%s165 + $0x8] sm:$0xf]
      %v835 = vld [vmem:[%s165 + $0xc] sm:$0xf]
      %v836 = vld [vmem:[%s165 + $0x10] sm:$0xf]
      %v837 = vld [vmem:[%s165 + $0x14] sm:$0xf]
      %v838 = vld [vmem:[%s165 + $0x18] sm:$0x3]
      %v839 = vld [vmem:[%s170] sm:$0xff]
      %v840 = vld [vmem:[%s170 + $0x8] sm:$0xff]
      %v841 = vld [vmem:[%s170 + $0x10] sm:$0xff]
      %v842 = vld [vmem:[%s170 + $0x18] sm:$0xff]
      %v843 = vld [vmem:[%s170 + $0x20] sm:$0xff]
      %s844 = scalar_lea.vmem %s1, 80
      %v845 = vld [vmem:[%s844] sm:$0xf]
      %v846 = vld [vmem:[%s844 + $0x4] sm:$0xf]
      %v847 = vld [vmem:[%s844 + $0x8] sm:$0xf]
      %v848 = vld [vmem:[%s844 + $0xc] sm:$0xf]
      %v855 = vunpack.c.l.b16 %v833
      %v856 = vunpack.c.l.b16 %v834
      %v857 = vunpack.c.l.b16 %v835
      %v858 = vunpack.c.l.b16 %v836
      %v859 = vunpack.c.l.b16 %v837
      %v860 = vunpack.c.l.b16 %v838
      %v861 = vpack.c.b16 %v856, %v855
      %v862 = vpack.c.b16 %v858, %v857
      %v863 = vpack.c.b16 %v860, %v859
      %vm864 = vcmask 1045504
      %v865 = vrot.slane %v861, 2
      %v866 = vrot.slane %v862, 2
      %v867 = vsel %vm864, %v865, %v866
      %v868 = vrot.slane %v863, 2
      %v869 = vsel %vm864, %v866, %v868
      %v874 = vunpack.c.l.b16 %v845
      %v875 = vunpack.c.l.b16 %v846
      %v876 = vunpack.c.l.b16 %v847
      %v877 = vunpack.c.l.b16 %v848
      %v878 = vpack.c.b16 %v875, %v874
      %v879 = vpack.c.b16 %v877, %v876
      %v883 = vsel %vm223, %v867, 0
      %v886 = vsel %vm223, %v869, 0
      %v889 = vsel %vm223, %v868, 0
      %891 = vmatprep.subr.bf16.mxu0 0
      %892 = vmatpush1.bf16.msra.mxu0 %v878
      %893 = vmatprep.subr.bf16.mxu0 0
      %894 = vmatpush1.bf16.msra.mxu0 %v879
      %895 = vmatprep.subr.bf16.mxu0 0
      %896 = vmatpush1.bf16.msra.mxu0 0
      %897 = vmatprep.subr.bf16.mxu0 0
      %898 = vmatpush1.bf16.msra.mxu0 0
      %899 = vmatprep.subr.bf16.mxu0 0
      %900 = vmatpush1.bf16.msra.mxu0 0
      %901 = vmatprep.subr.bf16.mxu0 0
      %902 = vmatpush1.bf16.msra.mxu0 0
      %903 = vmatprep.subr.bf16.mxu0 0
      %904 = vmatpush1.bf16.msra.mxu0 0
      %905 = vmatprep.subr.bf16.mxu0 0
      %906 = vmatpush1.bf16.msra.mxu0 0
      %907 = vmatprep.subr.bf16.mxu0 0
      %908 = vmatpush1.bf16.msra.mxu0 0
      %909 = vmatprep.subr.bf16.mxu0 0
      %910 = vmatpush1.bf16.msra.mxu0 0
      %911 = vmatprep.subr.bf16.mxu0 0
      %912 = vmatpush1.bf16.msra.mxu0 0
      %913 = vmatprep.subr.bf16.mxu0 0
      %914 = vmatpush1.bf16.msra.mxu0 0
      %915 = vmatprep.subr.bf16.mxu0 0
      %916 = vmatpush1.bf16.msra.mxu0 0
      %917 = vmatprep.subr.bf16.mxu0 0
      %918 = vmatpush1.bf16.msra.mxu0 0
      %919 = vmatprep.subr.bf16.mxu0 0
      %920 = vmatpush1.bf16.msra.mxu0 0
      %921 = vmatprep.subr.bf16.mxu0 0
      %922 = vmatpush1.bf16.msra.mxu0 0
      %923 = vmatprep.mubr.bf16.mxu0 0
      %924 = vmatmul.mubr.bf16.gmra.mrb[0].mxu0 %v883
      %v925 = vpop.f32.mrb[0].mxu0
      %v926 = vadd.f32 0.0, %v925
      %v927 = vpop.f32.mrb[0].mxu0
      %v928 = vpop.f32.mrb[0].mxu0
      %v929 = vadd.f32 0.0, %v928
      %v930 = vpop.f32.mrb[0].mxu0
      %931 = vmatprep.mubr.bf16.mxu0 0
      %932 = vmatmul.mubr.bf16.gmra.mrb[0].mxu0 %v886
      %v933 = vpop.f32.mrb[0].mxu0
      %v934 = vadd.f32 0.0, %v933
      %v935 = vpop.f32.mrb[0].mxu0
      %v936 = vpop.f32.mrb[0].mxu0
      %v937 = vadd.f32 0.0, %v936
      %v938 = vpop.f32.mrb[0].mxu0
      %939 = vmatprep.mubr.bf16.mxu0 0
      %940 = vmatmul.mubr.bf16.gmra.mrb[0].mxu0 %v889
      %v941 = vpop.f32.mrb[0].mxu0
      %v942 = vadd.f32 0.0, %v941
      %v943 = vpop.f32.mrb[0].mxu0
      %v944 = vpop.f32.mrb[0].mxu0
      %v945 = vpop.f32.mrb[0].mxu0
      %946 = vdwg.mxu0
      %v947 = vadd.f32 %v839, %v926
      %v948 = vadd.f32 %v840, %v929
      %v949 = vadd.f32 %v841, %v934
      %v950 = vadd.f32 %v842, %v937
      %v951 = vadd.f32 %v843, %v942
      %952 = vst [vmem:[%s170] sm:$0xff] %v947
      %953 = vst [vmem:[%s170 + $0x8] sm:$0xff] %v948
      %954 = vst [vmem:[%s170 + $0x10] sm:$0xff] %v949
      %955 = vst [vmem:[%s170 + $0x18] sm:$0xff] %v950
      %956 = vst [vmem:[%s170 + $0x20] sm:$0xff] %v951
      %v957 = vld [vmem:[%s165 + $0x8] sm:$0xc]
      %v958 = vld [vmem:[%s165 + $0xc] sm:$0xf]
      %v959 = vld [vmem:[%s165 + $0x10] sm:$0xf]
      %v960 = vld [vmem:[%s165 + $0x14] sm:$0xf]
      %v961 = vld [vmem:[%s165 + $0x18] sm:$0xf]
      %v962 = vld [vmem:[%s165 + $0x1c] sm:$0x3]
      %v963 = vld [vmem:[%s170] sm:$0xff]
      %v964 = vld [vmem:[%s170 + $0x8] sm:$0xff]
      %v965 = vld [vmem:[%s170 + $0x10] sm:$0xff]
      %v966 = vld [vmem:[%s170 + $0x18] sm:$0xff]
      %v967 = vld [vmem:[%s170 + $0x20] sm:$0xff]
      %s968 = scalar_lea.vmem %s1, 96
      %v969 = vld [vmem:[%s968] sm:$0xf]
      %v970 = vld [vmem:[%s968 + $0x4] sm:$0xf]
      %v971 = vld [vmem:[%s968 + $0x8] sm:$0xf]
      %v972 = vld [vmem:[%s968 + $0xc] sm:$0xf]
      %v979 = vunpack.c.l.b16 %v957
      %v980 = vunpack.c.l.b16 %v958
      %v981 = vunpack.c.l.b16 %v959
      %v982 = vunpack.c.l.b16 %v960
      %v983 = vunpack.c.l.b16 %v961
      %v984 = vunpack.c.l.b16 %v962
      %v985 = vpack.c.b16 %v980, %v979
      %v986 = vpack.c.b16 %v982, %v981
      %v987 = vpack.c.b16 %v984, %v983
      %v988 = vrot.slane %v985, 2
      %v989 = vrot.slane %v986, 2
      %v990 = vsel %vm864, %v988, %v989
      %v991 = vrot.slane %v987, 2
      %v992 = vsel %vm864, %v989, %v991
      %v997 = vunpack.c.l.b16 %v969
      %v998 = vunpack.c.l.b16 %v970
      %v999 = vunpack.c.l.b16 %v971
      %v1000 = vunpack.c.l.b16 %v972
      %v1001 = vpack.c.b16 %v998, %v997
      %v1002 = vpack.c.b16 %v1000, %v999
      %v1006 = vsel %vm223, %v990, 0
      %v1009 = vsel %vm223, %v992, 0
      %v1012 = vsel %vm223, %v991, 0
      %1014 = vmatprep.subr.bf16.mxu0 0
      %1015 = vmatpush1.bf16.msra.mxu0 %v1001
      %1016 = vmatprep.subr.bf16.mxu0 0
      %1017 = vmatpush1.bf16.msra.mxu0 %v1002
      %1018 = vmatprep.subr.bf16.mxu0 0
      %1019 = vmatpush1.bf16.msra.mxu0 0
      %1020 = vmatprep.subr.bf16.mxu0 0
      %1021 = vmatpush1.bf16.msra.mxu0 0
      %1022 = vmatprep.subr.bf16.mxu0 0
      %1023 = vmatpush1.bf16.msra.mxu0 0
      %1024 = vmatprep.subr.bf16.mxu0 0
      %1025 = vmatpush1.bf16.msra.mxu0 0
      %1026 = vmatprep.subr.bf16.mxu0 0
      %1027 = vmatpush1.bf16.msra.mxu0 0
      %1028 = vmatprep.subr.bf16.mxu0 0
      %1029 = vmatpush1.bf16.msra.mxu0 0
      %1030 = vmatprep.subr.bf16.mxu0 0
      %1031 = vmatpush1.bf16.msra.mxu0 0
      %1032 = vmatprep.subr.bf16.mxu0 0
      %1033 = vmatpush1.bf16.msra.mxu0 0
      %1034 = vmatprep.subr.bf16.mxu0 0
      %1035 = vmatpush1.bf16.msra.mxu0 0
      %1036 = vmatprep.subr.bf16.mxu0 0
      %1037 = vmatpush1.bf16.msra.mxu0 0
      %1038 = vmatprep.subr.bf16.mxu0 0
      %1039 = vmatpush1.bf16.msra.mxu0 0
      %1040 = vmatprep.subr.bf16.mxu0 0
      %1041 = vmatpush1.bf16.msra.mxu0 0
      %1042 = vmatprep.subr.bf16.mxu0 0
      %1043 = vmatpush1.bf16.msra.mxu0 0
      %1044 = vmatprep.subr.bf16.mxu0 0
      %1045 = vmatpush1.bf16.msra.mxu0 0
      %1046 = vmatprep.mubr.bf16.mxu0 0
      %1047 = vmatmul.mubr.bf16.gmra.mrb[0].mxu0 %v1006
      %v1048 = vpop.f32.mrb[0].mxu0
      %v1049 = vadd.f32 0.0, %v1048
      %v1050 = vpop.f32.mrb[0].mxu0
      %v1051 = vpop.f32.mrb[0].mxu0
      %v1052 = vadd.f32 0.0, %v1051
      %v1053 = vpop.f32.mrb[0].mxu0
      %1054 = vmatprep.mubr.bf16.mxu0 0
      %1055 = vmatmul.mubr.bf16.gmra.mrb[0].mxu0 %v1009
      %v1056 = vpop.f32.mrb[0].mxu0
      %v1057 = vadd.f32 0.0, %v1056
      %v1058 = vpop.f32.mrb[0].mxu0
      %v1059 = vpop.f32.mrb[0].mxu0
      %v1060 = vadd.f32 0.0, %v1059
      %v1061 = vpop.f32.mrb[0].mxu0
      %1062 = vmatprep.mubr.bf16.mxu0 0
      %1063 = vmatmul.mubr.bf16.gmra.mrb[0].mxu0 %v1012
      %v1064 = vpop.f32.mrb[0].mxu0
      %v1065 = vadd.f32 0.0, %v1064
      %v1066 = vpop.f32.mrb[0].mxu0
      %v1067 = vpop.f32.mrb[0].mxu0
      %v1068 = vpop.f32.mrb[0].mxu0
      %1069 = vdwg.mxu0
      %v1070 = vadd.f32 %v963, %v1049
      %v1071 = vadd.f32 %v964, %v1052
      %v1072 = vadd.f32 %v965, %v1057
      %v1073 = vadd.f32 %v966, %v1060
      %v1074 = vadd.f32 %v967, %v1065
      %1075 = vst [vmem:[%s170] sm:$0xff] %v1070
      %1076 = vst [vmem:[%s170 + $0x8] sm:$0xff] %v1071
      %1077 = vst [vmem:[%s170 + $0x10] sm:$0xff] %v1072
      %1078 = vst [vmem:[%s170 + $0x18] sm:$0xff] %v1073
      %1079 = vst [vmem:[%s170 + $0x20] sm:$0xff] %v1074
      %v1080 = vld [vmem:[%s165 + $0x8] sm:$0xc]
      %v1081 = vld [vmem:[%s165 + $0xc] sm:$0xf]
      %v1082 = vld [vmem:[%s165 + $0x10] sm:$0xf]
      %v1083 = vld [vmem:[%s165 + $0x14] sm:$0xf]
      %v1084 = vld [vmem:[%s165 + $0x18] sm:$0xf]
      %v1085 = vld [vmem:[%s165 + $0x1c] sm:$0x7]
      %v1086 = vld [vmem:[%s170] sm:$0xff]
      %v1087 = vld [vmem:[%s170 + $0x8] sm:$0xff]
      %v1088 = vld [vmem:[%s170 + $0x10] sm:$0xff]
      %v1089 = vld [vmem:[%s170 + $0x18] sm:$0xff]
      %v1090 = vld [vmem:[%s170 + $0x20] sm:$0xff]
      %s1091 = scalar_lea.vmem %s1, 112
      %v1092 = vld [vmem:[%s1091] sm:$0xf]
      %v1093 = vld [vmem:[%s1091 + $0x4] sm:$0xf]
      %v1094 = vld [vmem:[%s1091 + $0x8] sm:$0xf]
      %v1095 = vld [vmem:[%s1091 + $0xc] sm:$0xf]
      %v1102 = vunpack.c.l.b16 %v1080
      %v1103 = vunpack.c.l.b16 %v1081
      %v1104 = vunpack.c.l.b16 %v1082
      %v1105 = vunpack.c.l.b16 %v1083
      %v1106 = vunpack.c.l.b16 %v1084
      %v1107 = vunpack.c.l.b16 %v1085
      %v1108 = vpack.c.b16 %v1103, %v1102
      %v1109 = vpack.c.b16 %v1105, %v1104
      %v1110 = vpack.c.b16 %v1107, %v1106
      %vm1111 = vsmask.f32 5376
      %v1113 = vshrl.u32 %v1108, 16
      %v1115 = vrot.slane %v1113, 2
      %v1116 = vshll.u32 %v1108, 16
      %v1118 = vrot.slane %v1116, 3
      %v1119 = vor.u32 %v1115, %v1118
      %v1121 = vshrl.u32 %v1109, 16
      %v1123 = vrot.slane %v1121, 2
      %v1124 = vshll.u32 %v1109, 16
      %v1126 = vrot.slane %v1124, 3
      %v1127 = vor.u32 %v1123, %v1126
      %v1128 = vsel %vm1111, %v1119, %v1127
      %v1130 = vshrl.u32 %v1110, 16
      %v1132 = vrot.slane %v1130, 2
      %v1133 = vshll.u32 %v1110, 16
      %v1135 = vrot.slane %v1133, 3
      %v1136 = vor.u32 %v1132, %v1135
      %v1137 = vsel %vm1111, %v1127, %v1136
      %v1142 = vunpack.c.l.b16 %v1092
      %v1143 = vunpack.c.l.b16 %v1093
      %v1144 = vunpack.c.l.b16 %v1094
      %v1145 = vunpack.c.l.b16 %v1095
      %v1146 = vpack.c.b16 %v1143, %v1142
      %v1147 = vpack.c.b16 %v1145, %v1144
      %v1151 = vsel %vm223, %v1128, 0
      %v1154 = vsel %vm223, %v1137, 0
      %v1157 = vsel %vm223, %v1136, 0
      %1159 = vmatprep.subr.bf16.mxu0 0
      %1160 = vmatpush1.bf16.msra.mxu0 %v1146
      %1161 = vmatprep.subr.bf16.mxu0 0
      %1162 = vmatpush1.bf16.msra.mxu0 %v1147
      %1163 = vmatprep.subr.bf16.mxu0 0
      %1164 = vmatpush1.bf16.msra.mxu0 0
      %1165 = vmatprep.subr.bf16.mxu0 0
      %1166 = vmatpush1.bf16.msra.mxu0 0
      %1167 = vmatprep.subr.bf16.mxu0 0
      %1168 = vmatpush1.bf16.msra.mxu0 0
      %1169 = vmatprep.subr.bf16.mxu0 0
      %1170 = vmatpush1.bf16.msra.mxu0 0
      %1171 = vmatprep.subr.bf16.mxu0 0
      %1172 = vmatpush1.bf16.msra.mxu0 0
      %1173 = vmatprep.subr.bf16.mxu0 0
      %1174 = vmatpush1.bf16.msra.mxu0 0
      %1175 = vmatprep.subr.bf16.mxu0 0
      %1176 = vmatpush1.bf16.msra.mxu0 0
      %1177 = vmatprep.subr.bf16.mxu0 0
      %1178 = vmatpush1.bf16.msra.mxu0 0
      %1179 = vmatprep.subr.bf16.mxu0 0
      %1180 = vmatpush1.bf16.msra.mxu0 0
      %1181 = vmatprep.subr.bf16.mxu0 0
      %1182 = vmatpush1.bf16.msra.mxu0 0
      %1183 = vmatprep.subr.bf16.mxu0 0
      %1184 = vmatpush1.bf16.msra.mxu0 0
      %1185 = vmatprep.subr.bf16.mxu0 0
      %1186 = vmatpush1.bf16.msra.mxu0 0
      %1187 = vmatprep.subr.bf16.mxu0 0
      %1188 = vmatpush1.bf16.msra.mxu0 0
      %1189 = vmatprep.subr.bf16.mxu0 0
      %1190 = vmatpush1.bf16.msra.mxu0 0
      %1191 = vmatprep.mubr.bf16.mxu0 0
      %1192 = vmatmul.mubr.bf16.gmra.mrb[0].mxu0 %v1151
      %v1193 = vpop.f32.mrb[0].mxu0
      %v1194 = vadd.f32 0.0, %v1193
      %v1195 = vpop.f32.mrb[0].mxu0
      %v1196 = vpop.f32.mrb[0].mxu0
      %v1197 = vadd.f32 0.0, %v1196
      %v1198 = vpop.f32.mrb[0].mxu0
      %1199 = vmatprep.mubr.bf16.mxu0 0
      %1200 = vmatmul.mubr.bf16.gmra.mrb[0].mxu0 %v1154
      %v1201 = vpop.f32.mrb[0].mxu0
      %v1202 = vadd.f32 0.0, %v1201
      %v1203 = vpop.f32.mrb[0].mxu0
      %v1204 = vpop.f32.mrb[0].mxu0
      %v1205 = vadd.f32 0.0, %v1204
      %v1206 = vpop.f32.mrb[0].mxu0
      %1207 = vmatprep.mubr.bf16.mxu0 0
      %1208 = vmatmul.mubr.bf16.gmra.mrb[0].mxu0 %v1157
      %v1209 = vpop.f32.mrb[0].mxu0
      %v1210 = vadd.f32 0.0, %v1209
      %v1211 = vpop.f32.mrb[0].mxu0
      %v1212 = vpop.f32.mrb[0].mxu0
      %v1213 = vpop.f32.mrb[0].mxu0
      %1214 = vdwg.mxu0
      %v1215 = vadd.f32 %v1086, %v1194
      %v1216 = vadd.f32 %v1087, %v1197
      %v1217 = vadd.f32 %v1088, %v1202
      %v1218 = vadd.f32 %v1089, %v1205
      %v1219 = vadd.f32 %v1090, %v1210
      %1220 = vst [vmem:[%s170] sm:$0xff] %v1215
      %1221 = vst [vmem:[%s170 + $0x8] sm:$0xff] %v1216
      %1222 = vst [vmem:[%s170 + $0x10] sm:$0xff] %v1217
      %1223 = vst [vmem:[%s170 + $0x18] sm:$0xff] %v1218
      %1224 = vst [vmem:[%s170 + $0x20] sm:$0xff] %v1219
      %v1225 = vld [vmem:[%s165 + $0x8] sm:$0x8]
      %v1226 = vld [vmem:[%s165 + $0xc] sm:$0xf]
      %v1227 = vld [vmem:[%s165 + $0x10] sm:$0xf]
      %v1228 = vld [vmem:[%s165 + $0x14] sm:$0xf]
      %v1229 = vld [vmem:[%s165 + $0x18] sm:$0xf]
      %v1230 = vld [vmem:[%s165 + $0x1c] sm:$0x7]
      %v1231 = vld [vmem:[%s170] sm:$0xff]
      %v1232 = vld [vmem:[%s170 + $0x8] sm:$0xff]
      %v1233 = vld [vmem:[%s170 + $0x10] sm:$0xff]
      %v1234 = vld [vmem:[%s170 + $0x18] sm:$0xff]
      %v1235 = vld [vmem:[%s170 + $0x20] sm:$0xff]
      %s1236 = scalar_lea.vmem %s1, 128
      %v1237 = vld [vmem:[%s1236] sm:$0xf]
      %v1238 = vld [vmem:[%s1236 + $0x4] sm:$0xf]
      %v1239 = vld [vmem:[%s1236 + $0x8] sm:$0xf]
      %v1240 = vld [vmem:[%s1236 + $0xc] sm:$0xf]
      %v1247 = vunpack.c.l.b16 %v1225
      %v1248 = vunpack.c.l.b16 %v1226
      %v1249 = vunpack.c.l.b16 %v1227
      %v1250 = vunpack.c.l.b16 %v1228
      %v1251 = vunpack.c.l.b16 %v1229
      %v1252 = vunpack.c.l.b16 %v1230
      %v1253 = vpack.c.b16 %v1248, %v1247
      %v1254 = vpack.c.b16 %v1250, %v1249
      %v1255 = vpack.c.b16 %v1252, %v1251
      %vm1256 = vcmask 1044480
      %v1257 = vrot.slane %v1253, 3
      %v1258 = vrot.slane %v1254, 3
      %v1259 = vsel %vm1256, %v1257, %v1258
      %v1260 = vrot.slane %v1255, 3
      %v1261 = vsel %vm1256, %v1258, %v1260
      %v1266 = vunpack.c.l.b16 %v1237
      %v1267 = vunpack.c.l.b16 %v1238
      %v1268 = vunpack.c.l.b16 %v1239
      %v1269 = vunpack.c.l.b16 %v1240
      %v1270 = vpack.c.b16 %v1267, %v1266
      %v1271 = vpack.c.b16 %v1269, %v1268
      %v1275 = vsel %vm223, %v1259, 0
      %v1278 = vsel %vm223, %v1261, 0
      %v1281 = vsel %vm223, %v1260, 0
      %1283 = vmatprep.subr.bf16.mxu0 0
      %1284 = vmatpush1.bf16.msra.mxu0 %v1270
      %1285 = vmatprep.subr.bf16.mxu0 0
      %1286 = vmatpush1.bf16.msra.mxu0 %v1271
      %1287 = vmatprep.subr.bf16.mxu0 0
      %1288 = vmatpush1.bf16.msra.mxu0 0
      %1289 = vmatprep.subr.bf16.mxu0 0
      %1290 = vmatpush1.bf16.msra.mxu0 0
      %1291 = vmatprep.subr.bf16.mxu0 0
      %1292 = vmatpush1.bf16.msra.mxu0 0
      %1293 = vmatprep.subr.bf16.mxu0 0
      %1294 = vmatpush1.bf16.msra.mxu0 0
      %1295 = vmatprep.subr.bf16.mxu0 0
      %1296 = vmatpush1.bf16.msra.mxu0 0
      %1297 = vmatprep.subr.bf16.mxu0 0
      %1298 = vmatpush1.bf16.msra.mxu0 0
      %1299 = vmatprep.subr.bf16.mxu0 0
      %1300 = vmatpush1.bf16.msra.mxu0 0
      %1301 = vmatprep.subr.bf16.mxu0 0
      %1302 = vmatpush1.bf16.msra.mxu0 0
      %1303 = vmatprep.subr.bf16.mxu0 0
      %1304 = vmatpush1.bf16.msra.mxu0 0
      %1305 = vmatprep.subr.bf16.mxu0 0
      %1306 = vmatpush1.bf16.msra.mxu0 0
      %1307 = vmatprep.subr.bf16.mxu0 0
      %1308 = vmatpush1.bf16.msra.mxu0 0
      %1309 = vmatprep.subr.bf16.mxu0 0
      %1310 = vmatpush1.bf16.msra.mxu0 0
      %1311 = vmatprep.subr.bf16.mxu0 0
      %1312 = vmatpush1.bf16.msra.mxu0 0
      %1313 = vmatprep.subr.bf16.mxu0 0
      %1314 = vmatpush1.bf16.msra.mxu0 0
      %1315 = vmatprep.mubr.bf16.mxu0 0
      %1316 = vmatmul.mubr.bf16.gmra.mrb[0].mxu0 %v1275
      %v1317 = vpop.f32.mrb[0].mxu0
      %v1318 = vadd.f32 0.0, %v1317
      %v1319 = vpop.f32.mrb[0].mxu0
      %v1320 = vpop.f32.mrb[0].mxu0
      %v1321 = vadd.f32 0.0, %v1320
      %v1322 = vpop.f32.mrb[0].mxu0
      %1323 = vmatprep.mubr.bf16.mxu0 0
      %1324 = vmatmul.mubr.bf16.gmra.mrb[0].mxu0 %v1278
      %v1325 = vpop.f32.mrb[0].mxu0
      %v1326 = vadd.f32 0.0, %v1325
      %v1327 = vpop.f32.mrb[0].mxu0
      %v1328 = vpop.f32.mrb[0].mxu0
      %v1329 = vadd.f32 0.0, %v1328
      %v1330 = vpop.f32.mrb[0].mxu0
      %1331 = vmatprep.mubr.bf16.mxu0 0
      %1332 = vmatmul.mubr.bf16.gmra.mrb[0].mxu0 %v1281
      %v1333 = vpop.f32.mrb[0].mxu0
      %v1334 = vadd.f32 0.0, %v1333
      %v1335 = vpop.f32.mrb[0].mxu0
      %v1336 = vpop.f32.mrb[0].mxu0
      %v1337 = vpop.f32.mrb[0].mxu0
      %1338 = vdwg.mxu0
      %v1339 = vadd.f32 %v1231, %v1318
      %v1340 = vadd.f32 %v1232, %v1321
      %v1341 = vadd.f32 %v1233, %v1326
      %v1342 = vadd.f32 %v1234, %v1329
      %v1343 = vadd.f32 %v1235, %v1334
      %1344 = vst [vmem:[%s170] sm:$0xff] %v1339
      %1345 = vst [vmem:[%s170 + $0x8] sm:$0xff] %v1340
      %1346 = vst [vmem:[%s170 + $0x10] sm:$0xff] %v1341
      %1347 = vst [vmem:[%s170 + $0x18] sm:$0xff] %v1342
      %1348 = vst [vmem:[%s170 + $0x20] sm:$0xff] %v1343
      %p1349 = scmp.lt.s32.totalorder %s14, 1
      %s1350 = scalar_select %p1349, %s14, 1
      %s1351 = smul.addr %s1350, 5
      %s1352 = smul.addr %s1351, 8
      %s1353 = scalar_lea.vmem %s3, %s1352
      // Predicated region
      $region33: #{sar_head_forward.23} parent=31 // pred_check
        %p1354 = pneg %p100
      $region34: #{sar_head_forward.23} parent=31 // pred_check_branch
        %1356 = sbr.rel (%p1354) target = $region36
      $region35: #{sar_head_forward.23} parent=31 // pred_region
        _
      $region36: #{sar_head_forward.23} parent=31 // pred_fallthru
        _
    $region32: #{sar_head_forward.23} parent=5 // pred_fallthru
      _
    %p1357 = scmp.le.s32.totalorder 2, %s9
    // Predicated region
    $region37: #{sar_head_forward.23} parent=5 // pred_check
      %p1358 = pneg %p1357
    $region38: #{sar_head_forward.23} parent=5 // pred_check_branch
      %1360 = sbr.rel (%p1358) target = $region40
    $region39: #{sar_head_forward.23} parent=5 // pred_region
      %s1361 = ssub.s32 %s9, 2
      // Predicated region
      $region41: #{sar_head_forward.23} parent=39 // pred_check
        %p1362 = pneg %p106
      $region42: #{sar_head_forward.23} parent=39 // pred_check_branch
        %1364 = sbr.rel (%p1362) target = $region44
      $region43: #{sar_head_forward.23} parent=39 // pred_region
        %p1365 = scmp.lt.s32.totalorder %s15, 1
        %s1366 = scalar_select %p1365, %s15, 1
        %s1367 = smul.addr %s1366, 5
        %s1368 = smul.addr %s1367, 8
        %s1369 = scalar_lea.vmem %s3, %s1368
      $region44: #{sar_head_forward.23} parent=39 // pred_fallthru
        _
    $region40: #{sar_head_forward.23} parent=5 // pred_fallthru
      _
  $region6: #{sar_head_forward.23} parent=0 // loop_footer
    %s13 = sadd.s32 1, %s9
  $region7: #{sar_head_forward.23} parent=0 // loop_footer_branch
    %8 = sbr.rel target = $region3
  $region8: #{sar_head_forward.23} parent=0 // loop_exit
    _

</llo_original>
